<compile_context>
chip_gen: v6e
topology: v6e:2x2x1
jax: 0.10.0
libtpu: 0.0.40
codegen_flags: <defaults>
</compile_context>

<pallas_src>
import functools

import jax
import jax.numpy as jnp
from jax.experimental import pallas as pl
from jax.experimental.pallas import tpu as pltpu


def _round_up(x, m):
    return ((x + m - 1) // m) * m


def _vmem_limit_bytes():
    """3/4 of physical per-core VMEM: 48 MiB on v7x, 96 MiB on v5e/v6e."""
    cap = 0
    try:
        info = pltpu.get_tpu_info()
        cap = int(getattr(info, "vmem_capacity_bytes", 0) or 0)
    except Exception:
        cap = 0
    if cap <= 0:
        cap = 64 * 1024 * 1024          # safe on every generation
    return (cap * 3) // 4


def _pick_t_chunk(T, Bp, Hp, d_parts, num_dirs, is_last, vmem_limit):
    """Largest divisor of T whose per-chunk VMEM footprint fits the budget."""
    budget = int(vmem_limit * 0.6)      # headroom for double-buffering slack
    G3 = 3 * Hp
    d_total = sum(d_parts)

    def est(tc):
        b = 0
        b += 2 * num_dirs * tc * Bp * d_total * 2      # x blocks, dbl-buffered
        if not is_last:
            b += 2 * num_dirs * tc * Bp * Hp * 2       # out blocks, dbl-buffered
        b += 2 * num_dirs * tc * Bp * G3 * 4           # gx scratch + proj temp
        b += 2 * num_dirs * (d_total + Hp) * G3 * 2    # resident weights (x2)
        b += num_dirs * Bp * Hp * 4 + (2 << 20)        # h scratch + misc
        return b

    best = 1
    for tc in range(1, min(T, 256) + 1):
        if T % tc == 0 and est(tc) <= budget:
            best = tc
    return best


def _pick_unroll(num_dirs, Bp, Hp):
    """Per-step live set ~ (gx+gh+rz+n+h) f32 per direction; avoid spills."""
    live_bytes = num_dirs * Bp * (10 * Hp) * 4
    vregs = live_bytes // 4096
    if vregs > 24:
        return 1
    if vregs > 12:
        return 2
    return 4


# ----------------------------------------------------------------------------
# Fused GRU layer kernel: input projection + (interleaved) recurrence
# (+ final linear epilogue on the last layer).
# ----------------------------------------------------------------------------
def _gru_layer_kernel(*refs, num_parts, num_dirs, hidden_pad, t_chunk,
                      num_chunks, is_last, unroll):
    ND, Hp, Tc, nc = num_dirs, hidden_pad, t_chunk, num_chunks
    G3 = 3 * Hp

    # ---- unpack refs: inputs, outputs, scratch ------------------------------
    x_refs = [[refs[d * num_parts + p] for p in range(num_parts)]
              for d in range(ND)]
    i = ND * num_parts
    w_ih_ref = refs[i]          # [ND, D_total, 3Hp] bf16
    w_hh_ref = refs[i + 1]      # [ND, Hp, 3Hp]      bf16
    gxb_ref = refs[i + 2]       # [ND, 1, 3Hp]       f32 (b_ih + b_hh[r,z])
    bhn_ref = refs[i + 3]       # [ND, 1, Hp]        f32 (b_hh[n])
    i += 4
    if is_last:
        w_out_ref = refs[i]     # [ND, Hp, Op] f32
        b_out_ref = refs[i + 1]  # [1, Op]     f32
        i += 2
        logits_ref = refs[i]    # [Bp, Op]     f32
        i += 1
        out_refs = None
    else:
        out_refs = [refs[i + d] for d in range(ND)]   # [Tc, Bp, Hp] bf16 each
        i += ND
    gx_scr = [refs[i + d] for d in range(ND)]         # [Tc, Bp, 3Hp] f32
    i += ND
    h_scr = [refs[i + d] for d in range(ND)]          # [Bp, Hp] f32

    c = pl.program_id(0)

    @pl.when(c == 0)
    def _init():
        for d in range(ND):
            h_scr[d][...] = jnp.zeros_like(h_scr[d])

    # ---- fused input projection for this chunk (both directions) -----------
    # One big MXU matmul per (direction, input part); gx stays f32 in VMEM.
    # The MXU is nearly idle during the serial loop, so this is ~free, and it
    # removes the gx HBM write+read of the previous two-kernel design.
    for d in range(ND):
        w_full = w_ih_ref[d]                                   # [D_total, 3Hp]
        acc = None
        row = 0
        for p in range(num_parts):
            xp = x_refs[d][p][...]                             # [Tc, Bp, Dp]
            Dp = xp.shape[-1]
            x2d = xp.reshape(Tc * xp.shape[1], Dp)
            w_part = w_full if num_parts == 1 else w_full[row:row + Dp, :]
            contrib = jnp.dot(x2d, w_part, preferred_element_type=jnp.float32)
            acc = contrib if acc is None else acc + contrib
            row += Dp
        gx = acc + gxb_ref[d]                                  # [Tc*Bp, 3Hp]
        gx_scr[d][...] = gx.reshape(gx_scr[d].shape)

    # ---- recurrence: both directions interleaved per step ------------------
    # TODO(synk): if the bundle dump shows per-step W_hh pushes, switch to
    #             pltpu.matmul_push_rhs once per chunk + matmul_acc_lhs/pop.
    w_hh = [w_hh_ref[d] for d in range(ND)]                    # [Hp, 3Hp] bf16
    b_hn = [bhn_ref[d] for d in range(ND)]                     # [1, Hp]   f32

    def step(t, carry):
        hs = list(carry)
        tis = [t if d == 0 else Tc - 1 - t for d in range(ND)]
        # Issue both directions' recurrent matmuls first: two independent
        # chains hide MXU/EUP latency on a single TensorCore.
        gh = [jnp.dot(hs[d].astype(jnp.bfloat16), w_hh[d],
                      preferred_element_type=jnp.float32) for d in range(ND)]
        gxv = [gx_scr[d][tis[d]] for d in range(ND)]           # [Bp, 3Hp] f32
        new = []
        for d in range(ND):
            rz = jax.nn.sigmoid(gxv[d][:, :2 * Hp] + gh[d][:, :2 * Hp])
            r = rz[:, :Hp]
            z = rz[:, Hp:]
            n = jnp.tanh(gxv[d][:, 2 * Hp:] + r * (gh[d][:, 2 * Hp:] + b_hn[d]))
            h_new = (1.0 - z) * n + z * hs[d]
            if out_refs is not None:
                out_refs[d][tis[d]] = h_new.astype(out_refs[d].dtype)
            new.append(h_new)
        return tuple(new)

    carry0 = tuple(h_scr[d][...] for d in range(ND))
    carry = jax.lax.fori_loop(0, Tc, step, carry0, unroll=unroll)
    for d in range(ND):
        h_scr[d][...] = carry[d]

    # ---- last layer: fold the final linear into the epilogue ---------------
    if is_last:
        @pl.when(c == nc - 1)
        def _finalize():
            total = b_out_ref[...]                             # [1, Op] f32
            for d in range(ND):
                total = total + jnp.dot(carry[d], w_out_ref[d],
                                        preferred_element_type=jnp.float32)
            logits_ref[...] = total                            # [Bp, Op]


# ----------------------------------------------------------------------------
# Wrapper around pallas_call for one (bi)directional GRU layer
# ----------------------------------------------------------------------------
def gru_layer(x_parts, pack, *, hidden_pad, num_dirs, is_last, out_pack,
              vmem_limit):
    """x_parts: list of [T, Bp, D_p] bf16 (time-major, batch-padded).

    Returns [out_fwd, out_bwd] (each [T, Bp, Hp] bf16) for non-last layers,
    or the [Bp, Op] f32 logits for the last layer.
    """
    T, Bp, _ = x_parts[0].shape
    Hp = hidden_pad
    ND = num_dirs
    G3 = 3 * Hp
    d_parts = [int(x.shape[-1]) for x in x_parts]
    num_parts = len(x_parts)

    Tc = _pick_t_chunk(T, Bp, Hp, d_parts, ND, is_last, vmem_limit)
    nc = T // Tc
    unroll = _pick_unroll(ND, Bp, Hp)

    def _fwd_map3(c):
        return (c, 0, 0)

    def _bwd_map3(c, _nc=nc):
        return (_nc - 1 - c, 0, 0)

    kernel = functools.partial(
        _gru_layer_kernel, num_parts=num_parts, num_dirs=ND, hidden_pad=Hp,
        t_chunk=Tc, num_chunks=nc, is_last=is_last, unroll=unroll)

    # ---- inputs -------------------------------------------------------------
    inputs, in_specs = [], []
    for d in range(ND):
        imap = _fwd_map3 if d == 0 else _bwd_map3
        for p in range(num_parts):
            inputs.append(x_parts[p])
            in_specs.append(pl.BlockSpec((Tc, Bp, d_parts[p]), imap))
    inputs += [pack["w_ih"], pack["w_hh"], pack["gx_bias"], pack["b_hh_n"]]
    in_specs += [
        pl.BlockSpec(pack["w_ih"].shape, lambda c: (0, 0, 0)),
        pl.BlockSpec(pack["w_hh"].shape, lambda c: (0, 0, 0)),
        pl.BlockSpec(pack["gx_bias"].shape, lambda c: (0, 0, 0)),
        pl.BlockSpec(pack["b_hh_n"].shape, lambda c: (0, 0, 0)),
    ]
    if is_last:
        inputs += [out_pack["w"], out_pack["b"]]
        in_specs += [pl.BlockSpec(out_pack["w"].shape, lambda c: (0, 0, 0)),
                     pl.BlockSpec(out_pack["b"].shape, lambda c: (0, 0))]

    # ---- outputs ------------------------------------------------------------
    if is_last:
        Op = out_pack["w"].shape[-1]
        out_specs = (pl.BlockSpec((Bp, Op), lambda c: (0, 0)),)
        out_shape = (jax.ShapeDtypeStruct((Bp, Op), jnp.float32),)
    else:
        out_specs, out_shape = [], []
        for d in range(ND):
            omap = _fwd_map3 if d == 0 else _bwd_map3
            out_specs.append(pl.BlockSpec((Tc, Bp, Hp), omap))
            out_shape.append(jax.ShapeDtypeStruct((T, Bp, Hp), jnp.bfloat16))
        out_specs, out_shape = tuple(out_specs), tuple(out_shape)

    scratch = ([pltpu.VMEM((Tc, Bp, G3), jnp.float32) for _ in range(ND)] +
               [pltpu.VMEM((Bp, Hp), jnp.float32) for _ in range(ND)])

    results = pl.pallas_call(
        kernel,
        grid=(nc,),
        in_specs=in_specs,
        out_specs=out_specs,
        out_shape=out_shape,
        scratch_shapes=scratch,
        compiler_params=pltpu.CompilerParams(
            dimension_semantics=("arbitrary",),
            vmem_limit_bytes=vmem_limit),
    )(*inputs)

    if is_last:
        return results[0]
    return list(results)


# ----------------------------------------------------------------------------
# Model: parameters (PyTorch layout) + packing (kernel layout) + forward
# ----------------------------------------------------------------------------
def init_params(key, *, vocab_size, embedding_dim, hidden_dim, output_dim,
                n_layers, bidirectional):
    """Raw parameters in PyTorch nn.GRU / nn.Linear layout."""
    num_dirs = 2 if bidirectional else 1
    keys = iter(jax.random.split(key, 4 + n_layers * num_dirs * 4))

    def nrm(shape, scale=0.1):
        return scale * jax.random.normal(next(keys), shape, dtype=jnp.float32)

    params = {
        # stand-in for bert(text)[0]: deterministic embedding table
        "embedding": nrm((vocab_size, embedding_dim), 1.0),
        "gru": [],
        "out_w": nrm((output_dim, hidden_dim * num_dirs)),
        "out_b": nrm((output_dim,)),
    }
    for layer in range(n_layers):
        d_in = embedding_dim if layer == 0 else hidden_dim * num_dirs
        layer_p = []
        for _ in range(num_dirs):
            layer_p.append({
                "w_ih": nrm((3 * hidden_dim, d_in)),
                "w_hh": nrm((3 * hidden_dim, hidden_dim)),
                "b_ih": nrm((3 * hidden_dim,)),
                "b_hh": nrm((3 * hidden_dim,)),
            })
        params["gru"].append(layer_p)
    return params


def pack_params(raw, *, hidden_dim, bidirectional):
    """One-time conversion to kernel layout: transposed, gate-padded to Hp,
    direction-stacked, bf16 weights. Padded hidden lanes provably stay 0."""
    H = hidden_dim
    Hp = _round_up(H, 128)
    ND = 2 if bidirectional else 1

    packed = {"embedding": raw["embedding"], "layers": []}
    for li, layer_raw in enumerate(raw["gru"]):
        d_raw = layer_raw[0]["w_ih"].shape[1]
        if li == 0:
            d_pack = d_raw
            in_rows = jnp.arange(d_raw)
        else:
            d_pack = ND * Hp
            in_rows = jnp.concatenate(
                [jnp.arange(H) + s * Hp for s in range(ND)])

        w_ih_l, w_hh_l, gxb_l, bhn_l = [], [], [], []
        for p in layer_raw:
            wih = jnp.zeros((d_pack, 3 * Hp), jnp.float32)
            whh = jnp.zeros((Hp, 3 * Hp), jnp.float32)
            gxb = jnp.zeros((1, 3 * Hp), jnp.float32)
            for g in range(3):                       # gate order r, z, n
                wih = wih.at[in_rows, g * Hp:g * Hp + H].set(
                    p["w_ih"][g * H:(g + 1) * H, :].T)
                whh = whh.at[:H, g * Hp:g * Hp + H].set(
                    p["w_hh"][g * H:(g + 1) * H, :].T)
                b = p["b_ih"][g * H:(g + 1) * H]
                if g < 2:                            # fold b_hh for r, z
                    b = b + p["b_hh"][g * H:(g + 1) * H]
                gxb = gxb.at[0, g * Hp:g * Hp + H].set(b)
            bhn = jnp.zeros((1, Hp), jnp.float32).at[0, :H].set(
                p["b_hh"][2 * H:3 * H])
            w_ih_l.append(wih)
            w_hh_l.append(whh)
            gxb_l.append(gxb)
            bhn_l.append(bhn)

        packed["layers"].append({
            "w_ih": jnp.stack(w_ih_l).astype(jnp.bfloat16),   # [ND, d_pack, 3Hp]
            "w_hh": jnp.stack(w_hh_l).astype(jnp.bfloat16),   # [ND, Hp, 3Hp]
            "gx_bias": jnp.stack(gxb_l),                      # [ND, 1, 3Hp] f32
            "b_hh_n": jnp.stack(bhn_l),                       # [ND, 1, Hp]  f32
        })

    O = raw["out_w"].shape[0]
    Op = _round_up(O, 128)                # lane-dense logits store
    ow = jnp.zeros((ND, Hp, Op), jnp.float32)
    for s in range(ND):
        ow = ow.at[s, :H, :O].set(raw["out_w"][:, s * H:(s + 1) * H].T)
    ob = jnp.zeros((1, Op), jnp.float32).at[0, :O].set(raw["out_b"])
    packed["out"] = {"w": ow, "b": ob}
    return packed


def bert_gru_sentiment_forward(text, params, *, hidden_dim, output_dim,
                               n_layers, bidirectional):
    Hp = _round_up(hidden_dim, 128)
    ND = 2 if bidirectional else 1
    B = text.shape[0]
    Bp = _round_up(B, 16)                 # sublane-dense MXU rows / stores

    # "with torch.no_grad(): embedded = self.bert(text)[0]"  -> [B, T, E]
    # TODO(synk): external BERT encoder replaced by embedding-table lookup.
    embedded = params["embedding"][text]
    x = jnp.transpose(embedded, (1, 0, 2)).astype(jnp.bfloat16)   # [T, B, E]
    if Bp != B:
        x = jnp.pad(x, ((0, 0), (0, Bp - B), (0, 0)))

    vmem_limit = _vmem_limit_bytes()

    x_parts = [x]
    logits = None
    for layer in range(n_layers):
        is_last = (layer == n_layers - 1)
        res = gru_layer(x_parts, params["layers"][layer],
                        hidden_pad=Hp, num_dirs=ND, is_last=is_last,
                        out_pack=params["out"] if is_last else None,
                        vmem_limit=vmem_limit)
        if is_last:
            logits = res                        # [Bp, Op] f32
        else:
            x_parts = res                       # [out_fwd, out_bwd] bf16
        # NOTE: inter-layer nn.GRU dropout and the final nn.Dropout are
        # identity in eval mode; cat(hidden[-2], hidden[-1]) and the final
        # Linear are folded into the last layer's kernel epilogue.

    return logits[:B, :output_dim]              # [B, output_dim]


# ----------------------------------------------------------------------------
# Main
# ----------------------------------------------------------------------------
if __name__ == "__main__":
    VOCAB = 50
    EMBEDDING_DIM = 64     # bert.config.hidden_size
    HIDDEN_DIM = 32
    OUTPUT_DIM = 1
    N_LAYERS = 2
    BIDIRECTIONAL = True
    BATCH = 2
    SEQ = 8

    key = jax.random.PRNGKey(0)
    k_params, k_text = jax.random.split(key)

    raw_params = init_params(k_params,
                             vocab_size=VOCAB,
                             embedding_dim=EMBEDDING_DIM,
                             hidden_dim=HIDDEN_DIM,
                             output_dim=OUTPUT_DIM,
                             n_layers=N_LAYERS,
                             bidirectional=BIDIRECTIONAL)
    params = pack_params(raw_params, hidden_dim=HIDDEN_DIM,
                         bidirectional=BIDIRECTIONAL)

    text = jax.random.randint(k_text, (BATCH, SEQ), 0, VOCAB, dtype=jnp.int32)

    fwd = jax.jit(functools.partial(bert_gru_sentiment_forward,
                                    hidden_dim=HIDDEN_DIM,
                                    output_dim=OUTPUT_DIM,
                                    n_layers=N_LAYERS,
                                    bidirectional=BIDIRECTIONAL))
    out = fwd(text, params)
    out = jax.block_until_ready(out)
    assert out.shape == (BATCH, OUTPUT_DIM)
    print("KERNEL_OK")
</pallas_src>

<mosaic_0001>
module attributes {stable_mosaic.version = 11 : i64} {
  func.func @_gru_layer_kernel(%arg0: i32, %arg1: memref<8x16x128xbf16, #tpu.memory_space<vmem>>, %arg2: memref<8x16x128xbf16, #tpu.memory_space<vmem>>, %arg3: memref<8x16x128xbf16, #tpu.memory_space<vmem>>, %arg4: memref<8x16x128xbf16, #tpu.memory_space<vmem>>, %arg5: memref<2x256x384xbf16, #tpu.memory_space<vmem>>, %arg6: memref<2x128x384xbf16, #tpu.memory_space<vmem>>, %arg7: memref<2x1x384xf32, #tpu.memory_space<vmem>>, %arg8: memref<2x1x128xf32, #tpu.memory_space<vmem>>, %arg9: memref<2x128x128xf32, #tpu.memory_space<vmem>>, %arg10: memref<1x128xf32, #tpu.memory_space<vmem>>, %arg11: memref<16x128xf32, #tpu.memory_space<vmem>>, %arg12: memref<8x16x384xf32, #tpu.memory_space<vmem>>, %arg13: memref<8x16x384xf32, #tpu.memory_space<vmem>>, %arg14: memref<16x128xf32, #tpu.memory_space<vmem>>, %arg15: memref<16x128xf32, #tpu.memory_space<vmem>>) attributes {dimension_semantics = [#tpu.dimension_semantics<arbitrary>], iteration_bounds = array<i64: 1>, scalar_prefetch = 0 : i64, scratch_operands = 4 : i64, tpu.core_type = #tpu.core_type<tc>, window_params = [{transform_indices = @transform_0, window_bounds = array<i64: 8, 16, 128>}, {transform_indices = @transform_1, window_bounds = array<i64: 8, 16, 128>}, {transform_indices = @transform_2, window_bounds = array<i64: 8, 16, 128>}, {transform_indices = @transform_3, window_bounds = array<i64: 8, 16, 128>}, {pipeline_mode = #tpu.pipeline_mode<synchronous>, transform_indices = @transform_4, window_bounds = array<i64: 2, 256, 384>}, {pipeline_mode = #tpu.pipeline_mode<synchronous>, transform_indices = @transform_5, window_bounds = array<i64: 2, 128, 384>}, {pipeline_mode = #tpu.pipeline_mode<synchronous>, transform_indices = @transform_6, window_bounds = array<i64: 2, 1, 384>}, {pipeline_mode = #tpu.pipeline_mode<synchronous>, transform_indices = @transform_7, window_bounds = array<i64: 2, 1, 128>}, {pipeline_mode = #tpu.pipeline_mode<synchronous>, transform_indices = @transform_8, window_bounds = array<i64: 2, 128, 128>}, {pipeline_mode = #tpu.pipeline_mode<synchronous>, transform_indices = @transform_9, window_bounds = array<i64: 1, 128>}, {pipeline_mode = #tpu.pipeline_mode<synchronous>, transform_indices = @transform_10, window_bounds = array<i64: 16, 128>}]} {
    %c0_i32 = arith.constant 0 : i32
    %0 = arith.cmpi eq, %arg0, %c0_i32 : i32
    %1 = arith.extui %0 : i1 to i32
    %c0_i32_0 = arith.constant 0 : i32
    %2 = arith.cmpi ne, %1, %c0_i32_0 : i32
    scf.if %2 {
      %cst_56 = arith.constant 0.000000e+00 : f32
      %54 = vector.broadcast %cst_56 : f32 to vector<16x128xf32>
      %c0_57 = arith.constant 0 : index
      %c0_58 = arith.constant 0 : index
      %55 = vector.load %arg14[%c0_57, %c0_58] : memref<16x128xf32, #tpu.memory_space<vmem>>, vector<16x128xf32>
      tpu.vector_store %arg14[%c0_57, %c0_58], %54 {strides = array<i32>} : memref<16x128xf32, #tpu.memory_space<vmem>>, vector<16x128xf32>,
      %cst_59 = arith.constant 0.000000e+00 : f32
      %56 = vector.broadcast %cst_59 : f32 to vector<16x128xf32>
      %c0_60 = arith.constant 0 : index
      %c0_61 = arith.constant 0 : index
      %57 = vector.load %arg15[%c0_60, %c0_61] : memref<16x128xf32, #tpu.memory_space<vmem>>, vector<16x128xf32>
      tpu.vector_store %arg15[%c0_60, %c0_61], %56 {strides = array<i32>} : memref<16x128xf32, #tpu.memory_space<vmem>>, vector<16x128xf32>,
    } else {
    }
    %c0 = arith.constant 0 : index
    %c0_1 = arith.constant 0 : index
    %c0_2 = arith.constant 0 : index
    %3 = vector.load %arg5[%c0, %c0_1, %c0_2] : memref<2x256x384xbf16, #tpu.memory_space<vmem>>, vector<1x256x384xbf16>
    %4 = vector.shape_cast %3 : vector<1x256x384xbf16> to vector<256x384xbf16>
    %c0_3 = arith.constant 0 : index
    %c0_4 = arith.constant 0 : index
    %c0_5 = arith.constant 0 : index
    %5 = vector.load %arg1[%c0_3, %c0_4, %c0_5] : memref<8x16x128xbf16, #tpu.memory_space<vmem>>, vector<8x16x128xbf16>
    %6 = vector.shape_cast %5 : vector<8x16x128xbf16> to vector<128x128xbf16>
    %7 = vector.extract_strided_slice %4 {offsets = [0, 0], sizes = [128, 384], strides = [1, 1]} : vector<256x384xbf16> to vector<128x384xbf16>
    %cst = arith.constant dense<0.000000e+00> : vector<128x384xf32>
    %8 = tpu.matmul %6, %7, %cst {dimension_numbers = #tpu.dot_dimension_numbers<[1], [0], [0], [1], [0, 0, 1, 1], [], []>} : vector<128x128xbf16>, vector<128x384xbf16>, vector<128x384xf32> -> vector<128x384xf32>
    %c0_6 = arith.constant 0 : index
    %c0_7 = arith.constant 0 : index
    %c0_8 = arith.constant 0 : index
    %9 = vector.load %arg2[%c0_6, %c0_7, %c0_8] : memref<8x16x128xbf16, #tpu.memory_space<vmem>>, vector<8x16x128xbf16>
    %10 = vector.shape_cast %9 : vector<8x16x128xbf16> to vector<128x128xbf16>
    %11 = vector.extract_strided_slice %4 {offsets = [128, 0], sizes = [128, 384], strides = [1, 1]} : vector<256x384xbf16> to vector<128x384xbf16>
    %cst_9 = arith.constant dense<0.000000e+00> : vector<128x384xf32>
    %12 = tpu.matmul %10, %11, %cst_9 {dimension_numbers = #tpu.dot_dimension_numbers<[1], [0], [0], [1], [0, 0, 1, 1], [], []>} : vector<128x128xbf16>, vector<128x384xbf16>, vector<128x384xf32> -> vector<128x384xf32>
    %13 = arith.addf %8, %12 : vector<128x384xf32>
    %c0_10 = arith.constant 0 : index
    %c0_11 = arith.constant 0 : index
    %c0_12 = arith.constant 0 : index
    %14 = vector.load %arg7[%c0_10, %c0_11, %c0_12] : memref<2x1x384xf32, #tpu.memory_space<vmem>>, vector<1x1x384xf32>
    %15 = vector.shape_cast %14 : vector<1x1x384xf32> to vector<1x384xf32>
    %16 = vector.broadcast %15 : vector<1x384xf32> to vector<128x384xf32>
    %17 = arith.addf %13, %16 : vector<128x384xf32>
    %18 = vector.shape_cast %17 : vector<128x384xf32> to vector<8x16x384xf32>
    %c0_13 = arith.constant 0 : index
    %c0_14 = arith.constant 0 : index
    %c0_15 = arith.constant 0 : index
    %19 = vector.load %arg12[%c0_13, %c0_14, %c0_15] : memref<8x16x384xf32, #tpu.memory_space<vmem>>, vector<8x16x384xf32>
    tpu.vector_store %arg12[%c0_13, %c0_14, %c0_15], %18 {strides = array<i32>} : memref<8x16x384xf32, #tpu.memory_space<vmem>>, vector<8x16x384xf32>,
    %c1 = arith.constant 1 : index
    %c0_16 = arith.constant 0 : index
    %c0_17 = arith.constant 0 : index
    %20 = vector.load %arg5[%c1, %c0_16, %c0_17] : memref<2x256x384xbf16, #tpu.memory_space<vmem>>, vector<1x256x384xbf16>
    %21 = vector.shape_cast %20 : vector<1x256x384xbf16> to vector<256x384xbf16>
    %c0_18 = arith.constant 0 : index
    %c0_19 = arith.constant 0 : index
    %c0_20 = arith.constant 0 : index
    %22 = vector.load %arg3[%c0_18, %c0_19, %c0_20] : memref<8x16x128xbf16, #tpu.memory_space<vmem>>, vector<8x16x128xbf16>
    %23 = vector.shape_cast %22 : vector<8x16x128xbf16> to vector<128x128xbf16>
    %24 = vector.extract_strided_slice %21 {offsets = [0, 0], sizes = [128, 384], strides = [1, 1]} : vector<256x384xbf16> to vector<128x384xbf16>
    %cst_21 = arith.constant dense<0.000000e+00> : vector<128x384xf32>
    %25 = tpu.matmul %23, %24, %cst_21 {dimension_numbers = #tpu.dot_dimension_numbers<[1], [0], [0], [1], [0, 0, 1, 1], [], []>} : vector<128x128xbf16>, vector<128x384xbf16>, vector<128x384xf32> -> vector<128x384xf32>
    %c0_22 = arith.constant 0 : index
    %c0_23 = arith.constant 0 : index
    %c0_24 = arith.constant 0 : index
    %26 = vector.load %arg4[%c0_22, %c0_23, %c0_24] : memref<8x16x128xbf16, #tpu.memory_space<vmem>>, vector<8x16x128xbf16>
    %27 = vector.shape_cast %26 : vector<8x16x128xbf16> to vector<128x128xbf16>
    %28 = vector.extract_strided_slice %21 {offsets = [128, 0], sizes = [128, 384], strides = [1, 1]} : vector<256x384xbf16> to vector<128x384xbf16>
    %cst_25 = arith.constant dense<0.000000e+00> : vector<128x384xf32>
    %29 = tpu.matmul %27, %28, %cst_25 {dimension_numbers = #tpu.dot_dimension_numbers<[1], [0], [0], [1], [0, 0, 1, 1], [], []>} : vector<128x128xbf16>, vector<128x384xbf16>, vector<128x384xf32> -> vector<128x384xf32>
    %30 = arith.addf %25, %29 : vector<128x384xf32>
    %c1_26 = arith.constant 1 : index
    %c0_27 = arith.constant 0 : index
    %c0_28 = arith.constant 0 : index
    %31 = vector.load %arg7[%c1_26, %c0_27, %c0_28] : memref<2x1x384xf32, #tpu.memory_space<vmem>>, vector<1x1x384xf32>
    %32 = vector.shape_cast %31 : vector<1x1x384xf32> to vector<1x384xf32>
    %33 = vector.broadcast %32 : vector<1x384xf32> to vector<128x384xf32>
    %34 = arith.addf %30, %33 : vector<128x384xf32>
    %35 = vector.shape_cast %34 : vector<128x384xf32> to vector<8x16x384xf32>
    %c0_29 = arith.constant 0 : index
    %c0_30 = arith.constant 0 : index
    %c0_31 = arith.constant 0 : index
    %36 = vector.load %arg13[%c0_29, %c0_30, %c0_31] : memref<8x16x384xf32, #tpu.memory_space<vmem>>, vector<8x16x384xf32>
    tpu.vector_store %arg13[%c0_29, %c0_30, %c0_31], %35 {strides = array<i32>} : memref<8x16x384xf32, #tpu.memory_space<vmem>>, vector<8x16x384xf32>,
    %c0_32 = arith.constant 0 : index
    %c0_33 = arith.constant 0 : index
    %c0_34 = arith.constant 0 : index
    %37 = vector.load %arg6[%c0_32, %c0_33, %c0_34] : memref<2x128x384xbf16, #tpu.memory_space<vmem>>, vector<1x128x384xbf16>
    %38 = vector.shape_cast %37 : vector<1x128x384xbf16> to vector<128x384xbf16>
    %c1_35 = arith.constant 1 : index
    %c0_36 = arith.constant 0 : index
    %c0_37 = arith.constant 0 : index
    %39 = vector.load %arg6[%c1_35, %c0_36, %c0_37] : memref<2x128x384xbf16, #tpu.memory_space<vmem>>, vector<1x128x384xbf16>
    %40 = vector.shape_cast %39 : vector<1x128x384xbf16> to vector<128x384xbf16>
    %c0_38 = arith.constant 0 : index
    %c0_39 = arith.constant 0 : index
    %c0_40 = arith.constant 0 : index
    %41 = vector.load %arg8[%c0_38, %c0_39, %c0_40] : memref<2x1x128xf32, #tpu.memory_space<vmem>>, vector<1x1x128xf32>
    %42 = vector.shape_cast %41 : vector<1x1x128xf32> to vector<1x128xf32>
    %c1_41 = arith.constant 1 : index
    %c0_42 = arith.constant 0 : index
    %c0_43 = arith.constant 0 : index
    %43 = vector.load %arg8[%c1_41, %c0_42, %c0_43] : memref<2x1x128xf32, #tpu.memory_space<vmem>>, vector<1x1x128xf32>
    %44 = vector.shape_cast %43 : vector<1x1x128xf32> to vector<1x128xf32>
    %c0_44 = arith.constant 0 : index
    %c0_45 = arith.constant 0 : index
    %45 = vector.load %arg14[%c0_44, %c0_45] : memref<16x128xf32, #tpu.memory_space<vmem>>, vector<16x128xf32>
    %c0_46 = arith.constant 0 : index
    %c0_47 = arith.constant 0 : index
    %46 = vector.load %arg15[%c0_46, %c0_47] : memref<16x128xf32, #tpu.memory_space<vmem>>, vector<16x128xf32>
    %c0_i32_48 = arith.constant 0 : i32
    %c8_i32 = arith.constant 8 : i32
    %47 = arith.addi %c0_i32_48, %c8_i32 : i32
    %c1_i32 = arith.constant 1 : i32
    %48:2 = scf.for %arg16 = %c0_i32_48 to %47 step %c1_i32 iter_args(%arg17 = %45, %arg18 = %46) -> (vector<16x128xf32>, vector<16x128xf32>)  : i32 {
      %c7_i32 = arith.constant 7 : i32
      %54 = arith.subi %c7_i32, %arg16 : i32
      %55 = arith.truncf %arg17 : vector<16x128xf32> to vector<16x128xbf16>
      %cst_56 = arith.constant dense<0.000000e+00> : vector<16x384xf32>
      %56 = tpu.matmul %55, %38, %cst_56 {dimension_numbers = #tpu.dot_dimension_numbers<[1], [0], [0], [1], [0, 0, 1, 1], [], []>} : vector<16x128xbf16>, vector<128x384xbf16>, vector<16x384xf32> -> vector<16x384xf32>
      %57 = arith.truncf %arg18 : vector<16x128xf32> to vector<16x128xbf16>
      %cst_57 = arith.constant dense<0.000000e+00> : vector<16x384xf32>
      %58 = tpu.matmul %57, %40, %cst_57 {dimension_numbers = #tpu.dot_dimension_numbers<[1], [0], [0], [1], [0, 0, 1, 1], [], []>} : vector<16x128xbf16>, vector<128x384xbf16>, vector<16x384xf32> -> vector<16x384xf32>
      %59 = arith.index_cast %arg16 : i32 to index
      %c0_58 = arith.constant 0 : index
      %c0_59 = arith.constant 0 : index
      %60 = vector.load %arg12[%59, %c0_58, %c0_59] : memref<8x16x384xf32, #tpu.memory_space<vmem>>, vector<1x16x384xf32>
      %61 = vector.shape_cast %60 : vector<1x16x384xf32> to vector<16x384xf32>
      %62 = arith.index_cast %54 : i32 to index
      %c0_60 = arith.constant 0 : index
      %c0_61 = arith.constant 0 : index
      %63 = vector.load %arg13[%62, %c0_60, %c0_61] : memref<8x16x384xf32, #tpu.memory_space<vmem>>, vector<1x16x384xf32>
      %64 = vector.shape_cast %63 : vector<1x16x384xf32> to vector<16x384xf32>
      %65 = vector.extract_strided_slice %61 {offsets = [0, 0], sizes = [16, 256], strides = [1, 1]} : vector<16x384xf32> to vector<16x256xf32>
      %66 = vector.extract_strided_slice %56 {offsets = [0, 0], sizes = [16, 256], strides = [1, 1]} : vector<16x384xf32> to vector<16x256xf32>
      %67 = arith.addf %65, %66 : vector<16x256xf32>
      %68 = arith.negf %67 : vector<16x256xf32>
      %69 = math.exp %68 : vector<16x256xf32>
      %cst_62 = arith.constant 1.000000e+00 : f32
      %70 = vector.broadcast %cst_62 : f32 to vector<16x256xf32>
      %71 = arith.addf %70, %69 : vector<16x256xf32>
      %72 = arith.divf %70, %71 : vector<16x256xf32>
      %73 = vector.extract_strided_slice %72 {offsets = [0, 0], sizes = [16, 128], strides = [1, 1]} : vector<16x256xf32> to vector<16x128xf32>
      %74 = vector.extract_strided_slice %72 {offsets = [0, 128], sizes = [16, 128], strides = [1, 1]} : vector<16x256xf32> to vector<16x128xf32>
      %75 = vector.extract_strided_slice %61 {offsets = [0, 256], sizes = [16, 128], strides = [1, 1]} : vector<16x384xf32> to vector<16x128xf32>
      %76 = vector.extract_strided_slice %56 {offsets = [0, 256], sizes = [16, 128], strides = [1, 1]} : vector<16x384xf32> to vector<16x128xf32>
      %77 = vector.broadcast %42 : vector<1x128xf32> to vector<16x128xf32>
      %78 = arith.addf %76, %77 : vector<16x128xf32>
      %79 = arith.mulf %73, %78 : vector<16x128xf32>
      %80 = arith.addf %75, %79 : vector<16x128xf32>
      %81 = math.tanh %80 : vector<16x128xf32>
      %cst_63 = arith.constant 1.000000e+00 : f32
      %82 = vector.broadcast %cst_63 : f32 to vector<16x128xf32>
      %83 = arith.subf %82, %74 : vector<16x128xf32>
      %84 = arith.mulf %83, %81 : vector<16x128xf32>
      %85 = arith.mulf %74, %arg17 : vector<16x128xf32>
      %86 = arith.addf %84, %85 : vector<16x128xf32>
      %87 = vector.extract_strided_slice %64 {offsets = [0, 0], sizes = [16, 256], strides = [1, 1]} : vector<16x384xf32> to vector<16x256xf32>
      %88 = vector.extract_strided_slice %58 {offsets = [0, 0], sizes = [16, 256], strides = [1, 1]} : vector<16x384xf32> to vector<16x256xf32>
      %89 = arith.addf %87, %88 : vector<16x256xf32>
      %90 = arith.negf %89 : vector<16x256xf32>
      %91 = math.exp %90 : vector<16x256xf32>
      %cst_64 = arith.constant 1.000000e+00 : f32
      %92 = vector.broadcast %cst_64 : f32 to vector<16x256xf32>
      %93 = arith.addf %92, %91 : vector<16x256xf32>
      %94 = arith.divf %92, %93 : vector<16x256xf32>
      %95 = vector.extract_strided_slice %94 {offsets = [0, 0], sizes = [16, 128], strides = [1, 1]} : vector<16x256xf32> to vector<16x128xf32>
      %96 = vector.extract_strided_slice %94 {offsets = [0, 128], sizes = [16, 128], strides = [1, 1]} : vector<16x256xf32> to vector<16x128xf32>
      %97 = vector.extract_strided_slice %64 {offsets = [0, 256], sizes = [16, 128], strides = [1, 1]} : vector<16x384xf32> to vector<16x128xf32>
      %98 = vector.extract_strided_slice %58 {offsets = [0, 256], sizes = [16, 128], strides = [1, 1]} : vector<16x384xf32> to vector<16x128xf32>
      %99 = vector.broadcast %44 : vector<1x128xf32> to vector<16x128xf32>
      %100 = arith.addf %98, %99 : vector<16x128xf32>
      %101 = arith.mulf %95, %100 : vector<16x128xf32>
      %102 = arith.addf %97, %101 : vector<16x128xf32>
      %103 = math.tanh %102 : vector<16x128xf32>
      %cst_65 = arith.constant 1.000000e+00 : f32
      %104 = vector.broadcast %cst_65 : f32 to vector<16x128xf32>
      %105 = arith.subf %104, %96 : vector<16x128xf32>
      %106 = arith.mulf %105, %103 : vector<16x128xf32>
      %107 = arith.mulf %96, %arg18 : vector<16x128xf32>
      %108 = arith.addf %106, %107 : vector<16x128xf32>
      scf.yield %86, %108 : vector<16x128xf32>, vector<16x128xf32>
    }
    %c8_i32_49 = arith.constant 8 : i32
    %c0_50 = arith.constant 0 : index
    %c0_51 = arith.constant 0 : index
    %49 = vector.load %arg14[%c0_50, %c0_51] : memref<16x128xf32, #tpu.memory_space<vmem>>, vector<16x128xf32>
    tpu.vector_store %arg14[%c0_50, %c0_51], %48#0 {strides = array<i32>} : memref<16x128xf32, #tpu.memory_space<vmem>>, vector<16x128xf32>,
    %c0_52 = arith.constant 0 : index
    %c0_53 = arith.constant 0 : index
    %50 = vector.load %arg15[%c0_52, %c0_53] : memref<16x128xf32, #tpu.memory_space<vmem>>, vector<16x128xf32>
    tpu.vector_store %arg15[%c0_52, %c0_53], %48#1 {strides = array<i32>} : memref<16x128xf32, #tpu.memory_space<vmem>>, vector<16x128xf32>,
    %c0_i32_54 = arith.constant 0 : i32
    %51 = arith.cmpi eq, %arg0, %c0_i32_54 : i32
    %52 = arith.extui %51 : i1 to i32
    %c0_i32_55 = arith.constant 0 : i32
    %53 = arith.cmpi ne, %52, %c0_i32_55 : i32
    scf.if %53 {
      %c0_56 = arith.constant 0 : index
      %c0_57 = arith.constant 0 : index
      %54 = vector.load %arg10[%c0_56, %c0_57] : memref<1x128xf32, #tpu.memory_space<vmem>>, vector<1x128xf32>
      %c0_58 = arith.constant 0 : index
      %c0_59 = arith.constant 0 : index
      %c0_60 = arith.constant 0 : index
      %55 = vector.load %arg9[%c0_58, %c0_59, %c0_60] : memref<2x128x128xf32, #tpu.memory_space<vmem>>, vector<1x128x128xf32>
      %56 = vector.shape_cast %55 : vector<1x128x128xf32> to vector<128x128xf32>
      %cst_61 = arith.constant dense<0.000000e+00> : vector<16x128xf32>
      %57 = tpu.matmul %48#0, %56, %cst_61 {dimension_numbers = #tpu.dot_dimension_numbers<[1], [0], [0], [1], [0, 0, 1, 1], [], []>} : vector<16x128xf32>, vector<128x128xf32>, vector<16x128xf32> -> vector<16x128xf32>
      %58 = vector.broadcast %54 : vector<1x128xf32> to vector<16x128xf32>
      %59 = arith.addf %58, %57 : vector<16x128xf32>
      %c1_62 = arith.constant 1 : index
      %c0_63 = arith.constant 0 : index
      %c0_64 = arith.constant 0 : index
      %60 = vector.load %arg9[%c1_62, %c0_63, %c0_64] : memref<2x128x128xf32, #tpu.memory_space<vmem>>, vector<1x128x128xf32>
      %61 = vector.shape_cast %60 : vector<1x128x128xf32> to vector<128x128xf32>
      %cst_65 = arith.constant dense<0.000000e+00> : vector<16x128xf32>
      %62 = tpu.matmul %48#1, %61, %cst_65 {dimension_numbers = #tpu.dot_dimension_numbers<[1], [0], [0], [1], [0, 0, 1, 1], [], []>} : vector<16x128xf32>, vector<128x128xf32>, vector<16x128xf32> -> vector<16x128xf32>
      %63 = arith.addf %59, %62 : vector<16x128xf32>
      %c0_66 = arith.constant 0 : index
      %c0_67 = arith.constant 0 : index
      %64 = vector.load %arg11[%c0_66, %c0_67] : memref<16x128xf32, #tpu.memory_space<vmem>>, vector<16x128xf32>
      tpu.vector_store %arg11[%c0_66, %c0_67], %63 {strides = array<i32>} : memref<16x128xf32, #tpu.memory_space<vmem>>, vector<16x128xf32>,
    } else {
    }
    return
  }
  func.func @transform_0(%arg0: i32) -> (i32, i32, i32) {
    %c0_i32 = arith.constant 0 : i32
    %c0_i32_0 = arith.constant 0 : i32
    %c0_i32_1 = arith.constant 0 : i32
    return %arg0, %c0_i32, %c0_i32_0 : i32, i32, i32
  }
  func.func @transform_1(%arg0: i32) -> (i32, i32, i32) {
    %c0_i32 = arith.constant 0 : i32
    %c0_i32_0 = arith.constant 0 : i32
    %c0_i32_1 = arith.constant 0 : i32
    return %arg0, %c0_i32, %c0_i32_0 : i32, i32, i32
  }
  func.func @transform_2(%arg0: i32) -> (i32, i32, i32) {
    %c0_i32 = arith.constant 0 : i32
    %0 = arith.subi %c0_i32, %arg0 : i32
    %c0_i32_0 = arith.constant 0 : i32
    %c0_i32_1 = arith.constant 0 : i32
    %c0_i32_2 = arith.constant 0 : i32
    return %0, %c0_i32_0, %c0_i32_1 : i32, i32, i32
  }
  func.func @transform_3(%arg0: i32) -> (i32, i32, i32) {
    %c0_i32 = arith.constant 0 : i32
    %0 = arith.subi %c0_i32, %arg0 : i32
    %c0_i32_0 = arith.constant 0 : i32
    %c0_i32_1 = arith.constant 0 : i32
    %c0_i32_2 = arith.constant 0 : i32
    return %0, %c0_i32_0, %c0_i32_1 : i32, i32, i32
  }
  func.func @transform_4(%arg0: i32) -> (i32, i32, i32) {
    %c0_i32 = arith.constant 0 : i32
    %c0_i32_0 = arith.constant 0 : i32
    %c0_i32_1 = arith.constant 0 : i32
    %c0_i32_2 = arith.constant 0 : i32
    return %c0_i32, %c0_i32_0, %c0_i32_1 : i32, i32, i32
  }
  func.func @transform_5(%arg0: i32) -> (i32, i32, i32) {
    %c0_i32 = arith.constant 0 : i32
    %c0_i32_0 = arith.constant 0 : i32
    %c0_i32_1 = arith.constant 0 : i32
    %c0_i32_2 = arith.constant 0 : i32
    return %c0_i32, %c0_i32_0, %c0_i32_1 : i32, i32, i32
  }
  func.func @transform_6(%arg0: i32) -> (i32, i32, i32) {
    %c0_i32 = arith.constant 0 : i32
    %c0_i32_0 = arith.constant 0 : i32
    %c0_i32_1 = arith.constant 0 : i32
    %c0_i32_2 = arith.constant 0 : i32
    return %c0_i32, %c0_i32_0, %c0_i32_1 : i32, i32, i32
  }
  func.func @transform_7(%arg0: i32) -> (i32, i32, i32) {
    %c0_i32 = arith.constant 0 : i32
    %c0_i32_0 = arith.constant 0 : i32
    %c0_i32_1 = arith.constant 0 : i32
    %c0_i32_2 = arith.constant 0 : i32
    return %c0_i32, %c0_i32_0, %c0_i32_1 : i32, i32, i32
  }
  func.func @transform_8(%arg0: i32) -> (i32, i32, i32) {
    %c0_i32 = arith.constant 0 : i32
    %c0_i32_0 = arith.constant 0 : i32
    %c0_i32_1 = arith.constant 0 : i32
    %c0_i32_2 = arith.constant 0 : i32
    return %c0_i32, %c0_i32_0, %c0_i32_1 : i32, i32, i32
  }
  func.func @transform_9(%arg0: i32) -> (i32, i32) {
    %c0_i32 = arith.constant 0 : i32
    %c0_i32_0 = arith.constant 0 : i32
    %c0_i32_1 = arith.constant 0 : i32
    return %c0_i32, %c0_i32_0 : i32, i32
  }
  func.func @transform_10(%arg0: i32) -> (i32, i32) {
    %c0_i32 = arith.constant 0 : i32
    %c0_i32_0 = arith.constant 0 : i32
    %c0_i32_1 = arith.constant 0 : i32
    return %c0_i32, %c0_i32_0 : i32, i32
  }
}

module attributes {stable_mosaic.version = 11 : i64} {
  func.func @_gru_layer_kernel(%arg0: i32, %arg1: memref<8x16x64xbf16, #tpu.memory_space<vmem>>, %arg2: memref<8x16x64xbf16, #tpu.memory_space<vmem>>, %arg3: memref<2x64x384xbf16, #tpu.memory_space<vmem>>, %arg4: memref<2x128x384xbf16, #tpu.memory_space<vmem>>, %arg5: memref<2x1x384xf32, #tpu.memory_space<vmem>>, %arg6: memref<2x1x128xf32, #tpu.memory_space<vmem>>, %arg7: memref<8x16x128xbf16, #tpu.memory_space<vmem>>, %arg8: memref<8x16x128xbf16, #tpu.memory_space<vmem>>, %arg9: memref<8x16x384xf32, #tpu.memory_space<vmem>>, %arg10: memref<8x16x384xf32, #tpu.memory_space<vmem>>, %arg11: memref<16x128xf32, #tpu.memory_space<vmem>>, %arg12: memref<16x128xf32, #tpu.memory_space<vmem>>) attributes {dimension_semantics = [#tpu.dimension_semantics<arbitrary>], iteration_bounds = array<i64: 1>, scalar_prefetch = 0 : i64, scratch_operands = 4 : i64, tpu.core_type = #tpu.core_type<tc>, window_params = [{transform_indices = @transform_0, window_bounds = array<i64: 8, 16, 64>}, {transform_indices = @transform_1, window_bounds = array<i64: 8, 16, 64>}, {pipeline_mode = #tpu.pipeline_mode<synchronous>, transform_indices = @transform_2, window_bounds = array<i64: 2, 64, 384>}, {pipeline_mode = #tpu.pipeline_mode<synchronous>, transform_indices = @transform_3, window_bounds = array<i64: 2, 128, 384>}, {pipeline_mode = #tpu.pipeline_mode<synchronous>, transform_indices = @transform_4, window_bounds = array<i64: 2, 1, 384>}, {pipeline_mode = #tpu.pipeline_mode<synchronous>, transform_indices = @transform_5, window_bounds = array<i64: 2, 1, 128>}, {transform_indices = @transform_6, window_bounds = array<i64: 8, 16, 128>}, {transform_indices = @transform_7, window_bounds = array<i64: 8, 16, 128>}]} {
    %c0_i32 = arith.constant 0 : i32
    %0 = arith.cmpi eq, %arg0, %c0_i32 : i32
    %1 = arith.extui %0 : i1 to i32
    %c0_i32_0 = arith.constant 0 : i32
    %2 = arith.cmpi ne, %1, %c0_i32_0 : i32
    scf.if %2 {
      %cst_46 = arith.constant 0.000000e+00 : f32
      %39 = vector.broadcast %cst_46 : f32 to vector<16x128xf32>
      %c0_47 = arith.constant 0 : index
      %c0_48 = arith.constant 0 : index
      %40 = vector.load %arg11[%c0_47, %c0_48] : memref<16x128xf32, #tpu.memory_space<vmem>>, vector<16x128xf32>
      tpu.vector_store %arg11[%c0_47, %c0_48], %39 {strides = array<i32>} : memref<16x128xf32, #tpu.memory_space<vmem>>, vector<16x128xf32>,
      %cst_49 = arith.constant 0.000000e+00 : f32
      %41 = vector.broadcast %cst_49 : f32 to vector<16x128xf32>
      %c0_50 = arith.constant 0 : index
      %c0_51 = arith.constant 0 : index
      %42 = vector.load %arg12[%c0_50, %c0_51] : memref<16x128xf32, #tpu.memory_space<vmem>>, vector<16x128xf32>
      tpu.vector_store %arg12[%c0_50, %c0_51], %41 {strides = array<i32>} : memref<16x128xf32, #tpu.memory_space<vmem>>, vector<16x128xf32>,
    } else {
    }
    %c0 = arith.constant 0 : index
    %c0_1 = arith.constant 0 : index
    %c0_2 = arith.constant 0 : index
    %3 = vector.load %arg3[%c0, %c0_1, %c0_2] : memref<2x64x384xbf16, #tpu.memory_space<vmem>>, vector<1x64x384xbf16>
    %4 = vector.shape_cast %3 : vector<1x64x384xbf16> to vector<64x384xbf16>
    %c0_3 = arith.constant 0 : index
    %c0_4 = arith.constant 0 : index
    %c0_5 = arith.constant 0 : index
    %5 = vector.load %arg1[%c0_3, %c0_4, %c0_5] : memref<8x16x64xbf16, #tpu.memory_space<vmem>>, vector<8x16x64xbf16>
    %6 = vector.shape_cast %5 : vector<8x16x64xbf16> to vector<128x64xbf16>
    %cst = arith.constant dense<0.000000e+00> : vector<128x384xf32>
    %7 = tpu.matmul %6, %4, %cst {dimension_numbers = #tpu.dot_dimension_numbers<[1], [0], [0], [1], [0, 0, 1, 1], [], []>} : vector<128x64xbf16>, vector<64x384xbf16>, vector<128x384xf32> -> vector<128x384xf32>
    %c0_6 = arith.constant 0 : index
    %c0_7 = arith.constant 0 : index
    %c0_8 = arith.constant 0 : index
    %8 = vector.load %arg5[%c0_6, %c0_7, %c0_8] : memref<2x1x384xf32, #tpu.memory_space<vmem>>, vector<1x1x384xf32>
    %9 = vector.shape_cast %8 : vector<1x1x384xf32> to vector<1x384xf32>
    %10 = vector.broadcast %9 : vector<1x384xf32> to vector<128x384xf32>
    %11 = arith.addf %7, %10 : vector<128x384xf32>
    %12 = vector.shape_cast %11 : vector<128x384xf32> to vector<8x16x384xf32>
    %c0_9 = arith.constant 0 : index
    %c0_10 = arith.constant 0 : index
    %c0_11 = arith.constant 0 : index
    %13 = vector.load %arg9[%c0_9, %c0_10, %c0_11] : memref<8x16x384xf32, #tpu.memory_space<vmem>>, vector<8x16x384xf32>
    tpu.vector_store %arg9[%c0_9, %c0_10, %c0_11], %12 {strides = array<i32>} : memref<8x16x384xf32, #tpu.memory_space<vmem>>, vector<8x16x384xf32>,
    %c1 = arith.constant 1 : index
    %c0_12 = arith.constant 0 : index
    %c0_13 = arith.constant 0 : index
    %14 = vector.load %arg3[%c1, %c0_12, %c0_13] : memref<2x64x384xbf16, #tpu.memory_space<vmem>>, vector<1x64x384xbf16>
    %15 = vector.shape_cast %14 : vector<1x64x384xbf16> to vector<64x384xbf16>
    %c0_14 = arith.constant 0 : index
    %c0_15 = arith.constant 0 : index
    %c0_16 = arith.constant 0 : index
    %16 = vector.load %arg2[%c0_14, %c0_15, %c0_16] : memref<8x16x64xbf16, #tpu.memory_space<vmem>>, vector<8x16x64xbf16>
    %17 = vector.shape_cast %16 : vector<8x16x64xbf16> to vector<128x64xbf16>
    %cst_17 = arith.constant dense<0.000000e+00> : vector<128x384xf32>
    %18 = tpu.matmul %17, %15, %cst_17 {dimension_numbers = #tpu.dot_dimension_numbers<[1], [0], [0], [1], [0, 0, 1, 1], [], []>} : vector<128x64xbf16>, vector<64x384xbf16>, vector<128x384xf32> -> vector<128x384xf32>
    %c1_18 = arith.constant 1 : index
    %c0_19 = arith.constant 0 : index
    %c0_20 = arith.constant 0 : index
    %19 = vector.load %arg5[%c1_18, %c0_19, %c0_20] : memref<2x1x384xf32, #tpu.memory_space<vmem>>, vector<1x1x384xf32>
    %20 = vector.shape_cast %19 : vector<1x1x384xf32> to vector<1x384xf32>
    %21 = vector.broadcast %20 : vector<1x384xf32> to vector<128x384xf32>
    %22 = arith.addf %18, %21 : vector<128x384xf32>
    %23 = vector.shape_cast %22 : vector<128x384xf32> to vector<8x16x384xf32>
    %c0_21 = arith.constant 0 : index
    %c0_22 = arith.constant 0 : index
    %c0_23 = arith.constant 0 : index
    %24 = vector.load %arg10[%c0_21, %c0_22, %c0_23] : memref<8x16x384xf32, #tpu.memory_space<vmem>>, vector<8x16x384xf32>
    tpu.vector_store %arg10[%c0_21, %c0_22, %c0_23], %23 {strides = array<i32>} : memref<8x16x384xf32, #tpu.memory_space<vmem>>, vector<8x16x384xf32>,
    %c0_24 = arith.constant 0 : index
    %c0_25 = arith.constant 0 : index
    %c0_26 = arith.constant 0 : index
    %25 = vector.load %arg4[%c0_24, %c0_25, %c0_26] : memref<2x128x384xbf16, #tpu.memory_space<vmem>>, vector<1x128x384xbf16>
    %26 = vector.shape_cast %25 : vector<1x128x384xbf16> to vector<128x384xbf16>
    %c1_27 = arith.constant 1 : index
    %c0_28 = arith.constant 0 : index
    %c0_29 = arith.constant 0 : index
    %27 = vector.load %arg4[%c1_27, %c0_28, %c0_29] : memref<2x128x384xbf16, #tpu.memory_space<vmem>>, vector<1x128x384xbf16>
    %28 = vector.shape_cast %27 : vector<1x128x384xbf16> to vector<128x384xbf16>
    %c0_30 = arith.constant 0 : index
    %c0_31 = arith.constant 0 : index
    %c0_32 = arith.constant 0 : index
    %29 = vector.load %arg6[%c0_30, %c0_31, %c0_32] : memref<2x1x128xf32, #tpu.memory_space<vmem>>, vector<1x1x128xf32>
    %30 = vector.shape_cast %29 : vector<1x1x128xf32> to vector<1x128xf32>
    %c1_33 = arith.constant 1 : index
    %c0_34 = arith.constant 0 : index
    %c0_35 = arith.constant 0 : index
    %31 = vector.load %arg6[%c1_33, %c0_34, %c0_35] : memref<2x1x128xf32, #tpu.memory_space<vmem>>, vector<1x1x128xf32>
    %32 = vector.shape_cast %31 : vector<1x1x128xf32> to vector<1x128xf32>
    %c0_36 = arith.constant 0 : index
    %c0_37 = arith.constant 0 : index
    %33 = vector.load %arg11[%c0_36, %c0_37] : memref<16x128xf32, #tpu.memory_space<vmem>>, vector<16x128xf32>
    %c0_38 = arith.constant 0 : index
    %c0_39 = arith.constant 0 : index
    %34 = vector.load %arg12[%c0_38, %c0_39] : memref<16x128xf32, #tpu.memory_space<vmem>>, vector<16x128xf32>
    %c0_i32_40 = arith.constant 0 : i32
    %c8_i32 = arith.constant 8 : i32
    %35 = arith.addi %c0_i32_40, %c8_i32 : i32
    %c1_i32 = arith.constant 1 : i32
    %36:2 = scf.for %arg13 = %c0_i32_40 to %35 step %c1_i32 iter_args(%arg14 = %33, %arg15 = %34) -> (vector<16x128xf32>, vector<16x128xf32>)  : i32 {
      %c7_i32 = arith.constant 7 : i32
      %39 = arith.subi %c7_i32, %arg13 : i32
      %40 = arith.truncf %arg14 : vector<16x128xf32> to vector<16x128xbf16>
      %cst_46 = arith.constant dense<0.000000e+00> : vector<16x384xf32>
      %41 = tpu.matmul %40, %26, %cst_46 {dimension_numbers = #tpu.dot_dimension_numbers<[1], [0], [0], [1], [0, 0, 1, 1], [], []>} : vector<16x128xbf16>, vector<128x384xbf16>, vector<16x384xf32> -> vector<16x384xf32>
      %42 = arith.truncf %arg15 : vector<16x128xf32> to vector<16x128xbf16>
      %cst_47 = arith.constant dense<0.000000e+00> : vector<16x384xf32>
      %43 = tpu.matmul %42, %28, %cst_47 {dimension_numbers = #tpu.dot_dimension_numbers<[1], [0], [0], [1], [0, 0, 1, 1], [], []>} : vector<16x128xbf16>, vector<128x384xbf16>, vector<16x384xf32> -> vector<16x384xf32>
      %44 = arith.index_cast %arg13 : i32 to index
      %c0_48 = arith.constant 0 : index
      %c0_49 = arith.constant 0 : index
      %45 = vector.load %arg9[%44, %c0_48, %c0_49] : memref<8x16x384xf32, #tpu.memory_space<vmem>>, vector<1x16x384xf32>
      %46 = vector.shape_cast %45 : vector<1x16x384xf32> to vector<16x384xf32>
      %47 = arith.index_cast %39 : i32 to index
      %c0_50 = arith.constant 0 : index
      %c0_51 = arith.constant 0 : index
      %48 = vector.load %arg10[%47, %c0_50, %c0_51] : memref<8x16x384xf32, #tpu.memory_space<vmem>>, vector<1x16x384xf32>
      %49 = vector.shape_cast %48 : vector<1x16x384xf32> to vector<16x384xf32>
      %50 = vector.extract_strided_slice %46 {offsets = [0, 0], sizes = [16, 256], strides = [1, 1]} : vector<16x384xf32> to vector<16x256xf32>
      %51 = vector.extract_strided_slice %41 {offsets = [0, 0], sizes = [16, 256], strides = [1, 1]} : vector<16x384xf32> to vector<16x256xf32>
      %52 = arith.addf %50, %51 : vector<16x256xf32>
      %53 = arith.negf %52 : vector<16x256xf32>
      %54 = math.exp %53 : vector<16x256xf32>
      %cst_52 = arith.constant 1.000000e+00 : f32
      %55 = vector.broadcast %cst_52 : f32 to vector<16x256xf32>
      %56 = arith.addf %55, %54 : vector<16x256xf32>
      %57 = arith.divf %55, %56 : vector<16x256xf32>
      %58 = vector.extract_strided_slice %57 {offsets = [0, 0], sizes = [16, 128], strides = [1, 1]} : vector<16x256xf32> to vector<16x128xf32>
      %59 = vector.extract_strided_slice %57 {offsets = [0, 128], sizes = [16, 128], strides = [1, 1]} : vector<16x256xf32> to vector<16x128xf32>
      %60 = vector.extract_strided_slice %46 {offsets = [0, 256], sizes = [16, 128], strides = [1, 1]} : vector<16x384xf32> to vector<16x128xf32>
      %61 = vector.extract_strided_slice %41 {offsets = [0, 256], sizes = [16, 128], strides = [1, 1]} : vector<16x384xf32> to vector<16x128xf32>
      %62 = vector.broadcast %30 : vector<1x128xf32> to vector<16x128xf32>
      %63 = arith.addf %61, %62 : vector<16x128xf32>
      %64 = arith.mulf %58, %63 : vector<16x128xf32>
      %65 = arith.addf %60, %64 : vector<16x128xf32>
      %66 = math.tanh %65 : vector<16x128xf32>
      %cst_53 = arith.constant 1.000000e+00 : f32
      %67 = vector.broadcast %cst_53 : f32 to vector<16x128xf32>
      %68 = arith.subf %67, %59 : vector<16x128xf32>
      %69 = arith.mulf %68, %66 : vector<16x128xf32>
      %70 = arith.mulf %59, %arg14 : vector<16x128xf32>
      %71 = arith.addf %69, %70 : vector<16x128xf32>
      %72 = arith.truncf %71 : vector<16x128xf32> to vector<16x128xbf16>
      %73 = arith.index_cast %arg13 : i32 to index
      %c0_54 = arith.constant 0 : index
      %c0_55 = arith.constant 0 : index
      %74 = vector.load %arg7[%73, %c0_54, %c0_55] : memref<8x16x128xbf16, #tpu.memory_space<vmem>>, vector<1x16x128xbf16>
      %75 = vector.shape_cast %74 : vector<1x16x128xbf16> to vector<16x128xbf16>
      %76 = vector.shape_cast %72 : vector<16x128xbf16> to vector<1x16x128xbf16>
      tpu.vector_store %arg7[%73, %c0_54, %c0_55], %76 {strides = array<i32>} : memref<8x16x128xbf16, #tpu.memory_space<vmem>>, vector<1x16x128xbf16>,
      %77 = vector.extract_strided_slice %49 {offsets = [0, 0], sizes = [16, 256], strides = [1, 1]} : vector<16x384xf32> to vector<16x256xf32>
      %78 = vector.extract_strided_slice %43 {offsets = [0, 0], sizes = [16, 256], strides = [1, 1]} : vector<16x384xf32> to vector<16x256xf32>
      %79 = arith.addf %77, %78 : vector<16x256xf32>
      %80 = arith.negf %79 : vector<16x256xf32>
      %81 = math.exp %80 : vector<16x256xf32>
      %cst_56 = arith.constant 1.000000e+00 : f32
      %82 = vector.broadcast %cst_56 : f32 to vector<16x256xf32>
      %83 = arith.addf %82, %81 : vector<16x256xf32>
      %84 = arith.divf %82, %83 : vector<16x256xf32>
      %85 = vector.extract_strided_slice %84 {offsets = [0, 0], sizes = [16, 128], strides = [1, 1]} : vector<16x256xf32> to vector<16x128xf32>
      %86 = vector.extract_strided_slice %84 {offsets = [0, 128], sizes = [16, 128], strides = [1, 1]} : vector<16x256xf32> to vector<16x128xf32>
      %87 = vector.extract_strided_slice %49 {offsets = [0, 256], sizes = [16, 128], strides = [1, 1]} : vector<16x384xf32> to vector<16x128xf32>
      %88 = vector.extract_strided_slice %43 {offsets = [0, 256], sizes = [16, 128], strides = [1, 1]} : vector<16x384xf32> to vector<16x128xf32>
      %89 = vector.broadcast %32 : vector<1x128xf32> to vector<16x128xf32>
      %90 = arith.addf %88, %89 : vector<16x128xf32>
      %91 = arith.mulf %85, %90 : vector<16x128xf32>
      %92 = arith.addf %87, %91 : vector<16x128xf32>
      %93 = math.tanh %92 : vector<16x128xf32>
      %cst_57 = arith.constant 1.000000e+00 : f32
      %94 = vector.broadcast %cst_57 : f32 to vector<16x128xf32>
      %95 = arith.subf %94, %86 : vector<16x128xf32>
      %96 = arith.mulf %95, %93 : vector<16x128xf32>
      %97 = arith.mulf %86, %arg15 : vector<16x128xf32>
      %98 = arith.addf %96, %97 : vector<16x128xf32>
      %99 = arith.truncf %98 : vector<16x128xf32> to vector<16x128xbf16>
      %100 = arith.index_cast %39 : i32 to index
      %c0_58 = arith.constant 0 : index
      %c0_59 = arith.constant 0 : index
      %101 = vector.load %arg8[%100, %c0_58, %c0_59] : memref<8x16x128xbf16, #tpu.memory_space<vmem>>, vector<1x16x128xbf16>
      %102 = vector.shape_cast %101 : vector<1x16x128xbf16> to vector<16x128xbf16>
      %103 = vector.shape_cast %99 : vector<16x128xbf16> to vector<1x16x128xbf16>
      tpu.vector_store %arg8[%100, %c0_58, %c0_59], %103 {strides = array<i32>} : memref<8x16x128xbf16, #tpu.memory_space<vmem>>, vector<1x16x128xbf16>,
      scf.yield %71, %98 : vector<16x128xf32>, vector<16x128xf32>
    }
    %c8_i32_41 = arith.constant 8 : i32
    %c0_42 = arith.constant 0 : index
    %c0_43 = arith.constant 0 : index
    %37 = vector.load %arg11[%c0_42, %c0_43] : memref<16x128xf32, #tpu.memory_space<vmem>>, vector<16x128xf32>
    tpu.vector_store %arg11[%c0_42, %c0_43], %36#0 {strides = array<i32>} : memref<16x128xf32, #tpu.memory_space<vmem>>, vector<16x128xf32>,
    %c0_44 = arith.constant 0 : index
    %c0_45 = arith.constant 0 : index
    %38 = vector.load %arg12[%c0_44, %c0_45] : memref<16x128xf32, #tpu.memory_space<vmem>>, vector<16x128xf32>
    tpu.vector_store %arg12[%c0_44, %c0_45], %36#1 {strides = array<i32>} : memref<16x128xf32, #tpu.memory_space<vmem>>, vector<16x128xf32>,
    return
  }
  func.func @transform_0(%arg0: i32) -> (i32, i32, i32) {
    %c0_i32 = arith.constant 0 : i32
    %c0_i32_0 = arith.constant 0 : i32
    %c0_i32_1 = arith.constant 0 : i32
    return %arg0, %c0_i32, %c0_i32_0 : i32, i32, i32
  }
  func.func @transform_1(%arg0: i32) -> (i32, i32, i32) {
    %c0_i32 = arith.constant 0 : i32
    %0 = arith.subi %c0_i32, %arg0 : i32
    %c0_i32_0 = arith.constant 0 : i32
    %c0_i32_1 = arith.constant 0 : i32
    %c0_i32_2 = arith.constant 0 : i32
    return %0, %c0_i32_0, %c0_i32_1 : i32, i32, i32
  }
  func.func @transform_2(%arg0: i32) -> (i32, i32, i32) {
    %c0_i32 = arith.constant 0 : i32
    %c0_i32_0 = arith.constant 0 : i32
    %c0_i32_1 = arith.constant 0 : i32
    %c0_i32_2 = arith.constant 0 : i32
    return %c0_i32, %c0_i32_0, %c0_i32_1 : i32, i32, i32
  }
  func.func @transform_3(%arg0: i32) -> (i32, i32, i32) {
    %c0_i32 = arith.constant 0 : i32
    %c0_i32_0 = arith.constant 0 : i32
    %c0_i32_1 = arith.constant 0 : i32
    %c0_i32_2 = arith.constant 0 : i32
    return %c0_i32, %c0_i32_0, %c0_i32_1 : i32, i32, i32
  }
  func.func @transform_4(%arg0: i32) -> (i32, i32, i32) {
    %c0_i32 = arith.constant 0 : i32
    %c0_i32_0 = arith.constant 0 : i32
    %c0_i32_1 = arith.constant 0 : i32
    %c0_i32_2 = arith.constant 0 : i32
    return %c0_i32, %c0_i32_0, %c0_i32_1 : i32, i32, i32
  }
  func.func @transform_5(%arg0: i32) -> (i32, i32, i32) {
    %c0_i32 = arith.constant 0 : i32
    %c0_i32_0 = arith.constant 0 : i32
    %c0_i32_1 = arith.constant 0 : i32
    %c0_i32_2 = arith.constant 0 : i32
    return %c0_i32, %c0_i32_0, %c0_i32_1 : i32, i32, i32
  }
  func.func @transform_6(%arg0: i32) -> (i32, i32, i32) {
    %c0_i32 = arith.constant 0 : i32
    %c0_i32_0 = arith.constant 0 : i32
    %c0_i32_1 = arith.constant 0 : i32
    return %arg0, %c0_i32, %c0_i32_0 : i32, i32, i32
  }
  func.func @transform_7(%arg0: i32) -> (i32, i32, i32) {
    %c0_i32 = arith.constant 0 : i32
    %0 = arith.subi %c0_i32, %arg0 : i32
    %c0_i32_0 = arith.constant 0 : i32
    %c0_i32_1 = arith.constant 0 : i32
    %c0_i32_2 = arith.constant 0 : i32
    return %0, %c0_i32_0, %c0_i32_1 : i32, i32, i32
  }
}

</mosaic_0001>

<llo_original>
// kernel: bert_gru_sentiment_forward.2
$region0: #{bert_gru_sentiment_forward.2}
  #allocation0 [shape = 'u32[]', space=smem, size = 0x4, offset = 0x4, fixed_abs, tag = 'smem constant byte address 0x4 - core index']
  #allocation1 [shape = 'u32[144,128]{1,0:T(1,128)}', space=vmem, size = 0x12000, scoped, tag = 'internal scratch']
  #allocation2 [shape = 'f32[8,16,384]{2,1,0:T(8,128)}', space=vmem, size = 0x30000, scoped, tag = 'scratch operand']
  #allocation3 [shape = 'f32[8,16,384]{2,1,0:T(8,128)}', space=vmem, size = 0x30000, scoped, tag = 'scratch operand']
  #allocation4 [shape = 'f32[16,128]{1,0:T(8,128)}', space=vmem, size = 0x2000, scoped, tag = 'scratch operand']
  #allocation5 [shape = 'f32[16,128]{1,0:T(8,128)}', space=vmem, size = 0x2000, scoped, tag = 'scratch operand']
  %s0 = inlined_call_operand.vmem [shape: bf16[8,16,64], index: 0, kind: input, shape index: {}, may-alias: {0,1}]
  %s1 = inlined_call_operand.vmem [shape: bf16[8,16,64], index: 1, kind: input, shape index: {}, may-alias: {0,1}]
  %s2 = inlined_call_operand.hbm [shape: bf16[2,64,384], index: 2, kind: input, shape index: {}]
  %s3 = inlined_call_operand.hbm [shape: bf16[2,128,384], index: 3, kind: input, shape index: {}]
  %s4 = inlined_call_operand.hbm [shape: f32[2,1,384], index: 4, kind: input, shape index: {}]
  %s5 = inlined_call_operand.hbm [shape: f32[2,1,128], index: 5, kind: input, shape index: {}]
  %s6 = inlined_call_operand.vmem [shape: bf16[8,16,128], index: 6, kind: output, shape index: {0}]
  %s7 = inlined_call_operand.vmem [shape: bf16[8,16,128], index: 7, kind: output, shape index: {1}]
  %8 = xla_tuple %s6, %s7
  %s9 = sld [smem:[#allocation0]]
  $region69: #{bert_gru_sentiment_forward.2} parent=0
    _
  %s11 = ssub.s32 1, %s9
  %s12 = scalar_select 0, %s11, %s9
  $region1: #{bert_gru_sentiment_forward.2} parent=0
    #allocation6 [shape = 'u8[98304]{0}', space=vmem, size = 0x18000, scoped, tag = 'input window, operand 2, single buffered']
    #allocation7 [shape = 's32[1]{0}', space=sflag, size = 0x4, scoped, tag = 'scoped memory for bert_gru_sentiment_forward.2']
    #allocation8 [shape = 'u8[196608]{0}', space=vmem, size = 0x30000, scoped, tag = 'input window, operand 3, single buffered']
    #allocation9 [shape = 's32[1]{0}', space=sflag, size = 0x4, scoped, tag = 'scoped memory for bert_gru_sentiment_forward.2']
    #allocation10 [shape = 'u8[3072]{0}', space=vmem, size = 0xc00, scoped, tag = 'input window, operand 4, single buffered']
    #allocation11 [shape = 'u8[1024]{0}', space=vmem, size = 0x400, scoped, tag = 'input window, operand 5, single buffered']
    #allocation12 [shape = 's32[1]{0}', space=sflag, size = 0x4, scoped, tag = 'scoped memory for bert_gru_sentiment_forward.2']
    %13 = vsyncpa [#allocation7], 0
    %14 = vsyncpa [#allocation9], 0
    %15 = vsyncpa [#allocation12], 0
    // Predicated region
    $region2: #{bert_gru_sentiment_forward.2} parent=1 // pred_check
      _
    $region3: #{bert_gru_sentiment_forward.2} parent=1 // pred_check_branch
      %17 = sbr.rel (0) target = $region5
    $region4: #{bert_gru_sentiment_forward.2} parent=1 // pred_region
      _
    $region5: #{bert_gru_sentiment_forward.2} parent=1 // pred_fallthru
      _
    // Predicated region
    $region6: #{bert_gru_sentiment_forward.2} parent=1 // pred_check
      _
    $region7: #{bert_gru_sentiment_forward.2} parent=1 // pred_check_branch
      %19 = sbr.rel (0) target = $region9
    $region8: #{bert_gru_sentiment_forward.2} parent=1 // pred_region
      %s20 = ssub.s32 0, 0
      %s21 = smul.u32 8, %s20
      %p22 = scmp.lt.s32.totalorder %s21, 7
      %s23 = scalar_select %p22, %s21, 7
      %s24 = smul.addr %s23, 2
      %s25 = smul.addr %s24, 4
      %s26 = scalar_lea.vmem %s1, %s25
      %s27 = ssub.s32 0, 0
      %s28 = smul.u32 8, %s27
    $region9: #{bert_gru_sentiment_forward.2} parent=1 // pred_fallthru
      _
    // Predicated region
    $region10: #{bert_gru_sentiment_forward.2} parent=1 // pred_check
      _
    $region11: #{bert_gru_sentiment_forward.2} parent=1 // pred_check_branch
      %30 = sbr.rel (0) target = $region13
    $region12: #{bert_gru_sentiment_forward.2} parent=1 // pred_region
      %s32 = ssub.s32 3072, 3072
      %33 = vsyncadd [#allocation7], %s32
      %s34 = sshll.u32 [#allocation6], 4
      %s35 = int_to_ptr.vmem [resolvable:$true] %s34
      %40 = dma.hbm_to_vmem [thread:$0]  %s2, 3072, %s35, [#allocation7], 192, 192, 12
    $region13: #{bert_gru_sentiment_forward.2} parent=1 // pred_fallthru
      _
    // Predicated region
    $region14: #{bert_gru_sentiment_forward.2} parent=1 // pred_check
      _
    $region15: #{bert_gru_sentiment_forward.2} parent=1 // pred_check_branch
      %42 = sbr.rel (0) target = $region17
    $region16: #{bert_gru_sentiment_forward.2} parent=1 // pred_region
      %s44 = ssub.s32 6144, 6144
      %45 = vsyncadd [#allocation9], %s44
      %s46 = sshll.u32 [#allocation8], 4
      %s47 = int_to_ptr.vmem [resolvable:$true] %s46
      %52 = dma.hbm_to_vmem [thread:$0]  %s3, 6144, %s47, [#allocation9], 192, 192, 12
    $region17: #{bert_gru_sentiment_forward.2} parent=1 // pred_fallthru
      _
    // Predicated region
    $region18: #{bert_gru_sentiment_forward.2} parent=1 // pred_check
      _
    $region19: #{bert_gru_sentiment_forward.2} parent=1 // pred_check_branch
      %54 = sbr.rel (0) target = $region21
    $region20: #{bert_gru_sentiment_forward.2} parent=1 // pred_region
      %s56 = ssub.s32 96, 96
      %57 = vsyncadd [#allocation9], %s56
      %s58 = sshll.u32 [#allocation10], 4
      %s59 = int_to_ptr.vmem [resolvable:$true] %s58
      %64 = dma.hbm_to_vmem [thread:$0]  %s4, 96, %s59, [#allocation9], 48, 48, 3
    $region21: #{bert_gru_sentiment_forward.2} parent=1 // pred_fallthru
      _
    // Predicated region
    $region22: #{bert_gru_sentiment_forward.2} parent=1 // pred_check
      _
    $region23: #{bert_gru_sentiment_forward.2} parent=1 // pred_check_branch
      %66 = sbr.rel (0) target = $region25
    $region24: #{bert_gru_sentiment_forward.2} parent=1 // pred_region
      %s68 = ssub.s32 32, 32
      %69 = vsyncadd [#allocation12], %s68
      %s70 = sshll.u32 [#allocation11], 4
      %s71 = int_to_ptr.vmem [resolvable:$true] %s70
      %76 = dma.hbm_to_vmem [thread:$0]  %s5, 32, %s71, [#allocation12], 16, 16, 1
    $region25: #{bert_gru_sentiment_forward.2} parent=1 // pred_fallthru
      _
    // Predicated region
    $region26: #{bert_gru_sentiment_forward.2} parent=1 // pred_check
      _
    $region27: #{bert_gru_sentiment_forward.2} parent=1 // pred_check_branch
      %78 = sbr.rel (0) target = $region29
    $region28: #{bert_gru_sentiment_forward.2} parent=1 // pred_region
      %79 = dma.done [#allocation7], 3072
    $region29: #{bert_gru_sentiment_forward.2} parent=1 // pred_fallthru
      _
    // Predicated region
    $region30: #{bert_gru_sentiment_forward.2} parent=1 // pred_check
      _
    $region31: #{bert_gru_sentiment_forward.2} parent=1 // pred_check_branch
      %81 = sbr.rel (0) target = $region33
    $region32: #{bert_gru_sentiment_forward.2} parent=1 // pred_region
      %82 = dma.done [#allocation9], 6144
    $region33: #{bert_gru_sentiment_forward.2} parent=1 // pred_fallthru
      _
    // Predicated region
    $region34: #{bert_gru_sentiment_forward.2} parent=1 // pred_check
      _
    $region35: #{bert_gru_sentiment_forward.2} parent=1 // pred_check_branch
      %84 = sbr.rel (0) target = $region37
    $region36: #{bert_gru_sentiment_forward.2} parent=1 // pred_region
      %85 = dma.done [#allocation9], 96
    $region37: #{bert_gru_sentiment_forward.2} parent=1 // pred_fallthru
      _
    // Predicated region
    $region38: #{bert_gru_sentiment_forward.2} parent=1 // pred_check
      _
    $region39: #{bert_gru_sentiment_forward.2} parent=1 // pred_check_branch
      %87 = sbr.rel (0) target = $region41
    $region40: #{bert_gru_sentiment_forward.2} parent=1 // pred_region
      %88 = dma.done [#allocation12], 32
    $region41: #{bert_gru_sentiment_forward.2} parent=1 // pred_fallthru
      _
    %s89 = ssub.s32 0, 0
    %s90 = smul.u32 8, %s89
    %p91 = scmp.lt.s32.totalorder %s90, 7
    %s92 = scalar_select %p91, %s90, 7
    %s93 = smul.addr %s92, 2
    %s94 = smul.addr %s93, 4
    %s95 = scalar_lea.vmem %s1, %s94
    %s96 = ssub.s32 0, 0
    %s97 = smul.u32 8, %s96
    %p98 = scmp.lt.s32.totalorder %s97, 7
    %s99 = scalar_select %p98, %s97, 7
    %s100 = smul.addr %s99, 2
    %s101 = smul.addr %s100, 4
    %s102 = scalar_lea.vmem %s7, %s101
    %s103 = ssub.s32 0, 0
    %s104 = smul.u32 8, %s103
    %p105 = scmp.lt.s32.totalorder %s104, 7
    %s106 = scalar_select %p105, %s104, 7
    %s107 = smul.addr %s106, 2
    %s108 = smul.addr %s107, 4
    %s109 = scalar_lea.vmem %s1, %s108
    %s110 = ssub.s32 0, 0
    %s111 = smul.u32 8, %s110
    %s112 = ssub.s32 0, 0
    %s113 = smul.u32 8, %s112
    %p114 = scmp.lt.s32.totalorder %s113, 7
    %s115 = scalar_select %p114, %s113, 7
    %s116 = smul.addr %s115, 2
    %s117 = smul.addr %s116, 4
    %s118 = scalar_lea.vmem %s7, %s117
    %s119 = ssub.s32 0, 0
    %s120 = smul.u32 8, %s119
    %p122 = scmp.eq.s32.totalorder 0, 0
    // Predicated region
    $region42: #{bert_gru_sentiment_forward.2} parent=1 // pred_check
      %p123 = pneg %p122
    $region43: #{bert_gru_sentiment_forward.2} parent=1 // pred_check_branch
      %125 = sbr.rel (%p123) target = $region45
    $region44: #{bert_gru_sentiment_forward.2} parent=1 // pred_region
      %126 = vst [vmem:[#allocation4] sm:$0xff] 0.0
      %127 = vst [vmem:[#allocation4 + $0x8] sm:$0xff] 0.0
      %128 = vst [vmem:[#allocation5] sm:$0xff] 0.0
      %129 = vst [vmem:[#allocation5 + $0x8] sm:$0xff] 0.0
    $region45: #{bert_gru_sentiment_forward.2} parent=1 // pred_fallthru
      _
    %v130 = vld [vmem:[#allocation6] sm:$0xff]
    %v131 = vld [vmem:[#allocation6 + $0x8] sm:$0xf]
    %v132 = vld [vmem:[#allocation6 + $0xc] sm:$0xff]
    %v133 = vld [vmem:[#allocation6 + $0x14] sm:$0xf]
    %v134 = vld [vmem:[#allocation6 + $0x18] sm:$0xff]
    %v135 = vld [vmem:[#allocation6 + $0x20] sm:$0xf]
    %v136 = vld [vmem:[#allocation6 + $0x24] sm:$0xff]
    %v137 = vld [vmem:[#allocation6 + $0x2c] sm:$0xf]
    %v138 = vld [vmem:[#allocation6 + $0x30] sm:$0xff]
    %v139 = vld [vmem:[#allocation6 + $0x38] sm:$0xf]
    %v140 = vld [vmem:[#allocation6 + $0x3c] sm:$0xff]
    %v141 = vld [vmem:[#allocation6 + $0x44] sm:$0xf]
    %v142 = vld [vmem:[#allocation6 + $0x48] sm:$0xff]
    %v143 = vld [vmem:[#allocation6 + $0x50] sm:$0xf]
    %v144 = vld [vmem:[#allocation6 + $0x54] sm:$0xff]
    %v145 = vld [vmem:[#allocation6 + $0x5c] sm:$0xf]
    %v146 = vld [vmem:[%s0] sm:$0xf]
    %v147 = vld [vmem:[%s0 + $0x4] sm:$0xf]
    %v148 = vld [vmem:[%s0 + $0x8] sm:$0xf]
    %v149 = vld [vmem:[%s0 + $0xc] sm:$0xf]
    %v150 = vld [vmem:[%s0 + $0x10] sm:$0xf]
    %v151 = vld [vmem:[%s0 + $0x14] sm:$0xf]
    %v152 = vld [vmem:[%s0 + $0x18] sm:$0xf]
    %v153 = vld [vmem:[%s0 + $0x1c] sm:$0xf]
    %v154 = vld [vmem:[%s0 + $0x20] sm:$0xf]
    %v155 = vld [vmem:[%s0 + $0x24] sm:$0xf]
    %v156 = vld [vmem:[%s0 + $0x28] sm:$0xf]
    %v157 = vld [vmem:[%s0 + $0x2c] sm:$0xf]
    %v158 = vld [vmem:[%s0 + $0x30] sm:$0xf]
    %v159 = vld [vmem:[%s0 + $0x34] sm:$0xf]
    %v160 = vld [vmem:[%s0 + $0x38] sm:$0xf]
    %v161 = vld [vmem:[%s0 + $0x3c] sm:$0xf]
    %v162 = vld [vmem:[#allocation10] sm:$0x7]
    %v164 = vlaneseq
    %v165 = vshrl.u32 %v164, 7
    %v166 = vsub.s32 0, %v165
    %v167 = vrot.slane %v162, %v166
    %v168 = vlaneseq
    %v169 = vshrl.u32 %v168, 7
    %v170 = vsub.s32 1, %v169
    %v171 = vrot.slane %v162, %v170
    %v172 = vlaneseq
    %v173 = vshrl.u32 %v172, 7
    %v174 = vsub.s32 2, %v173
    %v175 = vrot.slane %v162, %v174
    %v195 = vunpack.c.l.b16 %v146
    %v196 = vunpack.c.l.b16 %v147
    %v197 = vunpack.c.l.b16 %v148
    %v198 = vunpack.c.l.b16 %v149
    %v199 = vunpack.c.l.b16 %v150
    %v200 = vunpack.c.l.b16 %v151
    %v201 = vunpack.c.l.b16 %v152
    %v202 = vunpack.c.l.b16 %v153
    %v203 = vunpack.c.l.b16 %v154
    %v204 = vunpack.c.l.b16 %v155
    %v205 = vunpack.c.l.b16 %v156
    %v206 = vunpack.c.l.b16 %v157
    %v207 = vunpack.c.l.b16 %v158
    %v208 = vunpack.c.l.b16 %v159
    %v209 = vunpack.c.l.b16 %v160
    %v210 = vunpack.c.l.b16 %v161
    %v211 = vpack.c.b16 %v196, %v195
    %v212 = vpack.c.b16 %v198, %v197
    %v213 = vpack.c.b16 %v200, %v199
    %v214 = vpack.c.b16 %v202, %v201
    %v215 = vpack.c.b16 %v204, %v203
    %v216 = vpack.c.b16 %v206, %v205
    %v217 = vpack.c.b16 %v208, %v207
    %v218 = vpack.c.b16 %v210, %v209
    %v235 = vunpack.c.l.b16 %v130
    %v236 = vunpack.c.h.b16 %v130
    %v237 = vunpack.c.l.b16 %v131
    %v238 = vunpack.c.l.b16 %v132
    %v239 = vunpack.c.h.b16 %v132
    %v240 = vunpack.c.l.b16 %v133
    %v241 = vunpack.c.l.b16 %v134
    %v242 = vunpack.c.h.b16 %v134
    %v243 = vunpack.c.l.b16 %v135
    %v244 = vunpack.c.l.b16 %v136
    %v245 = vunpack.c.h.b16 %v136
    %v246 = vunpack.c.l.b16 %v137
    %v247 = vunpack.c.l.b16 %v138
    %v248 = vunpack.c.h.b16 %v138
    %v249 = vunpack.c.l.b16 %v139
    %v250 = vunpack.c.l.b16 %v140
    %v251 = vunpack.c.h.b16 %v140
    %v252 = vunpack.c.l.b16 %v141
    %v253 = vunpack.c.l.b16 %v142
    %v254 = vunpack.c.h.b16 %v142
    %v255 = vunpack.c.l.b16 %v143
    %v256 = vunpack.c.l.b16 %v144
    %v257 = vunpack.c.h.b16 %v144
    %v258 = vunpack.c.l.b16 %v145
    %v259 = vpack.c.b16 %v238, %v235
    %v260 = vpack.c.b16 %v239, %v236
    %v261 = vpack.c.b16 %v240, %v237
    %v262 = vpack.c.b16 %v244, %v241
    %v263 = vpack.c.b16 %v245, %v242
    %v264 = vpack.c.b16 %v246, %v243
    %v265 = vpack.c.b16 %v250, %v247
    %v266 = vpack.c.b16 %v251, %v248
    %v267 = vpack.c.b16 %v252, %v249
    %v268 = vpack.c.b16 %v256, %v253
    %v269 = vpack.c.b16 %v257, %v254
    %v270 = vpack.c.b16 %v258, %v255
    %vm283 = vcmask 523264
    %v285 = vsel %vm283, %v211, 0
    %v288 = vsel %vm283, %v212, 0
    %v291 = vsel %vm283, %v213, 0
    %v294 = vsel %vm283, %v214, 0
    %v297 = vsel %vm283, %v215, 0
    %v300 = vsel %vm283, %v216, 0
    %v303 = vsel %vm283, %v217, 0
    %v306 = vsel %vm283, %v218, 0
    %308 = vmatprep.subr.bf16.mxu0 0
    %309 = vmatpush1.bf16.msra.mxu0 0
    %310 = vmatprep.subr.bf16.mxu0 0
    %311 = vmatpush1.bf16.msra.mxu0 0
    %312 = vmatprep.subr.bf16.mxu0 0
    %313 = vmatpush1.bf16.msra.mxu0 0
    %314 = vmatprep.subr.bf16.mxu0 0
    %315 = vmatpush1.bf16.msra.mxu0 0
    %316 = vmatprep.subr.bf16.mxu0 %v269
    %317 = vmatpush1.bf16.msra.mxu0 %v268
    %318 = vmatprep.subr.bf16.mxu0 %v266
    %319 = vmatpush1.bf16.msra.mxu0 %v265
    %320 = vmatprep.subr.bf16.mxu0 %v263
    %321 = vmatpush1.bf16.msra.mxu0 %v262
    %322 = vmatprep.subr.bf16.mxu0 %v260
    %323 = vmatpush1.bf16.msra.mxu0 %v259
    %324 = vmatprep.subr.bf16.mxu0 0
    %325 = vmatpush2.bf16.msra.mxu0 0
    %326 = vmatprep.subr.bf16.mxu0 0
    %327 = vmatpush2.bf16.msra.mxu0 0
    %328 = vmatprep.subr.bf16.mxu0 0
    %329 = vmatpush2.bf16.msra.mxu0 0
    %330 = vmatprep.subr.bf16.mxu0 0
    %331 = vmatpush2.bf16.msra.mxu0 0
    %332 = vmatprep.subr.bf16.mxu0 0
    %333 = vmatpush2.bf16.msra.mxu0 0
    %334 = vmatprep.subr.bf16.mxu0 0
    %335 = vmatpush2.bf16.msra.mxu0 0
    %336 = vmatprep.subr.bf16.mxu0 0
    %337 = vmatpush2.bf16.msra.mxu0 0
    %338 = vmatprep.subr.bf16.mxu0 0
    %339 = vmatpush2.bf16.msra.mxu0 0
    %340 = vmatprep.mubr.bf16.mxu0 0
    %341 = vmatmul.mubr.bf16.gmra.mxu0 %v285
    %v342 = vpop.f32.mrf.mxu0
    %v343 = vadd.f32 %v167, %v342
    %v344 = vpop.f32.mrf.mxu0
    %v345 = vadd.f32 %v171, %v344
    %v346 = vpop.f32.mrf.mxu0
    %v347 = vadd.f32 %v167, %v346
    %v348 = vpop.f32.mrf.mxu0
    %v349 = vadd.f32 %v171, %v348
    %350 = vmatprep.mubr.bf16.mxu0 0
    %351 = vmatmul.mubr.bf16.gmra.mxu0 %v288
    %v352 = vpop.f32.mrf.mxu0
    %v353 = vadd.f32 %v167, %v352
    %v354 = vpop.f32.mrf.mxu0
    %v355 = vadd.f32 %v171, %v354
    %v356 = vpop.f32.mrf.mxu0
    %v357 = vadd.f32 %v167, %v356
    %v358 = vpop.f32.mrf.mxu0
    %v359 = vadd.f32 %v171, %v358
    %360 = vmatprep.mubr.bf16.mxu0 0
    %361 = vmatmul.mubr.bf16.gmra.mxu0 %v291
    %v362 = vpop.f32.mrf.mxu0
    %v363 = vadd.f32 %v167, %v362
    %v364 = vpop.f32.mrf.mxu0
    %v365 = vadd.f32 %v171, %v364
    %v366 = vpop.f32.mrf.mxu0
    %v367 = vadd.f32 %v167, %v366
    %v368 = vpop.f32.mrf.mxu0
    %v369 = vadd.f32 %v171, %v368
    %370 = vmatprep.mubr.bf16.mxu0 0
    %371 = vmatmul.mubr.bf16.gmra.mxu0 %v294
    %v372 = vpop.f32.mrf.mxu0
    %v373 = vadd.f32 %v167, %v372
    %v374 = vpop.f32.mrf.mxu0
    %v375 = vadd.f32 %v171, %v374
    %v376 = vpop.f32.mrf.mxu0
    %v377 = vadd.f32 %v167, %v376
    %v378 = vpop.f32.mrf.mxu0
    %v379 = vadd.f32 %v171, %v378
    %380 = vmatprep.mubr.bf16.mxu0 0
    %381 = vmatmul.mubr.bf16.gmra.mxu0 %v297
    %v382 = vpop.f32.mrf.mxu0
    %v383 = vadd.f32 %v167, %v382
    %v384 = vpop.f32.mrf.mxu0
    %v385 = vadd.f32 %v171, %v384
    %v386 = vpop.f32.mrf.mxu0
    %v387 = vadd.f32 %v167, %v386
    %v388 = vpop.f32.mrf.mxu0
    %v389 = vadd.f32 %v171, %v388
    %390 = vmatprep.mubr.bf16.mxu0 0
    %391 = vmatmul.mubr.bf16.gmra.mxu0 %v300
    %v392 = vpop.f32.mrf.mxu0
    %v393 = vadd.f32 %v167, %v392
    %v394 = vpop.f32.mrf.mxu0
    %v395 = vadd.f32 %v171, %v394
    %v396 = vpop.f32.mrf.mxu0
    %v397 = vadd.f32 %v167, %v396
    %v398 = vpop.f32.mrf.mxu0
    %v399 = vadd.f32 %v171, %v398
    %400 = vmatprep.mubr.bf16.mxu0 0
    %401 = vmatmul.mubr.bf16.gmra.mxu0 %v303
    %v402 = vpop.f32.mrf.mxu0
    %v403 = vadd.f32 %v167, %v402
    %v404 = vpop.f32.mrf.mxu0
    %v405 = vadd.f32 %v171, %v404
    %v406 = vpop.f32.mrf.mxu0
    %v407 = vadd.f32 %v167, %v406
    %v408 = vpop.f32.mrf.mxu0
    %v409 = vadd.f32 %v171, %v408
    %410 = vmatprep.mubr.bf16.mxu0 0
    %411 = vmatmul.mubr.bf16.gmra.mxu0 %v306
    %v412 = vpop.f32.mrf.mxu0
    %v413 = vadd.f32 %v167, %v412
    %v414 = vpop.f32.mrf.mxu0
    %v415 = vadd.f32 %v171, %v414
    %v416 = vpop.f32.mrf.mxu0
    %v417 = vadd.f32 %v167, %v416
    %v418 = vpop.f32.mrf.mxu0
    %v419 = vadd.f32 %v171, %v418
    %420 = vdwg.mxu0
    %421 = vmatprep.subr.bf16.mxu0 0
    %422 = vmatpush1.bf16.msra.mxu0 0
    %423 = vmatprep.subr.bf16.mxu0 0
    %424 = vmatpush1.bf16.msra.mxu0 0
    %425 = vmatprep.subr.bf16.mxu0 0
    %426 = vmatpush1.bf16.msra.mxu0 0
    %427 = vmatprep.subr.bf16.mxu0 0
    %428 = vmatpush1.bf16.msra.mxu0 0
    %429 = vmatprep.subr.bf16.mxu0 0
    %430 = vmatpush1.bf16.msra.mxu0 %v270
    %431 = vmatprep.subr.bf16.mxu0 0
    %432 = vmatpush1.bf16.msra.mxu0 %v267
    %433 = vmatprep.subr.bf16.mxu0 0
    %434 = vmatpush1.bf16.msra.mxu0 %v264
    %435 = vmatprep.subr.bf16.mxu0 0
    %436 = vmatpush1.bf16.msra.mxu0 %v261
    %437 = vmatprep.subr.bf16.mxu0 0
    %438 = vmatpush2.bf16.msra.mxu0 0
    %439 = vmatprep.subr.bf16.mxu0 0
    %440 = vmatpush2.bf16.msra.mxu0 0
    %441 = vmatprep.subr.bf16.mxu0 0
    %442 = vmatpush2.bf16.msra.mxu0 0
    %443 = vmatprep.subr.bf16.mxu0 0
    %444 = vmatpush2.bf16.msra.mxu0 0
    %445 = vmatprep.subr.bf16.mxu0 0
    %446 = vmatpush2.bf16.msra.mxu0 0
    %447 = vmatprep.subr.bf16.mxu0 0
    %448 = vmatpush2.bf16.msra.mxu0 0
    %449 = vmatprep.subr.bf16.mxu0 0
    %450 = vmatpush2.bf16.msra.mxu0 0
    %451 = vmatprep.subr.bf16.mxu0 0
    %452 = vmatpush2.bf16.msra.mxu0 0
    %453 = vmatprep.mubr.bf16.mxu0 0
    %454 = vmatmul.mubr.bf16.gmra.mxu0 %v285
    %v455 = vpop.f32.mrf.mxu0
    %v456 = vadd.f32 %v175, %v455
    %v457 = vpop.f32.mrf.mxu0
    %v458 = vpop.f32.mrf.mxu0
    %v459 = vadd.f32 %v175, %v458
    %v460 = vpop.f32.mrf.mxu0
    %461 = vmatprep.mubr.bf16.mxu0 0
    %462 = vmatmul.mubr.bf16.gmra.mxu0 %v288
    %v463 = vpop.f32.mrf.mxu0
    %v464 = vadd.f32 %v175, %v463
    %v465 = vpop.f32.mrf.mxu0
    %v466 = vpop.f32.mrf.mxu0
    %v467 = vadd.f32 %v175, %v466
    %v468 = vpop.f32.mrf.mxu0
    %469 = vmatprep.mubr.bf16.mxu0 0
    %470 = vmatmul.mubr.bf16.gmra.mxu0 %v291
    %v471 = vpop.f32.mrf.mxu0
    %v472 = vadd.f32 %v175, %v471
    %v473 = vpop.f32.mrf.mxu0
    %v474 = vpop.f32.mrf.mxu0
    %v475 = vadd.f32 %v175, %v474
    %v476 = vpop.f32.mrf.mxu0
    %477 = vmatprep.mubr.bf16.mxu0 0
    %478 = vmatmul.mubr.bf16.gmra.mxu0 %v294
    %v479 = vpop.f32.mrf.mxu0
    %v480 = vadd.f32 %v175, %v479
    %v481 = vpop.f32.mrf.mxu0
    %v482 = vpop.f32.mrf.mxu0
    %v483 = vadd.f32 %v175, %v482
    %v484 = vpop.f32.mrf.mxu0
    %485 = vmatprep.mubr.bf16.mxu0 0
    %486 = vmatmul.mubr.bf16.gmra.mxu0 %v297
    %v487 = vpop.f32.mrf.mxu0
    %v488 = vadd.f32 %v175, %v487
    %v489 = vpop.f32.mrf.mxu0
    %v490 = vpop.f32.mrf.mxu0
    %v491 = vadd.f32 %v175, %v490
    %v492 = vpop.f32.mrf.mxu0
    %493 = vmatprep.mubr.bf16.mxu0 0
    %494 = vmatmul.mubr.bf16.gmra.mxu0 %v300
    %v495 = vpop.f32.mrf.mxu0
    %v496 = vadd.f32 %v175, %v495
    %v497 = vpop.f32.mrf.mxu0
    %v498 = vpop.f32.mrf.mxu0
    %v499 = vadd.f32 %v175, %v498
    %v500 = vpop.f32.mrf.mxu0
    %501 = vmatprep.mubr.bf16.mxu0 0
    %502 = vmatmul.mubr.bf16.gmra.mxu0 %v303
    %v503 = vpop.f32.mrf.mxu0
    %v504 = vadd.f32 %v175, %v503
    %v505 = vpop.f32.mrf.mxu0
    %v506 = vpop.f32.mrf.mxu0
    %v507 = vadd.f32 %v175, %v506
    %v508 = vpop.f32.mrf.mxu0
    %509 = vmatprep.mubr.bf16.mxu0 0
    %510 = vmatmul.mubr.bf16.gmra.mxu0 %v306
    %v511 = vpop.f32.mrf.mxu0
    %v512 = vadd.f32 %v175, %v511
    %v513 = vpop.f32.mrf.mxu0
    %v514 = vpop.f32.mrf.mxu0
    %v515 = vadd.f32 %v175, %v514
    %v516 = vpop.f32.mrf.mxu0
    %517 = vdwg.mxu0
    %518 = vst [vmem:[#allocation2] sm:$0xff] %v343
    %519 = vst [vmem:[#allocation2 + $0x8] sm:$0xff] %v345
    %520 = vst [vmem:[#allocation2 + $0x10] sm:$0xff] %v456
    %521 = vst [vmem:[#allocation2 + $0x18] sm:$0xff] %v347
    %522 = vst [vmem:[#allocation2 + $0x20] sm:$0xff] %v349
    %523 = vst [vmem:[#allocation2 + $0x28] sm:$0xff] %v459
    %524 = vst [vmem:[#allocation2 + $0x30] sm:$0xff] %v353
    %525 = vst [vmem:[#allocation2 + $0x38] sm:$0xff] %v355
    %526 = vst [vmem:[#allocation2 + $0x40] sm:$0xff] %v464
    %527 = vst [vmem:[#allocation2 + $0x48] sm:$0xff] %v357
    %528 = vst [vmem:[#allocation2 + $0x50] sm:$0xff] %v359
    %529 = vst [vmem:[#allocation2 + $0x58] sm:$0xff] %v467
    %530 = vst [vmem:[#allocation2 + $0x60] sm:$0xff] %v363
    %531 = vst [vmem:[#allocation2 + $0x68] sm:$0xff] %v365
    %532 = vst [vmem:[#allocation2 + $0x70] sm:$0xff] %v472
    %533 = vst [vmem:[#allocation2 + $0x78] sm:$0xff] %v367
    %534 = vst [vmem:[#allocation2 + $0x80] sm:$0xff] %v369
    %535 = vst [vmem:[#allocation2 + $0x88] sm:$0xff] %v475
    %536 = vst [vmem:[#allocation2 + $0x90] sm:$0xff] %v373
    %537 = vst [vmem:[#allocation2 + $0x98] sm:$0xff] %v375
    %538 = vst [vmem:[#allocation2 + $0xa0] sm:$0xff] %v480
    %539 = vst [vmem:[#allocation2 + $0xa8] sm:$0xff] %v377
    %540 = vst [vmem:[#allocation2 + $0xb0] sm:$0xff] %v379
    %541 = vst [vmem:[#allocation2 + $0xb8] sm:$0xff] %v483
    %542 = vst [vmem:[#allocation2 + $0xc0] sm:$0xff] %v383
    %543 = vst [vmem:[#allocation2 + $0xc8] sm:$0xff] %v385
    %544 = vst [vmem:[#allocation2 + $0xd0] sm:$0xff] %v488
    %545 = vst [vmem:[#allocation2 + $0xd8] sm:$0xff] %v387
    %546 = vst [vmem:[#allocation2 + $0xe0] sm:$0xff] %v389
    %547 = vst [vmem:[#allocation2 + $0xe8] sm:$0xff] %v491
    %548 = vst [vmem:[#allocation2 + $0xf0] sm:$0xff] %v393
    %549 = vst [vmem:[#allocation2 + $0xf8] sm:$0xff] %v395
    %550 = vst [vmem:[#allocation2 + $0x100] sm:$0xff] %v496
    %551 = vst [vmem:[#allocation2 + $0x108] sm:$0xff] %v397
    %552 = vst [vmem:[#allocation2 + $0x110] sm:$0xff] %v399
    %553 = vst [vmem:[#allocation2 + $0x118] sm:$0xff] %v499
    %554 = vst [vmem:[#allocation2 + $0x120] sm:$0xff] %v403
    %555 = vst [vmem:[#allocation2 + $0x128] sm:$0xff] %v405
    %556 = vst [vmem:[#allocation2 + $0x130] sm:$0xff] %v504
    %557 = vst [vmem:[#allocation2 + $0x138] sm:$0xff] %v407
    %558 = vst [vmem:[#allocation2 + $0x140] sm:$0xff] %v409
    %559 = vst [vmem:[#allocation2 + $0x148] sm:$0xff] %v507
    %560 = vst [vmem:[#allocation2 + $0x150] sm:$0xff] %v413
    %561 = vst [vmem:[#allocation2 + $0x158] sm:$0xff] %v415
    %562 = vst [vmem:[#allocation2 + $0x160] sm:$0xff] %v512
    %563 = vst [vmem:[#allocation2 + $0x168] sm:$0xff] %v417
    %564 = vst [vmem:[#allocation2 + $0x170] sm:$0xff] %v419
    %565 = vst [vmem:[#allocation2 + $0x178] sm:$0xff] %v515
    %s566 = scalar_lea.vmem [#allocation6], 96
    %v567 = vld [vmem:[%s566] sm:$0xff]
    %v568 = vld [vmem:[%s566 + $0x8] sm:$0xf]
    %v569 = vld [vmem:[%s566 + $0xc] sm:$0xff]
    %v570 = vld [vmem:[%s566 + $0x14] sm:$0xf]
    %v571 = vld [vmem:[%s566 + $0x18] sm:$0xff]
    %v572 = vld [vmem:[%s566 + $0x20] sm:$0xf]
    %v573 = vld [vmem:[%s566 + $0x24] sm:$0xff]
    %v574 = vld [vmem:[%s566 + $0x2c] sm:$0xf]
    %v575 = vld [vmem:[%s566 + $0x30] sm:$0xff]
    %v576 = vld [vmem:[%s566 + $0x38] sm:$0xf]
    %v577 = vld [vmem:[%s566 + $0x3c] sm:$0xff]
    %v578 = vld [vmem:[%s566 + $0x44] sm:$0xf]
    %v579 = vld [vmem:[%s566 + $0x48] sm:$0xff]
    %v580 = vld [vmem:[%s566 + $0x50] sm:$0xf]
    %v581 = vld [vmem:[%s566 + $0x54] sm:$0xff]
    %v582 = vld [vmem:[%s566 + $0x5c] sm:$0xf]
    %v583 = vld [vmem:[%s109] sm:$0xf]
    %v584 = vld [vmem:[%s109 + $0x4] sm:$0xf]
    %v585 = vld [vmem:[%s109 + $0x8] sm:$0xf]
    %v586 = vld [vmem:[%s109 + $0xc] sm:$0xf]
    %v587 = vld [vmem:[%s109 + $0x10] sm:$0xf]
    %v588 = vld [vmem:[%s109 + $0x14] sm:$0xf]
    %v589 = vld [vmem:[%s109 + $0x18] sm:$0xf]
    %v590 = vld [vmem:[%s109 + $0x1c] sm:$0xf]
    %v591 = vld [vmem:[%s109 + $0x20] sm:$0xf]
    %v592 = vld [vmem:[%s109 + $0x24] sm:$0xf]
    %v593 = vld [vmem:[%s109 + $0x28] sm:$0xf]
    %v594 = vld [vmem:[%s109 + $0x2c] sm:$0xf]
    %v595 = vld [vmem:[%s109 + $0x30] sm:$0xf]
    %v596 = vld [vmem:[%s109 + $0x34] sm:$0xf]
    %v597 = vld [vmem:[%s109 + $0x38] sm:$0xf]
    %v598 = vld [vmem:[%s109 + $0x3c] sm:$0xf]
    %s599 = scalar_lea.vmem [#allocation10], 3
    %v600 = vld [vmem:[%s599] sm:$0x7]
    %v602 = vlaneseq
    %v603 = vshrl.u32 %v602, 7
    %v604 = vsub.s32 0, %v603
    %v605 = vrot.slane %v600, %v604
    %v606 = vlaneseq
    %v607 = vshrl.u32 %v606, 7
    %v608 = vsub.s32 1, %v607
    %v609 = vrot.slane %v600, %v608
    %v610 = vlaneseq
    %v611 = vshrl.u32 %v610, 7
    %v612 = vsub.s32 2, %v611
    %v613 = vrot.slane %v600, %v612
    %v633 = vunpack.c.l.b16 %v583
    %v634 = vunpack.c.l.b16 %v584
    %v635 = vunpack.c.l.b16 %v585
    %v636 = vunpack.c.l.b16 %v586
    %v637 = vunpack.c.l.b16 %v587
    %v638 = vunpack.c.l.b16 %v588
    %v639 = vunpack.c.l.b16 %v589
    %v640 = vunpack.c.l.b16 %v590
    %v641 = vunpack.c.l.b16 %v591
    %v642 = vunpack.c.l.b16 %v592
    %v643 = vunpack.c.l.b16 %v593
    %v644 = vunpack.c.l.b16 %v594
    %v645 = vunpack.c.l.b16 %v595
    %v646 = vunpack.c.l.b16 %v596
    %v647 = vunpack.c.l.b16 %v597
    %v648 = vunpack.c.l.b16 %v598
    %v649 = vpack.c.b16 %v634, %v633
    %v650 = vpack.c.b16 %v636, %v635
    %v651 = vpack.c.b16 %v638, %v637
    %v652 = vpack.c.b16 %v640, %v639
    %v653 = vpack.c.b16 %v642, %v641
    %v654 = vpack.c.b16 %v644, %v643
    %v655 = vpack.c.b16 %v646, %v645
    %v656 = vpack.c.b16 %v648, %v647
    %v673 = vunpack.c.l.b16 %v567
    %v674 = vunpack.c.h.b16 %v567
    %v675 = vunpack.c.l.b16 %v568
    %v676 = vunpack.c.l.b16 %v569
    %v677 = vunpack.c.h.b16 %v569
    %v678 = vunpack.c.l.b16 %v570
    %v679 = vunpack.c.l.b16 %v571
    %v680 = vunpack.c.h.b16 %v571
    %v681 = vunpack.c.l.b16 %v572
    %v682 = vunpack.c.l.b16 %v573
    %v683 = vunpack.c.h.b16 %v573
    %v684 = vunpack.c.l.b16 %v574
    %v685 = vunpack.c.l.b16 %v575
    %v686 = vunpack.c.h.b16 %v575
    %v687 = vunpack.c.l.b16 %v576
    %v688 = vunpack.c.l.b16 %v577
    %v689 = vunpack.c.h.b16 %v577
    %v690 = vunpack.c.l.b16 %v578
    %v691 = vunpack.c.l.b16 %v579
    %v692 = vunpack.c.h.b16 %v579
    %v693 = vunpack.c.l.b16 %v580
    %v694 = vunpack.c.l.b16 %v581
    %v695 = vunpack.c.h.b16 %v581
    %v696 = vunpack.c.l.b16 %v582
    %v697 = vpack.c.b16 %v676, %v673
    %v698 = vpack.c.b16 %v677, %v674
    %v699 = vpack.c.b16 %v678, %v675
    %v700 = vpack.c.b16 %v682, %v679
    %v701 = vpack.c.b16 %v683, %v680
    %v702 = vpack.c.b16 %v684, %v681
    %v703 = vpack.c.b16 %v688, %v685
    %v704 = vpack.c.b16 %v689, %v686
    %v705 = vpack.c.b16 %v690, %v687
    %v706 = vpack.c.b16 %v694, %v691
    %v707 = vpack.c.b16 %v695, %v692
    %v708 = vpack.c.b16 %v696, %v693
    %v722 = vsel %vm283, %v649, 0
    %v725 = vsel %vm283, %v650, 0
    %v728 = vsel %vm283, %v651, 0
    %v731 = vsel %vm283, %v652, 0
    %v734 = vsel %vm283, %v653, 0
    %v737 = vsel %vm283, %v654, 0
    %v740 = vsel %vm283, %v655, 0
    %v743 = vsel %vm283, %v656, 0
    %745 = vmatprep.subr.bf16.mxu0 0
    %746 = vmatpush1.bf16.msra.mxu0 0
    %747 = vmatprep.subr.bf16.mxu0 0
    %748 = vmatpush1.bf16.msra.mxu0 0
    %749 = vmatprep.subr.bf16.mxu0 0
    %750 = vmatpush1.bf16.msra.mxu0 0
    %751 = vmatprep.subr.bf16.mxu0 0
    %752 = vmatpush1.bf16.msra.mxu0 0
    %753 = vmatprep.subr.bf16.mxu0 %v707
    %754 = vmatpush1.bf16.msra.mxu0 %v706
    %755 = vmatprep.subr.bf16.mxu0 %v704
    %756 = vmatpush1.bf16.msra.mxu0 %v703
    %757 = vmatprep.subr.bf16.mxu0 %v701
    %758 = vmatpush1.bf16.msra.mxu0 %v700
    %759 = vmatprep.subr.bf16.mxu0 %v698
    %760 = vmatpush1.bf16.msra.mxu0 %v697
    %761 = vmatprep.subr.bf16.mxu0 0
    %762 = vmatpush2.bf16.msra.mxu0 0
    %763 = vmatprep.subr.bf16.mxu0 0
    %764 = vmatpush2.bf16.msra.mxu0 0
    %765 = vmatprep.subr.bf16.mxu0 0
    %766 = vmatpush2.bf16.msra.mxu0 0
    %767 = vmatprep.subr.bf16.mxu0 0
    %768 = vmatpush2.bf16.msra.mxu0 0
    %769 = vmatprep.subr.bf16.mxu0 0
    %770 = vmatpush2.bf16.msra.mxu0 0
    %771 = vmatprep.subr.bf16.mxu0 0
    %772 = vmatpush2.bf16.msra.mxu0 0
    %773 = vmatprep.subr.bf16.mxu0 0
    %774 = vmatpush2.bf16.msra.mxu0 0
    %775 = vmatprep.subr.bf16.mxu0 0
    %776 = vmatpush2.bf16.msra.mxu0 0
    %777 = vmatprep.mubr.bf16.mxu0 0
    %778 = vmatmul.mubr.bf16.gmra.mxu0 %v722
    %v779 = vpop.f32.mrf.mxu0
    %v780 = vadd.f32 %v605, %v779
    %v781 = vpop.f32.mrf.mxu0
    %v782 = vadd.f32 %v609, %v781
    %v783 = vpop.f32.mrf.mxu0
    %v784 = vadd.f32 %v605, %v783
    %v785 = vpop.f32.mrf.mxu0
    %v786 = vadd.f32 %v609, %v785
    %787 = vmatprep.mubr.bf16.mxu0 0
    %788 = vmatmul.mubr.bf16.gmra.mxu0 %v725
    %v789 = vpop.f32.mrf.mxu0
    %v790 = vadd.f32 %v605, %v789
    %v791 = vpop.f32.mrf.mxu0
    %v792 = vadd.f32 %v609, %v791
    %v793 = vpop.f32.mrf.mxu0
    %v794 = vadd.f32 %v605, %v793
    %v795 = vpop.f32.mrf.mxu0
    %v796 = vadd.f32 %v609, %v795
    %797 = vmatprep.mubr.bf16.mxu0 0
    %798 = vmatmul.mubr.bf16.gmra.mxu0 %v728
    %v799 = vpop.f32.mrf.mxu0
    %v800 = vadd.f32 %v605, %v799
    %v801 = vpop.f32.mrf.mxu0
    %v802 = vadd.f32 %v609, %v801
    %v803 = vpop.f32.mrf.mxu0
    %v804 = vadd.f32 %v605, %v803
    %v805 = vpop.f32.mrf.mxu0
    %v806 = vadd.f32 %v609, %v805
    %807 = vmatprep.mubr.bf16.mxu0 0
    %808 = vmatmul.mubr.bf16.gmra.mxu0 %v731
    %v809 = vpop.f32.mrf.mxu0
    %v810 = vadd.f32 %v605, %v809
    %v811 = vpop.f32.mrf.mxu0
    %v812 = vadd.f32 %v609, %v811
    %v813 = vpop.f32.mrf.mxu0
    %v814 = vadd.f32 %v605, %v813
    %v815 = vpop.f32.mrf.mxu0
    %v816 = vadd.f32 %v609, %v815
    %817 = vmatprep.mubr.bf16.mxu0 0
    %818 = vmatmul.mubr.bf16.gmra.mxu0 %v734
    %v819 = vpop.f32.mrf.mxu0
    %v820 = vadd.f32 %v605, %v819
    %v821 = vpop.f32.mrf.mxu0
    %v822 = vadd.f32 %v609, %v821
    %v823 = vpop.f32.mrf.mxu0
    %v824 = vadd.f32 %v605, %v823
    %v825 = vpop.f32.mrf.mxu0
    %v826 = vadd.f32 %v609, %v825
    %827 = vmatprep.mubr.bf16.mxu0 0
    %828 = vmatmul.mubr.bf16.gmra.mxu0 %v737
    %v829 = vpop.f32.mrf.mxu0
    %v830 = vadd.f32 %v605, %v829
    %v831 = vpop.f32.mrf.mxu0
    %v832 = vadd.f32 %v609, %v831
    %v833 = vpop.f32.mrf.mxu0
    %v834 = vadd.f32 %v605, %v833
    %v835 = vpop.f32.mrf.mxu0
    %v836 = vadd.f32 %v609, %v835
    %837 = vmatprep.mubr.bf16.mxu0 0
    %838 = vmatmul.mubr.bf16.gmra.mxu0 %v740
    %v839 = vpop.f32.mrf.mxu0
    %v840 = vadd.f32 %v605, %v839
    %v841 = vpop.f32.mrf.mxu0
    %v842 = vadd.f32 %v609, %v841
    %v843 = vpop.f32.mrf.mxu0
    %v844 = vadd.f32 %v605, %v843
    %v845 = vpop.f32.mrf.mxu0
    %v846 = vadd.f32 %v609, %v845
    %847 = vmatprep.mubr.bf16.mxu0 0
    %848 = vmatmul.mubr.bf16.gmra.mxu0 %v743
    %v849 = vpop.f32.mrf.mxu0
    %v850 = vadd.f32 %v605, %v849
    %v851 = vpop.f32.mrf.mxu0
    %v852 = vadd.f32 %v609, %v851
    %v853 = vpop.f32.mrf.mxu0
    %v854 = vadd.f32 %v605, %v853
    %v855 = vpop.f32.mrf.mxu0
    %v856 = vadd.f32 %v609, %v855
    %857 = vdwg.mxu0
    %858 = vmatprep.subr.bf16.mxu0 0
    %859 = vmatpush1.bf16.msra.mxu0 0
    %860 = vmatprep.subr.bf16.mxu0 0
    %861 = vmatpush1.bf16.msra.mxu0 0
    %862 = vmatprep.subr.bf16.mxu0 0
    %863 = vmatpush1.bf16.msra.mxu0 0
    %864 = vmatprep.subr.bf16.mxu0 0
    %865 = vmatpush1.bf16.msra.mxu0 0
    %866 = vmatprep.subr.bf16.mxu0 0
    %867 = vmatpush1.bf16.msra.mxu0 %v708
    %868 = vmatprep.subr.bf16.mxu0 0
    %869 = vmatpush1.bf16.msra.mxu0 %v705
    %870 = vmatprep.subr.bf16.mxu0 0
    %871 = vmatpush1.bf16.msra.mxu0 %v702
    %872 = vmatprep.subr.bf16.mxu0 0
    %873 = vmatpush1.bf16.msra.mxu0 %v699
    %874 = vmatprep.subr.bf16.mxu0 0
    %875 = vmatpush2.bf16.msra.mxu0 0
    %876 = vmatprep.subr.bf16.mxu0 0
    %877 = vmatpush2.bf16.msra.mxu0 0
    %878 = vmatprep.subr.bf16.mxu0 0
    %879 = vmatpush2.bf16.msra.mxu0 0
    %880 = vmatprep.subr.bf16.mxu0 0
    %881 = vmatpush2.bf16.msra.mxu0 0
    %882 = vmatprep.subr.bf16.mxu0 0
    %883 = vmatpush2.bf16.msra.mxu0 0
    %884 = vmatprep.subr.bf16.mxu0 0
    %885 = vmatpush2.bf16.msra.mxu0 0
    %886 = vmatprep.subr.bf16.mxu0 0
    %887 = vmatpush2.bf16.msra.mxu0 0
    %888 = vmatprep.subr.bf16.mxu0 0
    %889 = vmatpush2.bf16.msra.mxu0 0
    %890 = vmatprep.mubr.bf16.mxu0 0
    %891 = vmatmul.mubr.bf16.gmra.mxu0 %v722
    %v892 = vpop.f32.mrf.mxu0
    %v893 = vadd.f32 %v613, %v892
    %v894 = vpop.f32.mrf.mxu0
    %v895 = vpop.f32.mrf.mxu0
    %v896 = vadd.f32 %v613, %v895
    %v897 = vpop.f32.mrf.mxu0
    %898 = vmatprep.mubr.bf16.mxu0 0
    %899 = vmatmul.mubr.bf16.gmra.mxu0 %v725
    %v900 = vpop.f32.mrf.mxu0
    %v901 = vadd.f32 %v613, %v900
    %v902 = vpop.f32.mrf.mxu0
    %v903 = vpop.f32.mrf.mxu0
    %v904 = vadd.f32 %v613, %v903
    %v905 = vpop.f32.mrf.mxu0
    %906 = vmatprep.mubr.bf16.mxu0 0
    %907 = vmatmul.mubr.bf16.gmra.mxu0 %v728
    %v908 = vpop.f32.mrf.mxu0
    %v909 = vadd.f32 %v613, %v908
    %v910 = vpop.f32.mrf.mxu0
    %v911 = vpop.f32.mrf.mxu0
    %v912 = vadd.f32 %v613, %v911
    %v913 = vpop.f32.mrf.mxu0
    %914 = vmatprep.mubr.bf16.mxu0 0
    %915 = vmatmul.mubr.bf16.gmra.mxu0 %v731
    %v916 = vpop.f32.mrf.mxu0
    %v917 = vadd.f32 %v613, %v916
    %v918 = vpop.f32.mrf.mxu0
    %v919 = vpop.f32.mrf.mxu0
    %v920 = vadd.f32 %v613, %v919
    %v921 = vpop.f32.mrf.mxu0
    %922 = vmatprep.mubr.bf16.mxu0 0
    %923 = vmatmul.mubr.bf16.gmra.mxu0 %v734
    %v924 = vpop.f32.mrf.mxu0
    %v925 = vadd.f32 %v613, %v924
    %v926 = vpop.f32.mrf.mxu0
    %v927 = vpop.f32.mrf.mxu0
    %v928 = vadd.f32 %v613, %v927
    %v929 = vpop.f32.mrf.mxu0
    %930 = vmatprep.mubr.bf16.mxu0 0
    %931 = vmatmul.mubr.bf16.gmra.mxu0 %v737
    %v932 = vpop.f32.mrf.mxu0
    %v933 = vadd.f32 %v613, %v932
    %v934 = vpop.f32.mrf.mxu0
    %v935 = vpop.f32.mrf.mxu0
    %v936 = vadd.f32 %v613, %v935
    %v937 = vpop.f32.mrf.mxu0
    %938 = vmatprep.mubr.bf16.mxu0 0
    %939 = vmatmul.mubr.bf16.gmra.mxu0 %v740
    %v940 = vpop.f32.mrf.mxu0
    %v941 = vadd.f32 %v613, %v940
    %v942 = vpop.f32.mrf.mxu0
    %v943 = vpop.f32.mrf.mxu0
    %v944 = vadd.f32 %v613, %v943
    %v945 = vpop.f32.mrf.mxu0
    %946 = vmatprep.mubr.bf16.mxu0 0
    %947 = vmatmul.mubr.bf16.gmra.mxu0 %v743
    %v948 = vpop.f32.mrf.mxu0
    %v949 = vadd.f32 %v613, %v948
    %v950 = vpop.f32.mrf.mxu0
    %v951 = vpop.f32.mrf.mxu0
    %v952 = vadd.f32 %v613, %v951
    %v953 = vpop.f32.mrf.mxu0
    %954 = vdwg.mxu0
    %955 = vst [vmem:[#allocation3] sm:$0xff] %v780
    %956 = vst [vmem:[#allocation3 + $0x8] sm:$0xff] %v782
    %957 = vst [vmem:[#allocation3 + $0x10] sm:$0xff] %v893
    %958 = vst [vmem:[#allocation3 + $0x18] sm:$0xff] %v784
    %959 = vst [vmem:[#allocation3 + $0x20] sm:$0xff] %v786
    %960 = vst [vmem:[#allocation3 + $0x28] sm:$0xff] %v896
    %961 = vst [vmem:[#allocation3 + $0x30] sm:$0xff] %v790
    %962 = vst [vmem:[#allocation3 + $0x38] sm:$0xff] %v792
    %963 = vst [vmem:[#allocation3 + $0x40] sm:$0xff] %v901
    %964 = vst [vmem:[#allocation3 + $0x48] sm:$0xff] %v794
    %965 = vst [vmem:[#allocation3 + $0x50] sm:$0xff] %v796
    %966 = vst [vmem:[#allocation3 + $0x58] sm:$0xff] %v904
    %967 = vst [vmem:[#allocation3 + $0x60] sm:$0xff] %v800
    %968 = vst [vmem:[#allocation3 + $0x68] sm:$0xff] %v802
    %969 = vst [vmem:[#allocation3 + $0x70] sm:$0xff] %v909
    %970 = vst [vmem:[#allocation3 + $0x78] sm:$0xff] %v804
    %971 = vst [vmem:[#allocation3 + $0x80] sm:$0xff] %v806
    %972 = vst [vmem:[#allocation3 + $0x88] sm:$0xff] %v912
    %973 = vst [vmem:[#allocation3 + $0x90] sm:$0xff] %v810
    %974 = vst [vmem:[#allocation3 + $0x98] sm:$0xff] %v812
    %975 = vst [vmem:[#allocation3 + $0xa0] sm:$0xff] %v917
    %976 = vst [vmem:[#allocation3 + $0xa8] sm:$0xff] %v814
    %977 = vst [vmem:[#allocation3 + $0xb0] sm:$0xff] %v816
    %978 = vst [vmem:[#allocation3 + $0xb8] sm:$0xff] %v920
    %979 = vst [vmem:[#allocation3 + $0xc0] sm:$0xff] %v820
    %980 = vst [vmem:[#allocation3 + $0xc8] sm:$0xff] %v822
    %981 = vst [vmem:[#allocation3 + $0xd0] sm:$0xff] %v925
    %982 = vst [vmem:[#allocation3 + $0xd8] sm:$0xff] %v824
    %983 = vst [vmem:[#allocation3 + $0xe0] sm:$0xff] %v826
    %984 = vst [vmem:[#allocation3 + $0xe8] sm:$0xff] %v928
    %985 = vst [vmem:[#allocation3 + $0xf0] sm:$0xff] %v830
    %986 = vst [vmem:[#allocation3 + $0xf8] sm:$0xff] %v832
    %987 = vst [vmem:[#allocation3 + $0x100] sm:$0xff] %v933
    %988 = vst [vmem:[#allocation3 + $0x108] sm:$0xff] %v834
    %989 = vst [vmem:[#allocation3 + $0x110] sm:$0xff] %v836
    %990 = vst [vmem:[#allocation3 + $0x118] sm:$0xff] %v936
    %991 = vst [vmem:[#allocation3 + $0x120] sm:$0xff] %v840
    %992 = vst [vmem:[#allocation3 + $0x128] sm:$0xff] %v842
    %993 = vst [vmem:[#allocation3 + $0x130] sm:$0xff] %v941
    %994 = vst [vmem:[#allocation3 + $0x138] sm:$0xff] %v844
    %995 = vst [vmem:[#allocation3 + $0x140] sm:$0xff] %v846
    %996 = vst [vmem:[#allocation3 + $0x148] sm:$0xff] %v944
    %997 = vst [vmem:[#allocation3 + $0x150] sm:$0xff] %v850
    %998 = vst [vmem:[#allocation3 + $0x158] sm:$0xff] %v852
    %999 = vst [vmem:[#allocation3 + $0x160] sm:$0xff] %v949
    %1000 = vst [vmem:[#allocation3 + $0x168] sm:$0xff] %v854
    %1001 = vst [vmem:[#allocation3 + $0x170] sm:$0xff] %v856
    %1002 = vst [vmem:[#allocation3 + $0x178] sm:$0xff] %v952
    %v1003 = vld [vmem:[#allocation8] sm:$0xff]
    %v1004 = vld [vmem:[#allocation8 + $0x8] sm:$0xf]
    %v1005 = vld [vmem:[#allocation8 + $0xc] sm:$0xff]
    %v1006 = vld [vmem:[#allocation8 + $0x14] sm:$0xf]
    %v1007 = vld [vmem:[#allocation8 + $0x18] sm:$0xff]
    %v1008 = vld [vmem:[#allocation8 + $0x20] sm:$0xf]
    %v1009 = vld [vmem:[#allocation8 + $0x24] sm:$0xff]
    %v1010 = vld [vmem:[#allocation8 + $0x2c] sm:$0xf]
    %v1011 = vld [vmem:[#allocation8 + $0x30] sm:$0xff]
    %v1012 = vld [vmem:[#allocation8 + $0x38] sm:$0xf]
    %v1013 = vld [vmem:[#allocation8 + $0x3c] sm:$0xff]
    %v1014 = vld [vmem:[#allocation8 + $0x44] sm:$0xf]
    %v1015 = vld [vmem:[#allocation8 + $0x48] sm:$0xff]
    %v1016 = vld [vmem:[#allocation8 + $0x50] sm:$0xf]
    %v1017 = vld [vmem:[#allocation8 + $0x54] sm:$0xff]
    %v1018 = vld [vmem:[#allocation8 + $0x5c] sm:$0xf]
    %v1019 = vld [vmem:[#allocation8 + $0x60] sm:$0xff]
    %v1020 = vld [vmem:[#allocation8 + $0x68] sm:$0xf]
    %v1021 = vld [vmem:[#allocation8 + $0x6c] sm:$0xff]
    %v1022 = vld [vmem:[#allocation8 + $0x74] sm:$0xf]
    %v1023 = vld [vmem:[#allocation8 + $0x78] sm:$0xff]
    %v1024 = vld [vmem:[#allocation8 + $0x80] sm:$0xf]
    %v1025 = vld [vmem:[#allocation8 + $0x84] sm:$0xff]
    %v1026 = vld [vmem:[#allocation8 + $0x8c] sm:$0xf]
    %v1027 = vld [vmem:[#allocation8 + $0x90] sm:$0xff]
    %v1028 = vld [vmem:[#allocation8 + $0x98] sm:$0xf]
    %v1029 = vld [vmem:[#allocation8 + $0x9c] sm:$0xff]
    %v1030 = vld [vmem:[#allocation8 + $0xa4] sm:$0xf]
    %v1031 = vld [vmem:[#allocation8 + $0xa8] sm:$0xff]
    %v1032 = vld [vmem:[#allocation8 + $0xb0] sm:$0xf]
    %v1033 = vld [vmem:[#allocation8 + $0xb4] sm:$0xff]
    %v1034 = vld [vmem:[#allocation8 + $0xbc] sm:$0xf]
    %s1035 = scalar_lea.vmem [#allocation8], 192
    %v1036 = vld [vmem:[%s1035] sm:$0xff]
    %v1037 = vld [vmem:[%s1035 + $0x8] sm:$0xf]
    %v1038 = vld [vmem:[%s1035 + $0xc] sm:$0xff]
    %v1039 = vld [vmem:[%s1035 + $0x14] sm:$0xf]
    %v1040 = vld [vmem:[%s1035 + $0x18] sm:$0xff]
    %v1041 = vld [vmem:[%s1035 + $0x20] sm:$0xf]
    %v1042 = vld [vmem:[%s1035 + $0x24] sm:$0xff]
    %v1043 = vld [vmem:[%s1035 + $0x2c] sm:$0xf]
    %v1044 = vld [vmem:[%s1035 + $0x30] sm:$0xff]
    %v1045 = vld [vmem:[%s1035 + $0x38] sm:$0xf]
    %v1046 = vld [vmem:[%s1035 + $0x3c] sm:$0xff]
    %v1047 = vld [vmem:[%s1035 + $0x44] sm:$0xf]
    %v1048 = vld [vmem:[%s1035 + $0x48] sm:$0xff]
    %v1049 = vld [vmem:[%s1035 + $0x50] sm:$0xf]
    %v1050 = vld [vmem:[%s1035 + $0x54] sm:$0xff]
    %v1051 = vld [vmem:[%s1035 + $0x5c] sm:$0xf]
    %v1052 = vld [vmem:[%s1035 + $0x60] sm:$0xff]
    %v1053 = vld [vmem:[%s1035 + $0x68] sm:$0xf]
    %v1054 = vld [vmem:[%s1035 + $0x6c] sm:$0xff]
    %v1055 = vld [vmem:[%s1035 + $0x74] sm:$0xf]
    %v1056 = vld [vmem:[%s1035 + $0x78] sm:$0xff]
    %v1057 = vld [vmem:[%s1035 + $0x80] sm:$0xf]
    %v1058 = vld [vmem:[%s1035 + $0x84] sm:$0xff]
    %v1059 = vld [vmem:[%s1035 + $0x8c] sm:$0xf]
    %v1060 = vld [vmem:[%s1035 + $0x90] sm:$0xff]
    %v1061 = vld [vmem:[%s1035 + $0x98] sm:$0xf]
    %v1062 = vld [vmem:[%s1035 + $0x9c] sm:$0xff]
    %v1063 = vld [vmem:[%s1035 + $0xa4] sm:$0xf]
    %v1064 = vld [vmem:[%s1035 + $0xa8] sm:$0xff]
    %v1065 = vld [vmem:[%s1035 + $0xb0] sm:$0xf]
    %v1066 = vld [vmem:[%s1035 + $0xb4] sm:$0xff]
    %v1067 = vld [vmem:[%s1035 + $0xbc] sm:$0xf]
    %v1068 = vld [vmem:[#allocation11] sm:$0x1]
    %s1069 = scalar_lea.vmem [#allocation11], 1
    %v1070 = vld [vmem:[%s1069] sm:$0x1]
    %v1071 = vld [vmem:[#allocation4] sm:$0xff]
    %v1072 = vld [vmem:[#allocation4 + $0x8] sm:$0xff]
    %v1073 = vld [vmem:[#allocation5] sm:$0xff]
    %v1074 = vld [vmem:[#allocation5 + $0x8] sm:$0xff]
    loop: start=0, step=1, limit=8
    $region46: #{bert_gru_sentiment_forward.2} parent=1 // loop_pre_header
      _
    $region47: #{bert_gru_sentiment_forward.2} parent=1 // loop_header
      %s1076 = sphi 0, %s1080
      %p1077 = scmp.ge.s32.totalorder %s1076, 8
      %v1081 = vphi %v1071, %v1578
      %v1082 = vphi %v1072, %v1579
      %v1083 = vphi %v1073, %v1641
      %v1084 = vphi %v1074, %v1642
    $region48: #{bert_gru_sentiment_forward.2} parent=1 // loop_header_branch
      %1079 = sbr.rel (%p1077) target = $region52
    $region49: #{bert_gru_sentiment_forward.2} parent=1 // loop_body
      %s1085 = ssub.s32 7, %s1076
      %v1086 = vpack.c.bf16 %v1082, %v1081
      %v1119 = vunpack.c.l.b16 %v1003
      %v1120 = vunpack.c.h.b16 %v1003
      %v1121 = vunpack.c.l.b16 %v1004
      %v1122 = vunpack.c.l.b16 %v1005
      %v1123 = vunpack.c.h.b16 %v1005
      %v1124 = vunpack.c.l.b16 %v1006
      %v1125 = vunpack.c.l.b16 %v1007
      %v1126 = vunpack.c.h.b16 %v1007
      %v1127 = vunpack.c.l.b16 %v1008
      %v1128 = vunpack.c.l.b16 %v1009
      %v1129 = vunpack.c.h.b16 %v1009
      %v1130 = vunpack.c.l.b16 %v1010
      %v1131 = vunpack.c.l.b16 %v1011
      %v1132 = vunpack.c.h.b16 %v1011
      %v1133 = vunpack.c.l.b16 %v1012
      %v1134 = vunpack.c.l.b16 %v1013
      %v1135 = vunpack.c.h.b16 %v1013
      %v1136 = vunpack.c.l.b16 %v1014
      %v1137 = vunpack.c.l.b16 %v1015
      %v1138 = vunpack.c.h.b16 %v1015
      %v1139 = vunpack.c.l.b16 %v1016
      %v1140 = vunpack.c.l.b16 %v1017
      %v1141 = vunpack.c.h.b16 %v1017
      %v1142 = vunpack.c.l.b16 %v1018
      %v1143 = vunpack.c.l.b16 %v1019
      %v1144 = vunpack.c.h.b16 %v1019
      %v1145 = vunpack.c.l.b16 %v1020
      %v1146 = vunpack.c.l.b16 %v1021
      %v1147 = vunpack.c.h.b16 %v1021
      %v1148 = vunpack.c.l.b16 %v1022
      %v1149 = vunpack.c.l.b16 %v1023
      %v1150 = vunpack.c.h.b16 %v1023
      %v1151 = vunpack.c.l.b16 %v1024
      %v1152 = vunpack.c.l.b16 %v1025
      %v1153 = vunpack.c.h.b16 %v1025
      %v1154 = vunpack.c.l.b16 %v1026
      %v1155 = vunpack.c.l.b16 %v1027
      %v1156 = vunpack.c.h.b16 %v1027
      %v1157 = vunpack.c.l.b16 %v1028
      %v1158 = vunpack.c.l.b16 %v1029
      %v1159 = vunpack.c.h.b16 %v1029
      %v1160 = vunpack.c.l.b16 %v1030
      %v1161 = vunpack.c.l.b16 %v1031
      %v1162 = vunpack.c.h.b16 %v1031
      %v1163 = vunpack.c.l.b16 %v1032
      %v1164 = vunpack.c.l.b16 %v1033
      %v1165 = vunpack.c.h.b16 %v1033
      %v1166 = vunpack.c.l.b16 %v1034
      %v1167 = vpack.c.b16 %v1122, %v1119
      %v1168 = vpack.c.b16 %v1123, %v1120
      %v1169 = vpack.c.b16 %v1124, %v1121
      %v1170 = vpack.c.b16 %v1128, %v1125
      %v1171 = vpack.c.b16 %v1129, %v1126
      %v1172 = vpack.c.b16 %v1130, %v1127
      %v1173 = vpack.c.b16 %v1134, %v1131
      %v1174 = vpack.c.b16 %v1135, %v1132
      %v1175 = vpack.c.b16 %v1136, %v1133
      %v1176 = vpack.c.b16 %v1140, %v1137
      %v1177 = vpack.c.b16 %v1141, %v1138
      %v1178 = vpack.c.b16 %v1142, %v1139
      %v1179 = vpack.c.b16 %v1146, %v1143
      %v1180 = vpack.c.b16 %v1147, %v1144
      %v1181 = vpack.c.b16 %v1148, %v1145
      %v1182 = vpack.c.b16 %v1152, %v1149
      %v1183 = vpack.c.b16 %v1153, %v1150
      %v1184 = vpack.c.b16 %v1154, %v1151
      %v1185 = vpack.c.b16 %v1158, %v1155
      %v1186 = vpack.c.b16 %v1159, %v1156
      %v1187 = vpack.c.b16 %v1160, %v1157
      %v1188 = vpack.c.b16 %v1164, %v1161
      %v1189 = vpack.c.b16 %v1165, %v1162
      %v1190 = vpack.c.b16 %v1166, %v1163
      %1215 = vmatprep.subr.bf16.mxu0 %v1189
      %1216 = vmatpush1.bf16.msra.mxu0 %v1188
      %1217 = vmatprep.subr.bf16.mxu0 %v1186
      %1218 = vmatpush1.bf16.msra.mxu0 %v1185
      %1219 = vmatprep.subr.bf16.mxu0 %v1183
      %1220 = vmatpush1.bf16.msra.mxu0 %v1182
      %1221 = vmatprep.subr.bf16.mxu0 %v1180
      %1222 = vmatpush1.bf16.msra.mxu0 %v1179
      %1223 = vmatprep.subr.bf16.mxu0 %v1177
      %1224 = vmatpush1.bf16.msra.mxu0 %v1176
      %1225 = vmatprep.subr.bf16.mxu0 %v1174
      %1226 = vmatpush1.bf16.msra.mxu0 %v1173
      %1227 = vmatprep.subr.bf16.mxu0 %v1171
      %1228 = vmatpush1.bf16.msra.mxu0 %v1170
      %1229 = vmatprep.subr.bf16.mxu0 %v1168
      %1230 = vmatpush1.bf16.msra.mxu0 %v1167
      %1231 = vmatprep.subr.bf16.mxu0 0
      %1232 = vmatpush2.bf16.msra.mxu0 0
      %1233 = vmatprep.subr.bf16.mxu0 0
      %1234 = vmatpush2.bf16.msra.mxu0 0
      %1235 = vmatprep.subr.bf16.mxu0 0
      %1236 = vmatpush2.bf16.msra.mxu0 0
      %1237 = vmatprep.subr.bf16.mxu0 0
      %1238 = vmatpush2.bf16.msra.mxu0 0
      %1239 = vmatprep.subr.bf16.mxu0 0
      %1240 = vmatpush2.bf16.msra.mxu0 0
      %1241 = vmatprep.subr.bf16.mxu0 0
      %1242 = vmatpush2.bf16.msra.mxu0 0
      %1243 = vmatprep.subr.bf16.mxu0 0
      %1244 = vmatpush2.bf16.msra.mxu0 0
      %1245 = vmatprep.subr.bf16.mxu0 0
      %1246 = vmatpush2.bf16.msra.mxu0 0
      %1247 = vmatprep.mubr.bf16.mxu0 0
      %1248 = vmatmul.mubr.bf16.gmra.mxu0 %v1086
      %v1249 = vpop.f32.mrf.mxu0
      %v1250 = vadd.f32 0.0, %v1249
      %v1251 = vpop.f32.mrf.mxu0
      %v1252 = vadd.f32 0.0, %v1251
      %v1253 = vpop.f32.mrf.mxu0
      %v1254 = vadd.f32 0.0, %v1253
      %v1255 = vpop.f32.mrf.mxu0
      %v1256 = vadd.f32 0.0, %v1255
      %1257 = vdwg.mxu0
      %1258 = vmatprep.subr.bf16.mxu0 0
      %1259 = vmatpush1.bf16.msra.mxu0 %v1190
      %1260 = vmatprep.subr.bf16.mxu0 0
      %1261 = vmatpush1.bf16.msra.mxu0 %v1187
      %1262 = vmatprep.subr.bf16.mxu0 0
      %1263 = vmatpush1.bf16.msra.mxu0 %v1184
      %1264 = vmatprep.subr.bf16.mxu0 0
      %1265 = vmatpush1.bf16.msra.mxu0 %v1181
      %1266 = vmatprep.subr.bf16.mxu0 0
      %1267 = vmatpush1.bf16.msra.mxu0 %v1178
      %1268 = vmatprep.subr.bf16.mxu0 0
      %1269 = vmatpush1.bf16.msra.mxu0 %v1175
      %1270 = vmatprep.subr.bf16.mxu0 0
      %1271 = vmatpush1.bf16.msra.mxu0 %v1172
      %1272 = vmatprep.subr.bf16.mxu0 0
      %1273 = vmatpush1.bf16.msra.mxu0 %v1169
      %1274 = vmatprep.subr.bf16.mxu0 0
      %1275 = vmatpush2.bf16.msra.mxu0 0
      %1276 = vmatprep.subr.bf16.mxu0 0
      %1277 = vmatpush2.bf16.msra.mxu0 0
      %1278 = vmatprep.subr.bf16.mxu0 0
      %1279 = vmatpush2.bf16.msra.mxu0 0
      %1280 = vmatprep.subr.bf16.mxu0 0
      %1281 = vmatpush2.bf16.msra.mxu0 0
      %1282 = vmatprep.subr.bf16.mxu0 0
      %1283 = vmatpush2.bf16.msra.mxu0 0
      %1284 = vmatprep.subr.bf16.mxu0 0
      %1285 = vmatpush2.bf16.msra.mxu0 0
      %1286 = vmatprep.subr.bf16.mxu0 0
      %1287 = vmatpush2.bf16.msra.mxu0 0
      %1288 = vmatprep.subr.bf16.mxu0 0
      %1289 = vmatpush2.bf16.msra.mxu0 0
      %1290 = vmatprep.mubr.bf16.mxu0 0
      %1291 = vmatmul.mubr.bf16.gmra.mxu0 %v1086
      %v1292 = vpop.f32.mrf.mxu0
      %v1293 = vadd.f32 0.0, %v1292
      %v1294 = vpop.f32.mrf.mxu0
      %v1295 = vpop.f32.mrf.mxu0
      %v1296 = vadd.f32 0.0, %v1295
      %v1297 = vpop.f32.mrf.mxu0
      %1298 = vdwg.mxu0
      %v1299 = vpack.c.bf16 %v1084, %v1083
      %v1332 = vunpack.c.l.b16 %v1036
      %v1333 = vunpack.c.h.b16 %v1036
      %v1334 = vunpack.c.l.b16 %v1037
      %v1335 = vunpack.c.l.b16 %v1038
      %v1336 = vunpack.c.h.b16 %v1038
      %v1337 = vunpack.c.l.b16 %v1039
      %v1338 = vunpack.c.l.b16 %v1040
      %v1339 = vunpack.c.h.b16 %v1040
      %v1340 = vunpack.c.l.b16 %v1041
      %v1341 = vunpack.c.l.b16 %v1042
      %v1342 = vunpack.c.h.b16 %v1042
      %v1343 = vunpack.c.l.b16 %v1043
      %v1344 = vunpack.c.l.b16 %v1044
      %v1345 = vunpack.c.h.b16 %v1044
      %v1346 = vunpack.c.l.b16 %v1045
      %v1347 = vunpack.c.l.b16 %v1046
      %v1348 = vunpack.c.h.b16 %v1046
      %v1349 = vunpack.c.l.b16 %v1047
      %v1350 = vunpack.c.l.b16 %v1048
      %v1351 = vunpack.c.h.b16 %v1048
      %v1352 = vunpack.c.l.b16 %v1049
      %v1353 = vunpack.c.l.b16 %v1050
      %v1354 = vunpack.c.h.b16 %v1050
      %v1355 = vunpack.c.l.b16 %v1051
      %v1356 = vunpack.c.l.b16 %v1052
      %v1357 = vunpack.c.h.b16 %v1052
      %v1358 = vunpack.c.l.b16 %v1053
      %v1359 = vunpack.c.l.b16 %v1054
      %v1360 = vunpack.c.h.b16 %v1054
      %v1361 = vunpack.c.l.b16 %v1055
      %v1362 = vunpack.c.l.b16 %v1056
      %v1363 = vunpack.c.h.b16 %v1056
      %v1364 = vunpack.c.l.b16 %v1057
      %v1365 = vunpack.c.l.b16 %v1058
      %v1366 = vunpack.c.h.b16 %v1058
      %v1367 = vunpack.c.l.b16 %v1059
      %v1368 = vunpack.c.l.b16 %v1060
      %v1369 = vunpack.c.h.b16 %v1060
      %v1370 = vunpack.c.l.b16 %v1061
      %v1371 = vunpack.c.l.b16 %v1062
      %v1372 = vunpack.c.h.b16 %v1062
      %v1373 = vunpack.c.l.b16 %v1063
      %v1374 = vunpack.c.l.b16 %v1064
      %v1375 = vunpack.c.h.b16 %v1064
      %v1376 = vunpack.c.l.b16 %v1065
      %v1377 = vunpack.c.l.b16 %v1066
      %v1378 = vunpack.c.h.b16 %v1066
      %v1379 = vunpack.c.l.b16 %v1067
      %v1380 = vpack.c.b16 %v1335, %v1332
      %v1381 = vpack.c.b16 %v1336, %v1333
      %v1382 = vpack.c.b16 %v1337, %v1334
      %v1383 = vpack.c.b16 %v1341, %v1338
      %v1384 = vpack.c.b16 %v1342, %v1339
      %v1385 = vpack.c.b16 %v1343, %v1340
      %v1386 = vpack.c.b16 %v1347, %v1344
      %v1387 = vpack.c.b16 %v1348, %v1345
      %v1388 = vpack.c.b16 %v1349, %v1346
      %v1389 = vpack.c.b16 %v1353, %v1350
      %v1390 = vpack.c.b16 %v1354, %v1351
      %v1391 = vpack.c.b16 %v1355, %v1352
      %v1392 = vpack.c.b16 %v1359, %v1356
      %v1393 = vpack.c.b16 %v1360, %v1357
      %v1394 = vpack.c.b16 %v1361, %v1358
      %v1395 = vpack.c.b16 %v1365, %v1362
      %v1396 = vpack.c.b16 %v1366, %v1363
      %v1397 = vpack.c.b16 %v1367, %v1364
      %v1398 = vpack.c.b16 %v1371, %v1368
      %v1399 = vpack.c.b16 %v1372, %v1369
      %v1400 = vpack.c.b16 %v1373, %v1370
      %v1401 = vpack.c.b16 %v1377, %v1374
      %v1402 = vpack.c.b16 %v1378, %v1375
      %v1403 = vpack.c.b16 %v1379, %v1376
      %1428 = vmatprep.subr.bf16.mxu0 %v1402
      %1429 = vmatpush1.bf16.msra.mxu0 %v1401
      %1430 = vmatprep.subr.bf16.mxu0 %v1399
      %1431 = vmatpush1.bf16.msra.mxu0 %v1398
      %1432 = vmatprep.subr.bf16.mxu0 %v1396
      %1433 = vmatpush1.bf16.msra.mxu0 %v1395
      %1434 = vmatprep.subr.bf16.mxu0 %v1393
      %1435 = vmatpush1.bf16.msra.mxu0 %v1392
      %1436 = vmatprep.subr.bf16.mxu0 %v1390
      %1437 = vmatpush1.bf16.msra.mxu0 %v1389
      %1438 = vmatprep.subr.bf16.mxu0 %v1387
      %1439 = vmatpush1.bf16.msra.mxu0 %v1386
      %1440 = vmatprep.subr.bf16.mxu0 %v1384
      %1441 = vmatpush1.bf16.msra.mxu0 %v1383
      %1442 = vmatprep.subr.bf16.mxu0 %v1381
      %1443 = vmatpush1.bf16.msra.mxu0 %v1380
      %1444 = vmatprep.subr.bf16.mxu0 0
      %1445 = vmatpush2.bf16.msra.mxu0 0
      %1446 = vmatprep.subr.bf16.mxu0 0
      %1447 = vmatpush2.bf16.msra.mxu0 0
      %1448 = vmatprep.subr.bf16.mxu0 0
      %1449 = vmatpush2.bf16.msra.mxu0 0
      %1450 = vmatprep.subr.bf16.mxu0 0
      %1451 = vmatpush2.bf16.msra.mxu0 0
      %1452 = vmatprep.subr.bf16.mxu0 0
      %1453 = vmatpush2.bf16.msra.mxu0 0
      %1454 = vmatprep.subr.bf16.mxu0 0
      %1455 = vmatpush2.bf16.msra.mxu0 0
      %1456 = vmatprep.subr.bf16.mxu0 0
      %1457 = vmatpush2.bf16.msra.mxu0 0
      %1458 = vmatprep.subr.bf16.mxu0 0
      %1459 = vmatpush2.bf16.msra.mxu0 0
      %1460 = vmatprep.mubr.bf16.mxu0 0
      %1461 = vmatmul.mubr.bf16.gmra.mxu0 %v1299
      %v1462 = vpop.f32.mrf.mxu0
      %v1463 = vadd.f32 0.0, %v1462
      %v1464 = vpop.f32.mrf.mxu0
      %v1465 = vadd.f32 0.0, %v1464
      %v1466 = vpop.f32.mrf.mxu0
      %v1467 = vadd.f32 0.0, %v1466
      %v1468 = vpop.f32.mrf.mxu0
      %v1469 = vadd.f32 0.0, %v1468
      %1470 = vdwg.mxu0
      %1471 = vmatprep.subr.bf16.mxu0 0
      %1472 = vmatpush1.bf16.msra.mxu0 %v1403
      %1473 = vmatprep.subr.bf16.mxu0 0
      %1474 = vmatpush1.bf16.msra.mxu0 %v1400
      %1475 = vmatprep.subr.bf16.mxu0 0
      %1476 = vmatpush1.bf16.msra.mxu0 %v1397
      %1477 = vmatprep.subr.bf16.mxu0 0
      %1478 = vmatpush1.bf16.msra.mxu0 %v1394
      %1479 = vmatprep.subr.bf16.mxu0 0
      %1480 = vmatpush1.bf16.msra.mxu0 %v1391
      %1481 = vmatprep.subr.bf16.mxu0 0
      %1482 = vmatpush1.bf16.msra.mxu0 %v1388
      %1483 = vmatprep.subr.bf16.mxu0 0
      %1484 = vmatpush1.bf16.msra.mxu0 %v1385
      %1485 = vmatprep.subr.bf16.mxu0 0
      %1486 = vmatpush1.bf16.msra.mxu0 %v1382
      %1487 = vmatprep.subr.bf16.mxu0 0
      %1488 = vmatpush2.bf16.msra.mxu0 0
      %1489 = vmatprep.subr.bf16.mxu0 0
      %1490 = vmatpush2.bf16.msra.mxu0 0
      %1491 = vmatprep.subr.bf16.mxu0 0
      %1492 = vmatpush2.bf16.msra.mxu0 0
      %1493 = vmatprep.subr.bf16.mxu0 0
      %1494 = vmatpush2.bf16.msra.mxu0 0
      %1495 = vmatprep.subr.bf16.mxu0 0
      %1496 = vmatpush2.bf16.msra.mxu0 0
      %1497 = vmatprep.subr.bf16.mxu0 0
      %1498 = vmatpush2.bf16.msra.mxu0 0
      %1499 = vmatprep.subr.bf16.mxu0 0
      %1500 = vmatpush2.bf16.msra.mxu0 0
      %1501 = vmatprep.subr.bf16.mxu0 0
      %1502 = vmatpush2.bf16.msra.mxu0 0
      %1503 = vmatprep.mubr.bf16.mxu0 0
      %1504 = vmatmul.mubr.bf16.gmra.mxu0 %v1299
      %v1505 = vpop.f32.mrf.mxu0
      %v1506 = vadd.f32 0.0, %v1505
      %v1507 = vpop.f32.mrf.mxu0
      %v1508 = vpop.f32.mrf.mxu0
      %v1509 = vadd.f32 0.0, %v1508
      %v1510 = vpop.f32.mrf.mxu0
      %1511 = vdwg.mxu0
      %s1512 = smul.u32 %s1076, 6
      %s1513 = smul.addr %s1512, 8
      %s1514 = scalar_lea.vmem [#allocation2], %s1513
      %v1515 = vld [vmem:[%s1514] sm:$0xff]
      %v1516 = vld [vmem:[%s1514 + $0x8] sm:$0xff]
      %v1517 = vld [vmem:[%s1514 + $0x10] sm:$0xff]
      %v1518 = vld [vmem:[%s1514 + $0x18] sm:$0xff]
      %v1519 = vld [vmem:[%s1514 + $0x20] sm:$0xff]
      %v1520 = vld [vmem:[%s1514 + $0x28] sm:$0xff]
      %s1521 = smul.u32 %s1085, 6
      %s1522 = smul.addr %s1521, 8
      %s1523 = scalar_lea.vmem [#allocation3], %s1522
      %v1524 = vld [vmem:[%s1523] sm:$0xff]
      %v1525 = vld [vmem:[%s1523 + $0x8] sm:$0xff]
      %v1526 = vld [vmem:[%s1523 + $0x10] sm:$0xff]
      %v1527 = vld [vmem:[%s1523 + $0x18] sm:$0xff]
      %v1528 = vld [vmem:[%s1523 + $0x20] sm:$0xff]
      %v1529 = vld [vmem:[%s1523 + $0x28] sm:$0xff]
      %v1530 = vadd.f32 %v1515, %v1250
      %v1531 = vadd.f32 %v1516, %v1252
      %v1532 = vadd.f32 %v1518, %v1254
      %v1533 = vadd.f32 %v1519, %v1256
      %v1534 = vxor.u32 %v1530, 2147483648
      %v1535 = vxor.u32 %v1531, 2147483648
      %v1536 = vxor.u32 %v1532, 2147483648
      %v1537 = vxor.u32 %v1533, 2147483648
      %v1538 = vmul.f32 %v1534, 1.442695
      %v1539 = vpow.pop %v1538
      %v1540 = vmul.f32 %v1535, 1.442695
      %v1541 = vpow.pop %v1540
      %v1542 = vmul.f32 %v1536, 1.442695
      %v1543 = vpow.pop %v1542
      %v1544 = vmul.f32 %v1537, 1.442695
      %v1545 = vpow.pop %v1544
      %v1546 = vadd.f32 %v1539, 1.0
      %v1547 = vadd.f32 %v1541, 1.0
      %v1548 = vadd.f32 %v1543, 1.0
      %v1549 = vadd.f32 %v1545, 1.0
      %v1550 = vrcp.pop %v1546
      %v1551 = vmul.f32 1.0, %v1550
      %v1552 = vrcp.pop %v1547
      %v1553 = vmul.f32 1.0, %v1552
      %v1554 = vrcp.pop %v1548
      %v1555 = vmul.f32 1.0, %v1554
      %v1556 = vrcp.pop %v1549
      %v1557 = vmul.f32 1.0, %v1556
      %v1559 = vlaneseq
      %v1560 = vshrl.u32 %v1559, 7
      %v1561 = vsub.s32 0, %v1560
      %v1562 = vrot.slane %v1068, %v1561
      %v1564 = vadd.f32 %v1293, %v1562
      %v1565 = vadd.f32 %v1296, %v1562
      %v1566 = vmul.f32 %v1551, %v1564
      %v1567 = vmul.f32 %v1555, %v1565
      %v1568 = vadd.f32 %v1517, %v1566
      %v1569 = vadd.f32 %v1520, %v1567
      %v1570 = vtanh.pop %v1568
      %v1571 = vtanh.pop %v1569
      %v1572 = vsub.f32 1.0, %v1553
      %v1573 = vsub.f32 1.0, %v1557
      %v1574 = vmul.f32 %v1572, %v1570
      %v1575 = vmul.f32 %v1573, %v1571
      %v1576 = vmul.f32 %v1553, %v1081
      %v1577 = vmul.f32 %v1557, %v1082
      %v1578 = vadd.f32 %v1574, %v1576
      %v1579 = vadd.f32 %v1575, %v1577
      %v1580 = vpack.c.bf16 %v1579, %v1578
      %v1582 = vunpack.c.l.b16 %v1580
      %v1583 = vunpack.c.h.b16 %v1580
      %v1584 = vpack.c.b16 %v1582, %v1582
      %v1585 = vpack.c.b16 %v1583, %v1583
      %s1588 = smul.u32 %s1076, 2
      %s1589 = smul.addr %s1588, 4
      %s1590 = scalar_lea.vmem %s6, %s1589
      %1591 = vst [vmem:[%s1590] sm:$0xf] %v1584
      %1592 = vst [vmem:[%s1590 + $0x4] sm:$0xf] %v1585
      %v1593 = vadd.f32 %v1524, %v1463
      %v1594 = vadd.f32 %v1525, %v1465
      %v1595 = vadd.f32 %v1527, %v1467
      %v1596 = vadd.f32 %v1528, %v1469
      %v1597 = vxor.u32 %v1593, 2147483648
      %v1598 = vxor.u32 %v1594, 2147483648
      %v1599 = vxor.u32 %v1595, 2147483648
      %v1600 = vxor.u32 %v1596, 2147483648
      %v1601 = vmul.f32 %v1597, 1.442695
      %v1602 = vpow.pop %v1601
      %v1603 = vmul.f32 %v1598, 1.442695
      %v1604 = vpow.pop %v1603
      %v1605 = vmul.f32 %v1599, 1.442695
      %v1606 = vpow.pop %v1605
      %v1607 = vmul.f32 %v1600, 1.442695
      %v1608 = vpow.pop %v1607
      %v1609 = vadd.f32 %v1602, 1.0
      %v1610 = vadd.f32 %v1604, 1.0
      %v1611 = vadd.f32 %v1606, 1.0
      %v1612 = vadd.f32 %v1608, 1.0
      %v1613 = vrcp.pop %v1609
      %v1614 = vmul.f32 1.0, %v1613
      %v1615 = vrcp.pop %v1610
      %v1616 = vmul.f32 1.0, %v1615
      %v1617 = vrcp.pop %v1611
      %v1618 = vmul.f32 1.0, %v1617
      %v1619 = vrcp.pop %v1612
      %v1620 = vmul.f32 1.0, %v1619
      %v1622 = vlaneseq
      %v1623 = vshrl.u32 %v1622, 7
      %v1624 = vsub.s32 0, %v1623
      %v1625 = vrot.slane %v1070, %v1624
      %v1627 = vadd.f32 %v1506, %v1625
      %v1628 = vadd.f32 %v1509, %v1625
      %v1629 = vmul.f32 %v1614, %v1627
      %v1630 = vmul.f32 %v1618, %v1628
      %v1631 = vadd.f32 %v1526, %v1629
      %v1632 = vadd.f32 %v1529, %v1630
      %v1633 = vtanh.pop %v1631
      %v1634 = vtanh.pop %v1632
      %v1635 = vsub.f32 1.0, %v1616
      %v1636 = vsub.f32 1.0, %v1620
      %v1637 = vmul.f32 %v1635, %v1633
      %v1638 = vmul.f32 %v1636, %v1634
      %v1639 = vmul.f32 %v1616, %v1083
      %v1640 = vmul.f32 %v1620, %v1084
      %v1641 = vadd.f32 %v1637, %v1639
      %v1642 = vadd.f32 %v1638, %v1640
      %v1643 = vpack.c.bf16 %v1642, %v1641
      %v1645 = vunpack.c.l.b16 %v1643
      %v1646 = vunpack.c.h.b16 %v1643
      %v1647 = vpack.c.b16 %v1645, %v1645
      %v1648 = vpack.c.b16 %v1646, %v1646
      %s1651 = smul.u32 %s1085, 2
      %s1652 = smul.addr %s1651, 4
      %s1653 = scalar_lea.vmem %s118, %s1652
      %1654 = vst [vmem:[%s1653] sm:$0xf] %v1647
      %1655 = vst [vmem:[%s1653 + $0x4] sm:$0xf] %v1648
    $region50: #{bert_gru_sentiment_forward.2} parent=1 // loop_footer
      %s1080 = sadd.s32 1, %s1076
    $region51: #{bert_gru_sentiment_forward.2} parent=1 // loop_footer_branch
      %1075 = sbr.rel target = $region47
    $region52: #{bert_gru_sentiment_forward.2} parent=1 // loop_exit
      _
    %1656 = vst [vmem:[#allocation4] sm:$0xff] %v1081
    %1657 = vst [vmem:[#allocation4 + $0x8] sm:$0xff] %v1082
    %1658 = vst [vmem:[#allocation5] sm:$0xff] %v1083
    %1659 = vst [vmem:[#allocation5 + $0x8] sm:$0xff] %v1084
    %s1660 = ssub.s32 0, 0
    %s1661 = smul.u32 8, %s1660
    %p1662 = scmp.lt.s32.totalorder %s1661, 7
    %s1663 = scalar_select %p1662, %s1661, 7
    %s1664 = smul.addr %s1663, 2
    %s1665 = smul.addr %s1664, 4
    %s1666 = scalar_lea.vmem %s7, %s1665
    // Predicated region
    $region53: #{bert_gru_sentiment_forward.2} parent=1 // pred_check
      _
    $region54: #{bert_gru_sentiment_forward.2} parent=1 // pred_check_branch
      %1668 = sbr.rel (0) target = $region56
    $region55: #{bert_gru_sentiment_forward.2} parent=1 // pred_region
      _
    $region56: #{bert_gru_sentiment_forward.2} parent=1 // pred_fallthru
      _
    // Predicated region
    $region57: #{bert_gru_sentiment_forward.2} parent=1 // pred_check
      _
    $region58: #{bert_gru_sentiment_forward.2} parent=1 // pred_check_branch
      %1670 = sbr.rel (0) target = $region60
    $region59: #{bert_gru_sentiment_forward.2} parent=1 // pred_region
      %s1671 = ssub.s32 0, 0
      %s1672 = smul.u32 8, %s1671
    $region60: #{bert_gru_sentiment_forward.2} parent=1 // pred_fallthru
      _
    // Predicated region
    $region61: #{bert_gru_sentiment_forward.2} parent=1 // pred_check
      _
    $region62: #{bert_gru_sentiment_forward.2} parent=1 // pred_check_branch
      %1674 = sbr.rel (0) target = $region64
    $region63: #{bert_gru_sentiment_forward.2} parent=1 // pred_region
      _
    $region64: #{bert_gru_sentiment_forward.2} parent=1 // pred_fallthru
      _
    // Predicated region
    $region65: #{bert_gru_sentiment_forward.2} parent=1 // pred_check
      _
    $region66: #{bert_gru_sentiment_forward.2} parent=1 // pred_check_branch
      %1676 = sbr.rel (0) target = $region68
    $region67: #{bert_gru_sentiment_forward.2} parent=1 // pred_region
      %s1677 = ssub.s32 0, 0
      %s1678 = smul.u32 8, %s1677
      %p1679 = scmp.lt.s32.totalorder %s1678, 7
      %s1680 = scalar_select %p1679, %s1678, 7
      %s1681 = smul.addr %s1680, 2
      %s1682 = smul.addr %s1681, 4
      %s1683 = scalar_lea.vmem %s7, %s1682
    $region68: #{bert_gru_sentiment_forward.2} parent=1 // pred_fallthru
      _
    %1684 = vsyncpa [#allocation7], 1
    %1685 = vsyncpa [#allocation9], 1
    %1686 = vsyncpa [#allocation12], 1

// kernel: bert_gru_sentiment_forward.3
$region0: #{bert_gru_sentiment_forward.3}
  #allocation0 [shape = 'u32[]', space=smem, size = 0x4, offset = 0x4, fixed_abs, tag = 'smem constant byte address 0x4 - core index']
  #allocation1 [shape = 'u32[144,128]{1,0:T(1,128)}', space=vmem, size = 0x12000, scoped, tag = 'internal scratch']
  #allocation2 [shape = 'f32[8,16,384]{2,1,0:T(8,128)}', space=vmem, size = 0x30000, scoped, tag = 'scratch operand']
  #allocation3 [shape = 'f32[8,16,384]{2,1,0:T(8,128)}', space=vmem, size = 0x30000, scoped, tag = 'scratch operand']
  #allocation4 [shape = 'f32[16,128]{1,0:T(8,128)}', space=vmem, size = 0x2000, scoped, tag = 'scratch operand']
  #allocation5 [shape = 'f32[16,128]{1,0:T(8,128)}', space=vmem, size = 0x2000, scoped, tag = 'scratch operand']
  %s0 = inlined_call_operand.vmem [shape: bf16[8,16,128], index: 0, kind: input, shape index: {}, may-alias: {0,2}]
  %s1 = inlined_call_operand.vmem [shape: bf16[8,16,128], index: 1, kind: input, shape index: {}, may-alias: {1,3}]
  %s2 = inlined_call_operand.vmem [shape: bf16[8,16,128], index: 2, kind: input, shape index: {}, may-alias: {0,2}]
  %s3 = inlined_call_operand.vmem [shape: bf16[8,16,128], index: 3, kind: input, shape index: {}, may-alias: {1,3}]
  %s4 = inlined_call_operand.vmem [shape: bf16[2,256,384], index: 4, kind: input, shape index: {}]
  %s5 = inlined_call_operand.hbm [shape: bf16[2,128,384], index: 5, kind: input, shape index: {}]
  %s6 = inlined_call_operand.vmem [shape: f32[2,1,384], index: 6, kind: input, shape index: {}]
  %s7 = inlined_call_operand.vmem [shape: f32[2,1,128], index: 7, kind: input, shape index: {}]
  %s8 = inlined_call_operand.hbm [shape: f32[2,128,128], index: 8, kind: input, shape index: {}]
  %s9 = inlined_call_operand.vmem [shape: f32[1,128], index: 9, kind: input, shape index: {}]
  %s10 = inlined_call_operand.vmem [shape: f32[16,128], index: 10, kind: output, shape index: {}]
  %s11 = sld [smem:[#allocation0]]
  $region73: #{bert_gru_sentiment_forward.3} parent=0
    _
  %s13 = ssub.s32 1, %s11
  %s14 = scalar_select 0, %s13, %s11
  $region1: #{bert_gru_sentiment_forward.3} parent=0
    #allocation6 [shape = 'u8[196608]{0}', space=vmem, size = 0x30000, scoped, tag = 'input window, operand 5, single buffered']
    #allocation7 [shape = 's32[1]{0}', space=sflag, size = 0x4, scoped, tag = 'scoped memory for bert_gru_sentiment_forward.3']
    #allocation8 [shape = 'u8[131072]{0}', space=vmem, size = 0x20000, scoped, tag = 'input window, operand 8, single buffered']
    #allocation9 [shape = 's32[1]{0}', space=sflag, size = 0x4, scoped, tag = 'scoped memory for bert_gru_sentiment_forward.3']
    %15 = vsyncpa [#allocation7], 0
    %16 = vsyncpa [#allocation9], 0
    // Predicated region
    $region2: #{bert_gru_sentiment_forward.3} parent=1 // pred_check
      _
    $region3: #{bert_gru_sentiment_forward.3} parent=1 // pred_check_branch
      %18 = sbr.rel (0) target = $region5
    $region4: #{bert_gru_sentiment_forward.3} parent=1 // pred_region
      _
    $region5: #{bert_gru_sentiment_forward.3} parent=1 // pred_fallthru
      _
    // Predicated region
    $region6: #{bert_gru_sentiment_forward.3} parent=1 // pred_check
      _
    $region7: #{bert_gru_sentiment_forward.3} parent=1 // pred_check_branch
      %20 = sbr.rel (0) target = $region9
    $region8: #{bert_gru_sentiment_forward.3} parent=1 // pred_region
      _
    $region9: #{bert_gru_sentiment_forward.3} parent=1 // pred_fallthru
      _
    // Predicated region
    $region10: #{bert_gru_sentiment_forward.3} parent=1 // pred_check
      _
    $region11: #{bert_gru_sentiment_forward.3} parent=1 // pred_check_branch
      %22 = sbr.rel (0) target = $region13
    $region12: #{bert_gru_sentiment_forward.3} parent=1 // pred_region
      %s23 = ssub.s32 0, 0
      %s24 = smul.u32 8, %s23
      %p25 = scmp.lt.s32.totalorder %s24, 7
      %s26 = scalar_select %p25, %s24, 7
      %s27 = smul.addr %s26, 2
      %s28 = smul.addr %s27, 4
      %s29 = scalar_lea.vmem %s2, %s28
      %s30 = ssub.s32 0, 0
      %s31 = smul.u32 8, %s30
    $region13: #{bert_gru_sentiment_forward.3} parent=1 // pred_fallthru
      _
    // Predicated region
    $region14: #{bert_gru_sentiment_forward.3} parent=1 // pred_check
      _
    $region15: #{bert_gru_sentiment_forward.3} parent=1 // pred_check_branch
      %33 = sbr.rel (0) target = $region17
    $region16: #{bert_gru_sentiment_forward.3} parent=1 // pred_region
      %s34 = ssub.s32 0, 0
      %s35 = smul.u32 8, %s34
      %p36 = scmp.lt.s32.totalorder %s35, 7
      %s37 = scalar_select %p36, %s35, 7
      %s38 = smul.addr %s37, 2
      %s39 = smul.addr %s38, 4
      %s40 = scalar_lea.vmem %s3, %s39
      %s41 = ssub.s32 0, 0
      %s42 = smul.u32 8, %s41
    $region17: #{bert_gru_sentiment_forward.3} parent=1 // pred_fallthru
      _
    // Predicated region
    $region18: #{bert_gru_sentiment_forward.3} parent=1 // pred_check
      _
    $region19: #{bert_gru_sentiment_forward.3} parent=1 // pred_check_branch
      %44 = sbr.rel (0) target = $region21
    $region20: #{bert_gru_sentiment_forward.3} parent=1 // pred_region
      _
    $region21: #{bert_gru_sentiment_forward.3} parent=1 // pred_fallthru
      _
    // Predicated region
    $region22: #{bert_gru_sentiment_forward.3} parent=1 // pred_check
      _
    $region23: #{bert_gru_sentiment_forward.3} parent=1 // pred_check_branch
      %46 = sbr.rel (0) target = $region25
    $region24: #{bert_gru_sentiment_forward.3} parent=1 // pred_region
      %s48 = ssub.s32 6144, 6144
      %49 = vsyncadd [#allocation7], %s48
      %s50 = sshll.u32 [#allocation6], 4
      %s51 = int_to_ptr.vmem [resolvable:$true] %s50
      %56 = dma.hbm_to_vmem [thread:$0]  %s5, 6144, %s51, [#allocation7], 192, 192, 12
    $region25: #{bert_gru_sentiment_forward.3} parent=1 // pred_fallthru
      _
    // Predicated region
    $region26: #{bert_gru_sentiment_forward.3} parent=1 // pred_check
      _
    $region27: #{bert_gru_sentiment_forward.3} parent=1 // pred_check_branch
      %58 = sbr.rel (0) target = $region29
    $region28: #{bert_gru_sentiment_forward.3} parent=1 // pred_region
      _
    $region29: #{bert_gru_sentiment_forward.3} parent=1 // pred_fallthru
      _
    // Predicated region
    $region30: #{bert_gru_sentiment_forward.3} parent=1 // pred_check
      _
    $region31: #{bert_gru_sentiment_forward.3} parent=1 // pred_check_branch
      %60 = sbr.rel (0) target = $region33
    $region32: #{bert_gru_sentiment_forward.3} parent=1 // pred_region
      _
    $region33: #{bert_gru_sentiment_forward.3} parent=1 // pred_fallthru
      _
    // Predicated region
    $region34: #{bert_gru_sentiment_forward.3} parent=1 // pred_check
      _
    $region35: #{bert_gru_sentiment_forward.3} parent=1 // pred_check_branch
      %62 = sbr.rel (0) target = $region37
    $region36: #{bert_gru_sentiment_forward.3} parent=1 // pred_region
      %s64 = ssub.s32 4096, 4096
      %65 = vsyncadd [#allocation9], %s64
      %s66 = sshll.u32 [#allocation8], 4
      %s67 = int_to_ptr.vmem [resolvable:$true] %s66
      %72 = dma.hbm_to_vmem [thread:$0]  %s8, 4096, %s67, [#allocation9], 128, 128, 8
    $region37: #{bert_gru_sentiment_forward.3} parent=1 // pred_fallthru
      _
    // Predicated region
    $region38: #{bert_gru_sentiment_forward.3} parent=1 // pred_check
      _
    $region39: #{bert_gru_sentiment_forward.3} parent=1 // pred_check_branch
      %74 = sbr.rel (0) target = $region41
    $region40: #{bert_gru_sentiment_forward.3} parent=1 // pred_region
      _
    $region41: #{bert_gru_sentiment_forward.3} parent=1 // pred_fallthru
      _
    // Predicated region
    $region42: #{bert_gru_sentiment_forward.3} parent=1 // pred_check
      _
    $region43: #{bert_gru_sentiment_forward.3} parent=1 // pred_check_branch
      %76 = sbr.rel (0) target = $region45
    $region44: #{bert_gru_sentiment_forward.3} parent=1 // pred_region
      %77 = dma.done [#allocation7], 6144
    $region45: #{bert_gru_sentiment_forward.3} parent=1 // pred_fallthru
      _
    // Predicated region
    $region46: #{bert_gru_sentiment_forward.3} parent=1 // pred_check
      _
    $region47: #{bert_gru_sentiment_forward.3} parent=1 // pred_check_branch
      %79 = sbr.rel (0) target = $region49
    $region48: #{bert_gru_sentiment_forward.3} parent=1 // pred_region
      %80 = dma.done [#allocation9], 4096
    $region49: #{bert_gru_sentiment_forward.3} parent=1 // pred_fallthru
      _
    %s81 = ssub.s32 0, 0
    %s82 = smul.u32 8, %s81
    %p83 = scmp.lt.s32.totalorder %s82, 7
    %s84 = scalar_select %p83, %s82, 7
    %s85 = smul.addr %s84, 2
    %s86 = smul.addr %s85, 4
    %s87 = scalar_lea.vmem %s2, %s86
    %s88 = ssub.s32 0, 0
    %s89 = smul.u32 8, %s88
    %p90 = scmp.lt.s32.totalorder %s89, 7
    %s91 = scalar_select %p90, %s89, 7
    %s92 = smul.addr %s91, 2
    %s93 = smul.addr %s92, 4
    %s94 = scalar_lea.vmem %s3, %s93
    %s95 = ssub.s32 0, 0
    %s96 = smul.u32 8, %s95
    %p97 = scmp.lt.s32.totalorder %s96, 7
    %s98 = scalar_select %p97, %s96, 7
    %s99 = smul.addr %s98, 2
    %s100 = smul.addr %s99, 4
    %s101 = scalar_lea.vmem %s2, %s100
    %s102 = ssub.s32 0, 0
    %s103 = smul.u32 8, %s102
    %s104 = ssub.s32 0, 0
    %s105 = smul.u32 8, %s104
    %p106 = scmp.lt.s32.totalorder %s105, 7
    %s107 = scalar_select %p106, %s105, 7
    %s108 = smul.addr %s107, 2
    %s109 = smul.addr %s108, 4
    %s110 = scalar_lea.vmem %s3, %s109
    %s111 = ssub.s32 0, 0
    %s112 = smul.u32 8, %s111
    %p114 = scmp.eq.s32.totalorder 0, 0
    // Predicated region
    $region50: #{bert_gru_sentiment_forward.3} parent=1 // pred_check
      %p115 = pneg %p114
    $region51: #{bert_gru_sentiment_forward.3} parent=1 // pred_check_branch
      %117 = sbr.rel (%p115) target = $region53
    $region52: #{bert_gru_sentiment_forward.3} parent=1 // pred_region
      %118 = vst [vmem:[#allocation4] sm:$0xff] 0.0
      %119 = vst [vmem:[#allocation4 + $0x8] sm:$0xff] 0.0
      %120 = vst [vmem:[#allocation5] sm:$0xff] 0.0
      %121 = vst [vmem:[#allocation5 + $0x8] sm:$0xff] 0.0
    $region53: #{bert_gru_sentiment_forward.3} parent=1 // pred_fallthru
      _
    %v122 = vld [vmem:[%s4] sm:$0xff]
    %v123 = vld [vmem:[%s4 + $0x8] sm:$0xf]
    %v124 = vld [vmem:[%s4 + $0xc] sm:$0xff]
    %v125 = vld [vmem:[%s4 + $0x14] sm:$0xf]
    %v126 = vld [vmem:[%s4 + $0x18] sm:$0xff]
    %v127 = vld [vmem:[%s4 + $0x20] sm:$0xf]
    %v128 = vld [vmem:[%s4 + $0x24] sm:$0xff]
    %v129 = vld [vmem:[%s4 + $0x2c] sm:$0xf]
    %v130 = vld [vmem:[%s4 + $0x30] sm:$0xff]
    %v131 = vld [vmem:[%s4 + $0x38] sm:$0xf]
    %v132 = vld [vmem:[%s4 + $0x3c] sm:$0xff]
    %v133 = vld [vmem:[%s4 + $0x44] sm:$0xf]
    %v134 = vld [vmem:[%s4 + $0x48] sm:$0xff]
    %v135 = vld [vmem:[%s4 + $0x50] sm:$0xf]
    %v136 = vld [vmem:[%s4 + $0x54] sm:$0xff]
    %v137 = vld [vmem:[%s4 + $0x5c] sm:$0xf]
    %v138 = vld [vmem:[%s4 + $0x60] sm:$0xff]
    %v139 = vld [vmem:[%s4 + $0x68] sm:$0xf]
    %v140 = vld [vmem:[%s4 + $0x6c] sm:$0xff]
    %v141 = vld [vmem:[%s4 + $0x74] sm:$0xf]
    %v142 = vld [vmem:[%s4 + $0x78] sm:$0xff]
    %v143 = vld [vmem:[%s4 + $0x80] sm:$0xf]
    %v144 = vld [vmem:[%s4 + $0x84] sm:$0xff]
    %v145 = vld [vmem:[%s4 + $0x8c] sm:$0xf]
    %v146 = vld [vmem:[%s4 + $0x90] sm:$0xff]
    %v147 = vld [vmem:[%s4 + $0x98] sm:$0xf]
    %v148 = vld [vmem:[%s4 + $0x9c] sm:$0xff]
    %v149 = vld [vmem:[%s4 + $0xa4] sm:$0xf]
    %v150 = vld [vmem:[%s4 + $0xa8] sm:$0xff]
    %v151 = vld [vmem:[%s4 + $0xb0] sm:$0xf]
    %v152 = vld [vmem:[%s4 + $0xb4] sm:$0xff]
    %v153 = vld [vmem:[%s4 + $0xbc] sm:$0xf]
    %v154 = vld [vmem:[%s4 + $0xc0] sm:$0xff]
    %v155 = vld [vmem:[%s4 + $0xc8] sm:$0xf]
    %v156 = vld [vmem:[%s4 + $0xcc] sm:$0xff]
    %v157 = vld [vmem:[%s4 + $0xd4] sm:$0xf]
    %v158 = vld [vmem:[%s4 + $0xd8] sm:$0xff]
    %v159 = vld [vmem:[%s4 + $0xe0] sm:$0xf]
    %v160 = vld [vmem:[%s4 + $0xe4] sm:$0xff]
    %v161 = vld [vmem:[%s4 + $0xec] sm:$0xf]
    %v162 = vld [vmem:[%s4 + $0xf0] sm:$0xff]
    %v163 = vld [vmem:[%s4 + $0xf8] sm:$0xf]
    %v164 = vld [vmem:[%s4 + $0xfc] sm:$0xff]
    %v165 = vld [vmem:[%s4 + $0x104] sm:$0xf]
    %v166 = vld [vmem:[%s4 + $0x108] sm:$0xff]
    %v167 = vld [vmem:[%s4 + $0x110] sm:$0xf]
    %v168 = vld [vmem:[%s4 + $0x114] sm:$0xff]
    %v169 = vld [vmem:[%s4 + $0x11c] sm:$0xf]
    %v170 = vld [vmem:[%s4 + $0x120] sm:$0xff]
    %v171 = vld [vmem:[%s4 + $0x128] sm:$0xf]
    %v172 = vld [vmem:[%s4 + $0x12c] sm:$0xff]
    %v173 = vld [vmem:[%s4 + $0x134] sm:$0xf]
    %v174 = vld [vmem:[%s4 + $0x138] sm:$0xff]
    %v175 = vld [vmem:[%s4 + $0x140] sm:$0xf]
    %v176 = vld [vmem:[%s4 + $0x144] sm:$0xff]
    %v177 = vld [vmem:[%s4 + $0x14c] sm:$0xf]
    %v178 = vld [vmem:[%s4 + $0x150] sm:$0xff]
    %v179 = vld [vmem:[%s4 + $0x158] sm:$0xf]
    %v180 = vld [vmem:[%s4 + $0x15c] sm:$0xff]
    %v181 = vld [vmem:[%s4 + $0x164] sm:$0xf]
    %v182 = vld [vmem:[%s4 + $0x168] sm:$0xff]
    %v183 = vld [vmem:[%s4 + $0x170] sm:$0xf]
    %v184 = vld [vmem:[%s4 + $0x174] sm:$0xff]
    %v185 = vld [vmem:[%s4 + $0x17c] sm:$0xf]
    %v186 = vld [vmem:[%s0] sm:$0xf]
    %v187 = vld [vmem:[%s0 + $0x4] sm:$0xf]
    %v188 = vld [vmem:[%s0 + $0x8] sm:$0xf]
    %v189 = vld [vmem:[%s0 + $0xc] sm:$0xf]
    %v190 = vld [vmem:[%s0 + $0x10] sm:$0xf]
    %v191 = vld [vmem:[%s0 + $0x14] sm:$0xf]
    %v192 = vld [vmem:[%s0 + $0x18] sm:$0xf]
    %v193 = vld [vmem:[%s0 + $0x1c] sm:$0xf]
    %v194 = vld [vmem:[%s0 + $0x20] sm:$0xf]
    %v195 = vld [vmem:[%s0 + $0x24] sm:$0xf]
    %v196 = vld [vmem:[%s0 + $0x28] sm:$0xf]
    %v197 = vld [vmem:[%s0 + $0x2c] sm:$0xf]
    %v198 = vld [vmem:[%s0 + $0x30] sm:$0xf]
    %v199 = vld [vmem:[%s0 + $0x34] sm:$0xf]
    %v200 = vld [vmem:[%s0 + $0x38] sm:$0xf]
    %v201 = vld [vmem:[%s0 + $0x3c] sm:$0xf]
    %v202 = vld [vmem:[%s1] sm:$0xf]
    %v203 = vld [vmem:[%s1 + $0x4] sm:$0xf]
    %v204 = vld [vmem:[%s1 + $0x8] sm:$0xf]
    %v205 = vld [vmem:[%s1 + $0xc] sm:$0xf]
    %v206 = vld [vmem:[%s1 + $0x10] sm:$0xf]
    %v207 = vld [vmem:[%s1 + $0x14] sm:$0xf]
    %v208 = vld [vmem:[%s1 + $0x18] sm:$0xf]
    %v209 = vld [vmem:[%s1 + $0x1c] sm:$0xf]
    %v210 = vld [vmem:[%s1 + $0x20] sm:$0xf]
    %v211 = vld [vmem:[%s1 + $0x24] sm:$0xf]
    %v212 = vld [vmem:[%s1 + $0x28] sm:$0xf]
    %v213 = vld [vmem:[%s1 + $0x2c] sm:$0xf]
    %v214 = vld [vmem:[%s1 + $0x30] sm:$0xf]
    %v215 = vld [vmem:[%s1 + $0x34] sm:$0xf]
    %v216 = vld [vmem:[%s1 + $0x38] sm:$0xf]
    %v217 = vld [vmem:[%s1 + $0x3c] sm:$0xf]
    %v234 = vunpack.c.l.b16 %v202
    %v235 = vunpack.c.l.b16 %v203
    %v236 = vunpack.c.l.b16 %v204
    %v237 = vunpack.c.l.b16 %v205
    %v238 = vunpack.c.l.b16 %v206
    %v239 = vunpack.c.l.b16 %v207
    %v240 = vunpack.c.l.b16 %v208
    %v241 = vunpack.c.l.b16 %v209
    %v242 = vunpack.c.l.b16 %v210
    %v243 = vunpack.c.l.b16 %v211
    %v244 = vunpack.c.l.b16 %v212
    %v245 = vunpack.c.l.b16 %v213
    %v246 = vunpack.c.l.b16 %v214
    %v247 = vunpack.c.l.b16 %v215
    %v248 = vunpack.c.l.b16 %v216
    %v249 = vunpack.c.l.b16 %v217
    %v250 = vpack.c.b16 %v235, %v234
    %v251 = vpack.c.b16 %v237, %v236
    %v252 = vpack.c.b16 %v239, %v238
    %v253 = vpack.c.b16 %v241, %v240
    %v254 = vpack.c.b16 %v243, %v242
    %v255 = vpack.c.b16 %v245, %v244
    %v256 = vpack.c.b16 %v247, %v246
    %v257 = vpack.c.b16 %v249, %v248
    %v298 = vunpack.c.l.b16 %v154
    %v299 = vunpack.c.h.b16 %v154
    %v300 = vunpack.c.l.b16 %v155
    %v301 = vunpack.c.l.b16 %v156
    %v302 = vunpack.c.h.b16 %v156
    %v303 = vunpack.c.l.b16 %v157
    %v304 = vunpack.c.l.b16 %v158
    %v305 = vunpack.c.h.b16 %v158
    %v306 = vunpack.c.l.b16 %v159
    %v307 = vunpack.c.l.b16 %v160
    %v308 = vunpack.c.h.b16 %v160
    %v309 = vunpack.c.l.b16 %v161
    %v310 = vunpack.c.l.b16 %v162
    %v311 = vunpack.c.h.b16 %v162
    %v312 = vunpack.c.l.b16 %v163
    %v313 = vunpack.c.l.b16 %v164
    %v314 = vunpack.c.h.b16 %v164
    %v315 = vunpack.c.l.b16 %v165
    %v316 = vunpack.c.l.b16 %v166
    %v317 = vunpack.c.h.b16 %v166
    %v318 = vunpack.c.l.b16 %v167
    %v319 = vunpack.c.l.b16 %v168
    %v320 = vunpack.c.h.b16 %v168
    %v321 = vunpack.c.l.b16 %v169
    %v322 = vunpack.c.l.b16 %v170
    %v323 = vunpack.c.h.b16 %v170
    %v324 = vunpack.c.l.b16 %v171
    %v325 = vunpack.c.l.b16 %v172
    %v326 = vunpack.c.h.b16 %v172
    %v327 = vunpack.c.l.b16 %v173
    %v328 = vunpack.c.l.b16 %v174
    %v329 = vunpack.c.h.b16 %v174
    %v330 = vunpack.c.l.b16 %v175
    %v331 = vunpack.c.l.b16 %v176
    %v332 = vunpack.c.h.b16 %v176
    %v333 = vunpack.c.l.b16 %v177
    %v334 = vunpack.c.l.b16 %v178
    %v335 = vunpack.c.h.b16 %v178
    %v336 = vunpack.c.l.b16 %v179
    %v337 = vunpack.c.l.b16 %v180
    %v338 = vunpack.c.h.b16 %v180
    %v339 = vunpack.c.l.b16 %v181
    %v340 = vunpack.c.l.b16 %v182
    %v341 = vunpack.c.h.b16 %v182
    %v342 = vunpack.c.l.b16 %v183
    %v343 = vunpack.c.l.b16 %v184
    %v344 = vunpack.c.h.b16 %v184
    %v345 = vunpack.c.l.b16 %v185
    %v346 = vpack.c.b16 %v301, %v298
    %v347 = vpack.c.b16 %v302, %v299
    %v348 = vpack.c.b16 %v303, %v300
    %v349 = vpack.c.b16 %v307, %v304
    %v350 = vpack.c.b16 %v308, %v305
    %v351 = vpack.c.b16 %v309, %v306
    %v352 = vpack.c.b16 %v313, %v310
    %v353 = vpack.c.b16 %v314, %v311
    %v354 = vpack.c.b16 %v315, %v312
    %v355 = vpack.c.b16 %v319, %v316
    %v356 = vpack.c.b16 %v320, %v317
    %v357 = vpack.c.b16 %v321, %v318
    %v358 = vpack.c.b16 %v325, %v322
    %v359 = vpack.c.b16 %v326, %v323
    %v360 = vpack.c.b16 %v327, %v324
    %v361 = vpack.c.b16 %v331, %v328
    %v362 = vpack.c.b16 %v332, %v329
    %v363 = vpack.c.b16 %v333, %v330
    %v364 = vpack.c.b16 %v337, %v334
    %v365 = vpack.c.b16 %v338, %v335
    %v366 = vpack.c.b16 %v339, %v336
    %v367 = vpack.c.b16 %v343, %v340
    %v368 = vpack.c.b16 %v344, %v341
    %v369 = vpack.c.b16 %v345, %v342
    %394 = vmatprep.subr.bf16.mxu0 %v368
    %395 = vmatpush1.bf16.msra.mxu0 %v367
    %396 = vmatprep.subr.bf16.mxu0 %v365
    %397 = vmatpush1.bf16.msra.mxu0 %v364
    %398 = vmatprep.subr.bf16.mxu0 %v362
    %399 = vmatpush1.bf16.msra.mxu0 %v361
    %400 = vmatprep.subr.bf16.mxu0 %v359
    %401 = vmatpush1.bf16.msra.mxu0 %v358
    %402 = vmatprep.subr.bf16.mxu0 %v356
    %403 = vmatpush1.bf16.msra.mxu0 %v355
    %404 = vmatprep.subr.bf16.mxu0 %v353
    %405 = vmatpush1.bf16.msra.mxu0 %v352
    %406 = vmatprep.subr.bf16.mxu0 %v350
    %407 = vmatpush1.bf16.msra.mxu0 %v349
    %408 = vmatprep.subr.bf16.mxu0 %v347
    %409 = vmatpush1.bf16.msra.mxu0 %v346
    %410 = vmatprep.subr.bf16.mxu0 0
    %411 = vmatpush2.bf16.msra.mxu0 0
    %412 = vmatprep.subr.bf16.mxu0 0
    %413 = vmatpush2.bf16.msra.mxu0 0
    %414 = vmatprep.subr.bf16.mxu0 0
    %415 = vmatpush2.bf16.msra.mxu0 0
    %416 = vmatprep.subr.bf16.mxu0 0
    %417 = vmatpush2.bf16.msra.mxu0 0
    %418 = vmatprep.subr.bf16.mxu0 0
    %419 = vmatpush2.bf16.msra.mxu0 0
    %420 = vmatprep.subr.bf16.mxu0 0
    %421 = vmatpush2.bf16.msra.mxu0 0
    %422 = vmatprep.subr.bf16.mxu0 0
    %423 = vmatpush2.bf16.msra.mxu0 0
    %424 = vmatprep.subr.bf16.mxu0 0
    %425 = vmatpush2.bf16.msra.mxu0 0
    %426 = vmatprep.mubr.bf16.mxu0 0
    %427 = vmatmul.mubr.bf16.gmra.mxu0 %v250
    %v428 = vpop.f32.mrf.mxu0
    %v429 = vadd.f32 0.0, %v428
    %v430 = vpop.f32.mrf.mxu0
    %v431 = vadd.f32 0.0, %v430
    %v432 = vpop.f32.mrf.mxu0
    %v433 = vadd.f32 0.0, %v432
    %v434 = vpop.f32.mrf.mxu0
    %v435 = vadd.f32 0.0, %v434
    %436 = vmatprep.mubr.bf16.mxu0 0
    %437 = vmatmul.mubr.bf16.gmra.mxu0 %v251
    %v438 = vpop.f32.mrf.mxu0
    %v439 = vadd.f32 0.0, %v438
    %v440 = vpop.f32.mrf.mxu0
    %v441 = vadd.f32 0.0, %v440
    %v442 = vpop.f32.mrf.mxu0
    %v443 = vadd.f32 0.0, %v442
    %v444 = vpop.f32.mrf.mxu0
    %v445 = vadd.f32 0.0, %v444
    %446 = vmatprep.mubr.bf16.mxu0 0
    %447 = vmatmul.mubr.bf16.gmra.mxu0 %v252
    %v448 = vpop.f32.mrf.mxu0
    %v449 = vadd.f32 0.0, %v448
    %v450 = vpop.f32.mrf.mxu0
    %v451 = vadd.f32 0.0, %v450
    %v452 = vpop.f32.mrf.mxu0
    %v453 = vadd.f32 0.0, %v452
    %v454 = vpop.f32.mrf.mxu0
    %v455 = vadd.f32 0.0, %v454
    %456 = vmatprep.mubr.bf16.mxu0 0
    %457 = vmatmul.mubr.bf16.gmra.mxu0 %v253
    %v458 = vpop.f32.mrf.mxu0
    %v459 = vadd.f32 0.0, %v458
    %v460 = vpop.f32.mrf.mxu0
    %v461 = vadd.f32 0.0, %v460
    %v462 = vpop.f32.mrf.mxu0
    %v463 = vadd.f32 0.0, %v462
    %v464 = vpop.f32.mrf.mxu0
    %v465 = vadd.f32 0.0, %v464
    %466 = vmatprep.mubr.bf16.mxu0 0
    %467 = vmatmul.mubr.bf16.gmra.mxu0 %v254
    %v468 = vpop.f32.mrf.mxu0
    %v469 = vadd.f32 0.0, %v468
    %v470 = vpop.f32.mrf.mxu0
    %v471 = vadd.f32 0.0, %v470
    %v472 = vpop.f32.mrf.mxu0
    %v473 = vadd.f32 0.0, %v472
    %v474 = vpop.f32.mrf.mxu0
    %v475 = vadd.f32 0.0, %v474
    %476 = vmatprep.mubr.bf16.mxu0 0
    %477 = vmatmul.mubr.bf16.gmra.mxu0 %v255
    %v478 = vpop.f32.mrf.mxu0
    %v479 = vadd.f32 0.0, %v478
    %v480 = vpop.f32.mrf.mxu0
    %v481 = vadd.f32 0.0, %v480
    %v482 = vpop.f32.mrf.mxu0
    %v483 = vadd.f32 0.0, %v482
    %v484 = vpop.f32.mrf.mxu0
    %v485 = vadd.f32 0.0, %v484
    %486 = vmatprep.mubr.bf16.mxu0 0
    %487 = vmatmul.mubr.bf16.gmra.mxu0 %v256
    %v488 = vpop.f32.mrf.mxu0
    %v489 = vadd.f32 0.0, %v488
    %v490 = vpop.f32.mrf.mxu0
    %v491 = vadd.f32 0.0, %v490
    %v492 = vpop.f32.mrf.mxu0
    %v493 = vadd.f32 0.0, %v492
    %v494 = vpop.f32.mrf.mxu0
    %v495 = vadd.f32 0.0, %v494
    %496 = vmatprep.mubr.bf16.mxu0 0
    %497 = vmatmul.mubr.bf16.gmra.mxu0 %v257
    %v498 = vpop.f32.mrf.mxu0
    %v499 = vadd.f32 0.0, %v498
    %v500 = vpop.f32.mrf.mxu0
    %v501 = vadd.f32 0.0, %v500
    %v502 = vpop.f32.mrf.mxu0
    %v503 = vadd.f32 0.0, %v502
    %v504 = vpop.f32.mrf.mxu0
    %v505 = vadd.f32 0.0, %v504
    %506 = vdwg.mxu0
    %507 = vmatprep.subr.bf16.mxu0 0
    %508 = vmatpush1.bf16.msra.mxu0 %v369
    %509 = vmatprep.subr.bf16.mxu0 0
    %510 = vmatpush1.bf16.msra.mxu0 %v366
    %511 = vmatprep.subr.bf16.mxu0 0
    %512 = vmatpush1.bf16.msra.mxu0 %v363
    %513 = vmatprep.subr.bf16.mxu0 0
    %514 = vmatpush1.bf16.msra.mxu0 %v360
    %515 = vmatprep.subr.bf16.mxu0 0
    %516 = vmatpush1.bf16.msra.mxu0 %v357
    %517 = vmatprep.subr.bf16.mxu0 0
    %518 = vmatpush1.bf16.msra.mxu0 %v354
    %519 = vmatprep.subr.bf16.mxu0 0
    %520 = vmatpush1.bf16.msra.mxu0 %v351
    %521 = vmatprep.subr.bf16.mxu0 0
    %522 = vmatpush1.bf16.msra.mxu0 %v348
    %523 = vmatprep.subr.bf16.mxu0 0
    %524 = vmatpush2.bf16.msra.mxu0 0
    %525 = vmatprep.subr.bf16.mxu0 0
    %526 = vmatpush2.bf16.msra.mxu0 0
    %527 = vmatprep.subr.bf16.mxu0 0
    %528 = vmatpush2.bf16.msra.mxu0 0
    %529 = vmatprep.subr.bf16.mxu0 0
    %530 = vmatpush2.bf16.msra.mxu0 0
    %531 = vmatprep.subr.bf16.mxu0 0
    %532 = vmatpush2.bf16.msra.mxu0 0
    %533 = vmatprep.subr.bf16.mxu0 0
    %534 = vmatpush2.bf16.msra.mxu0 0
    %535 = vmatprep.subr.bf16.mxu0 0
    %536 = vmatpush2.bf16.msra.mxu0 0
    %537 = vmatprep.subr.bf16.mxu0 0
    %538 = vmatpush2.bf16.msra.mxu0 0
    %539 = vmatprep.mubr.bf16.mxu0 0
    %540 = vmatmul.mubr.bf16.gmra.mxu0 %v250
    %v541 = vpop.f32.mrf.mxu0
    %v542 = vadd.f32 0.0, %v541
    %v543 = vpop.f32.mrf.mxu0
    %v544 = vpop.f32.mrf.mxu0
    %v545 = vadd.f32 0.0, %v544
    %v546 = vpop.f32.mrf.mxu0
    %547 = vmatprep.mubr.bf16.mxu0 0
    %548 = vmatmul.mubr.bf16.gmra.mxu0 %v251
    %v549 = vpop.f32.mrf.mxu0
    %v550 = vadd.f32 0.0, %v549
    %v551 = vpop.f32.mrf.mxu0
    %v552 = vpop.f32.mrf.mxu0
    %v553 = vadd.f32 0.0, %v552
    %v554 = vpop.f32.mrf.mxu0
    %555 = vmatprep.mubr.bf16.mxu0 0
    %556 = vmatmul.mubr.bf16.gmra.mxu0 %v252
    %v557 = vpop.f32.mrf.mxu0
    %v558 = vadd.f32 0.0, %v557
    %v559 = vpop.f32.mrf.mxu0
    %v560 = vpop.f32.mrf.mxu0
    %v561 = vadd.f32 0.0, %v560
    %v562 = vpop.f32.mrf.mxu0
    %563 = vmatprep.mubr.bf16.mxu0 0
    %564 = vmatmul.mubr.bf16.gmra.mxu0 %v253
    %v565 = vpop.f32.mrf.mxu0
    %v566 = vadd.f32 0.0, %v565
    %v567 = vpop.f32.mrf.mxu0
    %v568 = vpop.f32.mrf.mxu0
    %v569 = vadd.f32 0.0, %v568
    %v570 = vpop.f32.mrf.mxu0
    %571 = vmatprep.mubr.bf16.mxu0 0
    %572 = vmatmul.mubr.bf16.gmra.mxu0 %v254
    %v573 = vpop.f32.mrf.mxu0
    %v574 = vadd.f32 0.0, %v573
    %v575 = vpop.f32.mrf.mxu0
    %v576 = vpop.f32.mrf.mxu0
    %v577 = vadd.f32 0.0, %v576
    %v578 = vpop.f32.mrf.mxu0
    %579 = vmatprep.mubr.bf16.mxu0 0
    %580 = vmatmul.mubr.bf16.gmra.mxu0 %v255
    %v581 = vpop.f32.mrf.mxu0
    %v582 = vadd.f32 0.0, %v581
    %v583 = vpop.f32.mrf.mxu0
    %v584 = vpop.f32.mrf.mxu0
    %v585 = vadd.f32 0.0, %v584
    %v586 = vpop.f32.mrf.mxu0
    %587 = vmatprep.mubr.bf16.mxu0 0
    %588 = vmatmul.mubr.bf16.gmra.mxu0 %v256
    %v589 = vpop.f32.mrf.mxu0
    %v590 = vadd.f32 0.0, %v589
    %v591 = vpop.f32.mrf.mxu0
    %v592 = vpop.f32.mrf.mxu0
    %v593 = vadd.f32 0.0, %v592
    %v594 = vpop.f32.mrf.mxu0
    %595 = vmatprep.mubr.bf16.mxu0 0
    %596 = vmatmul.mubr.bf16.gmra.mxu0 %v257
    %v597 = vpop.f32.mrf.mxu0
    %v598 = vadd.f32 0.0, %v597
    %v599 = vpop.f32.mrf.mxu0
    %v600 = vpop.f32.mrf.mxu0
    %v601 = vadd.f32 0.0, %v600
    %v602 = vpop.f32.mrf.mxu0
    %603 = vdwg.mxu0
    %v620 = vunpack.c.l.b16 %v186
    %v621 = vunpack.c.l.b16 %v187
    %v622 = vunpack.c.l.b16 %v188
    %v623 = vunpack.c.l.b16 %v189
    %v624 = vunpack.c.l.b16 %v190
    %v625 = vunpack.c.l.b16 %v191
    %v626 = vunpack.c.l.b16 %v192
    %v627 = vunpack.c.l.b16 %v193
    %v628 = vunpack.c.l.b16 %v194
    %v629 = vunpack.c.l.b16 %v195
    %v630 = vunpack.c.l.b16 %v196
    %v631 = vunpack.c.l.b16 %v197
    %v632 = vunpack.c.l.b16 %v198
    %v633 = vunpack.c.l.b16 %v199
    %v634 = vunpack.c.l.b16 %v200
    %v635 = vunpack.c.l.b16 %v201
    %v636 = vpack.c.b16 %v621, %v620
    %v637 = vpack.c.b16 %v623, %v622
    %v638 = vpack.c.b16 %v625, %v624
    %v639 = vpack.c.b16 %v627, %v626
    %v640 = vpack.c.b16 %v629, %v628
    %v641 = vpack.c.b16 %v631, %v630
    %v642 = vpack.c.b16 %v633, %v632
    %v643 = vpack.c.b16 %v635, %v634
    %v684 = vunpack.c.l.b16 %v122
    %v685 = vunpack.c.h.b16 %v122
    %v686 = vunpack.c.l.b16 %v123
    %v687 = vunpack.c.l.b16 %v124
    %v688 = vunpack.c.h.b16 %v124
    %v689 = vunpack.c.l.b16 %v125
    %v690 = vunpack.c.l.b16 %v126
    %v691 = vunpack.c.h.b16 %v126
    %v692 = vunpack.c.l.b16 %v127
    %v693 = vunpack.c.l.b16 %v128
    %v694 = vunpack.c.h.b16 %v128
    %v695 = vunpack.c.l.b16 %v129
    %v696 = vunpack.c.l.b16 %v130
    %v697 = vunpack.c.h.b16 %v130
    %v698 = vunpack.c.l.b16 %v131
    %v699 = vunpack.c.l.b16 %v132
    %v700 = vunpack.c.h.b16 %v132
    %v701 = vunpack.c.l.b16 %v133
    %v702 = vunpack.c.l.b16 %v134
    %v703 = vunpack.c.h.b16 %v134
    %v704 = vunpack.c.l.b16 %v135
    %v705 = vunpack.c.l.b16 %v136
    %v706 = vunpack.c.h.b16 %v136
    %v707 = vunpack.c.l.b16 %v137
    %v708 = vunpack.c.l.b16 %v138
    %v709 = vunpack.c.h.b16 %v138
    %v710 = vunpack.c.l.b16 %v139
    %v711 = vunpack.c.l.b16 %v140
    %v712 = vunpack.c.h.b16 %v140
    %v713 = vunpack.c.l.b16 %v141
    %v714 = vunpack.c.l.b16 %v142
    %v715 = vunpack.c.h.b16 %v142
    %v716 = vunpack.c.l.b16 %v143
    %v717 = vunpack.c.l.b16 %v144
    %v718 = vunpack.c.h.b16 %v144
    %v719 = vunpack.c.l.b16 %v145
    %v720 = vunpack.c.l.b16 %v146
    %v721 = vunpack.c.h.b16 %v146
    %v722 = vunpack.c.l.b16 %v147
    %v723 = vunpack.c.l.b16 %v148
    %v724 = vunpack.c.h.b16 %v148
    %v725 = vunpack.c.l.b16 %v149
    %v726 = vunpack.c.l.b16 %v150
    %v727 = vunpack.c.h.b16 %v150
    %v728 = vunpack.c.l.b16 %v151
    %v729 = vunpack.c.l.b16 %v152
    %v730 = vunpack.c.h.b16 %v152
    %v731 = vunpack.c.l.b16 %v153
    %v732 = vpack.c.b16 %v687, %v684
    %v733 = vpack.c.b16 %v688, %v685
    %v734 = vpack.c.b16 %v689, %v686
    %v735 = vpack.c.b16 %v693, %v690
    %v736 = vpack.c.b16 %v694, %v691
    %v737 = vpack.c.b16 %v695, %v692
    %v738 = vpack.c.b16 %v699, %v696
    %v739 = vpack.c.b16 %v700, %v697
    %v740 = vpack.c.b16 %v701, %v698
    %v741 = vpack.c.b16 %v705, %v702
    %v742 = vpack.c.b16 %v706, %v703
    %v743 = vpack.c.b16 %v707, %v704
    %v744 = vpack.c.b16 %v711, %v708
    %v745 = vpack.c.b16 %v712, %v709
    %v746 = vpack.c.b16 %v713, %v710
    %v747 = vpack.c.b16 %v717, %v714
    %v748 = vpack.c.b16 %v718, %v715
    %v749 = vpack.c.b16 %v719, %v716
    %v750 = vpack.c.b16 %v723, %v720
    %v751 = vpack.c.b16 %v724, %v721
    %v752 = vpack.c.b16 %v725, %v722
    %v753 = vpack.c.b16 %v729, %v726
    %v754 = vpack.c.b16 %v730, %v727
    %v755 = vpack.c.b16 %v731, %v728
    %780 = vmatprep.subr.bf16.mxu0 %v754
    %781 = vmatpush1.bf16.msra.mxu0 %v753
    %782 = vmatprep.subr.bf16.mxu0 %v751
    %783 = vmatpush1.bf16.msra.mxu0 %v750
    %784 = vmatprep.subr.bf16.mxu0 %v748
    %785 = vmatpush1.bf16.msra.mxu0 %v747
    %786 = vmatprep.subr.bf16.mxu0 %v745
    %787 = vmatpush1.bf16.msra.mxu0 %v744
    %788 = vmatprep.subr.bf16.mxu0 %v742
    %789 = vmatpush1.bf16.msra.mxu0 %v741
    %790 = vmatprep.subr.bf16.mxu0 %v739
    %791 = vmatpush1.bf16.msra.mxu0 %v738
    %792 = vmatprep.subr.bf16.mxu0 %v736
    %793 = vmatpush1.bf16.msra.mxu0 %v735
    %794 = vmatprep.subr.bf16.mxu0 %v733
    %795 = vmatpush1.bf16.msra.mxu0 %v732
    %796 = vmatprep.subr.bf16.mxu0 0
    %797 = vmatpush2.bf16.msra.mxu0 0
    %798 = vmatprep.subr.bf16.mxu0 0
    %799 = vmatpush2.bf16.msra.mxu0 0
    %800 = vmatprep.subr.bf16.mxu0 0
    %801 = vmatpush2.bf16.msra.mxu0 0
    %802 = vmatprep.subr.bf16.mxu0 0
    %803 = vmatpush2.bf16.msra.mxu0 0
    %804 = vmatprep.subr.bf16.mxu0 0
    %805 = vmatpush2.bf16.msra.mxu0 0
    %806 = vmatprep.subr.bf16.mxu0 0
    %807 = vmatpush2.bf16.msra.mxu0 0
    %808 = vmatprep.subr.bf16.mxu0 0
    %809 = vmatpush2.bf16.msra.mxu0 0
    %810 = vmatprep.subr.bf16.mxu0 0
    %811 = vmatpush2.bf16.msra.mxu0 0
    %812 = vmatprep.mubr.bf16.mxu0 0
    %813 = vmatmul.mubr.bf16.gmra.mxu0 %v636
    %v814 = vpop.f32.mrf.mxu0
    %v815 = vadd.f32 %v429, %v814
    %v816 = vpop.f32.mrf.mxu0
    %v817 = vadd.f32 %v431, %v816
    %v818 = vpop.f32.mrf.mxu0
    %v819 = vadd.f32 %v433, %v818
    %v820 = vpop.f32.mrf.mxu0
    %v821 = vadd.f32 %v435, %v820
    %822 = vmatprep.mubr.bf16.mxu0 0
    %823 = vmatmul.mubr.bf16.gmra.mxu0 %v637
    %v824 = vpop.f32.mrf.mxu0
    %v825 = vadd.f32 %v439, %v824
    %v826 = vpop.f32.mrf.mxu0
    %v827 = vadd.f32 %v441, %v826
    %v828 = vpop.f32.mrf.mxu0
    %v829 = vadd.f32 %v443, %v828
    %v830 = vpop.f32.mrf.mxu0
    %v831 = vadd.f32 %v445, %v830
    %832 = vmatprep.mubr.bf16.mxu0 0
    %833 = vmatmul.mubr.bf16.gmra.mxu0 %v638
    %v834 = vpop.f32.mrf.mxu0
    %v835 = vadd.f32 %v449, %v834
    %v836 = vpop.f32.mrf.mxu0
    %v837 = vadd.f32 %v451, %v836
    %v838 = vpop.f32.mrf.mxu0
    %v839 = vadd.f32 %v453, %v838
    %v840 = vpop.f32.mrf.mxu0
    %v841 = vadd.f32 %v455, %v840
    %842 = vmatprep.mubr.bf16.mxu0 0
    %843 = vmatmul.mubr.bf16.gmra.mxu0 %v639
    %v844 = vpop.f32.mrf.mxu0
    %v845 = vadd.f32 %v459, %v844
    %v846 = vpop.f32.mrf.mxu0
    %v847 = vadd.f32 %v461, %v846
    %v848 = vpop.f32.mrf.mxu0
    %v849 = vadd.f32 %v463, %v848
    %v850 = vpop.f32.mrf.mxu0
    %v851 = vadd.f32 %v465, %v850
    %852 = vmatprep.mubr.bf16.mxu0 0
    %853 = vmatmul.mubr.bf16.gmra.mxu0 %v640
    %v854 = vpop.f32.mrf.mxu0
    %v855 = vadd.f32 %v469, %v854
    %v856 = vpop.f32.mrf.mxu0
    %v857 = vadd.f32 %v471, %v856
    %v858 = vpop.f32.mrf.mxu0
    %v859 = vadd.f32 %v473, %v858
    %v860 = vpop.f32.mrf.mxu0
    %v861 = vadd.f32 %v475, %v860
    %862 = vmatprep.mubr.bf16.mxu0 0
    %863 = vmatmul.mubr.bf16.gmra.mxu0 %v641
    %v864 = vpop.f32.mrf.mxu0
    %v865 = vadd.f32 %v479, %v864
    %v866 = vpop.f32.mrf.mxu0
    %v867 = vadd.f32 %v481, %v866
    %v868 = vpop.f32.mrf.mxu0
    %v869 = vadd.f32 %v483, %v868
    %v870 = vpop.f32.mrf.mxu0
    %v871 = vadd.f32 %v485, %v870
    %872 = vmatprep.mubr.bf16.mxu0 0
    %873 = vmatmul.mubr.bf16.gmra.mxu0 %v642
    %v874 = vpop.f32.mrf.mxu0
    %v875 = vadd.f32 %v489, %v874
    %v876 = vpop.f32.mrf.mxu0
    %v877 = vadd.f32 %v491, %v876
    %v878 = vpop.f32.mrf.mxu0
    %v879 = vadd.f32 %v493, %v878
    %v880 = vpop.f32.mrf.mxu0
    %v881 = vadd.f32 %v495, %v880
    %882 = vmatprep.mubr.bf16.mxu0 0
    %883 = vmatmul.mubr.bf16.gmra.mxu0 %v643
    %v884 = vpop.f32.mrf.mxu0
    %v885 = vadd.f32 %v499, %v884
    %v886 = vpop.f32.mrf.mxu0
    %v887 = vadd.f32 %v501, %v886
    %v888 = vpop.f32.mrf.mxu0
    %v889 = vadd.f32 %v503, %v888
    %v890 = vpop.f32.mrf.mxu0
    %v891 = vadd.f32 %v505, %v890
    %892 = vdwg.mxu0
    %893 = vmatprep.subr.bf16.mxu0 0
    %894 = vmatpush1.bf16.msra.mxu0 %v755
    %895 = vmatprep.subr.bf16.mxu0 0
    %896 = vmatpush1.bf16.msra.mxu0 %v752
    %897 = vmatprep.subr.bf16.mxu0 0
    %898 = vmatpush1.bf16.msra.mxu0 %v749
    %899 = vmatprep.subr.bf16.mxu0 0
    %900 = vmatpush1.bf16.msra.mxu0 %v746
    %901 = vmatprep.subr.bf16.mxu0 0
    %902 = vmatpush1.bf16.msra.mxu0 %v743
    %903 = vmatprep.subr.bf16.mxu0 0
    %904 = vmatpush1.bf16.msra.mxu0 %v740
    %905 = vmatprep.subr.bf16.mxu0 0
    %906 = vmatpush1.bf16.msra.mxu0 %v737
    %907 = vmatprep.subr.bf16.mxu0 0
    %908 = vmatpush1.bf16.msra.mxu0 %v734
    %909 = vmatprep.subr.bf16.mxu0 0
    %910 = vmatpush2.bf16.msra.mxu0 0
    %911 = vmatprep.subr.bf16.mxu0 0
    %912 = vmatpush2.bf16.msra.mxu0 0
    %913 = vmatprep.subr.bf16.mxu0 0
    %914 = vmatpush2.bf16.msra.mxu0 0
    %915 = vmatprep.subr.bf16.mxu0 0
    %916 = vmatpush2.bf16.msra.mxu0 0
    %917 = vmatprep.subr.bf16.mxu0 0
    %918 = vmatpush2.bf16.msra.mxu0 0
    %919 = vmatprep.subr.bf16.mxu0 0
    %920 = vmatpush2.bf16.msra.mxu0 0
    %921 = vmatprep.subr.bf16.mxu0 0
    %922 = vmatpush2.bf16.msra.mxu0 0
    %923 = vmatprep.subr.bf16.mxu0 0
    %924 = vmatpush2.bf16.msra.mxu0 0
    %925 = vmatprep.mubr.bf16.mxu0 0
    %926 = vmatmul.mubr.bf16.gmra.mxu0 %v636
    %v927 = vpop.f32.mrf.mxu0
    %v928 = vadd.f32 %v542, %v927
    %v929 = vpop.f32.mrf.mxu0
    %v930 = vpop.f32.mrf.mxu0
    %v931 = vadd.f32 %v545, %v930
    %v932 = vpop.f32.mrf.mxu0
    %933 = vmatprep.mubr.bf16.mxu0 0
    %934 = vmatmul.mubr.bf16.gmra.mxu0 %v637
    %v935 = vpop.f32.mrf.mxu0
    %v936 = vadd.f32 %v550, %v935
    %v937 = vpop.f32.mrf.mxu0
    %v938 = vpop.f32.mrf.mxu0
    %v939 = vadd.f32 %v553, %v938
    %v940 = vpop.f32.mrf.mxu0
    %941 = vmatprep.mubr.bf16.mxu0 0
    %942 = vmatmul.mubr.bf16.gmra.mxu0 %v638
    %v943 = vpop.f32.mrf.mxu0
    %v944 = vadd.f32 %v558, %v943
    %v945 = vpop.f32.mrf.mxu0
    %v946 = vpop.f32.mrf.mxu0
    %v947 = vadd.f32 %v561, %v946
    %v948 = vpop.f32.mrf.mxu0
    %949 = vmatprep.mubr.bf16.mxu0 0
    %950 = vmatmul.mubr.bf16.gmra.mxu0 %v639
    %v951 = vpop.f32.mrf.mxu0
    %v952 = vadd.f32 %v566, %v951
    %v953 = vpop.f32.mrf.mxu0
    %v954 = vpop.f32.mrf.mxu0
    %v955 = vadd.f32 %v569, %v954
    %v956 = vpop.f32.mrf.mxu0
    %957 = vmatprep.mubr.bf16.mxu0 0
    %958 = vmatmul.mubr.bf16.gmra.mxu0 %v640
    %v959 = vpop.f32.mrf.mxu0
    %v960 = vadd.f32 %v574, %v959
    %v961 = vpop.f32.mrf.mxu0
    %v962 = vpop.f32.mrf.mxu0
    %v963 = vadd.f32 %v577, %v962
    %v964 = vpop.f32.mrf.mxu0
    %965 = vmatprep.mubr.bf16.mxu0 0
    %966 = vmatmul.mubr.bf16.gmra.mxu0 %v641
    %v967 = vpop.f32.mrf.mxu0
    %v968 = vadd.f32 %v582, %v967
    %v969 = vpop.f32.mrf.mxu0
    %v970 = vpop.f32.mrf.mxu0
    %v971 = vadd.f32 %v585, %v970
    %v972 = vpop.f32.mrf.mxu0
    %973 = vmatprep.mubr.bf16.mxu0 0
    %974 = vmatmul.mubr.bf16.gmra.mxu0 %v642
    %v975 = vpop.f32.mrf.mxu0
    %v976 = vadd.f32 %v590, %v975
    %v977 = vpop.f32.mrf.mxu0
    %v978 = vpop.f32.mrf.mxu0
    %v979 = vadd.f32 %v593, %v978
    %v980 = vpop.f32.mrf.mxu0
    %981 = vmatprep.mubr.bf16.mxu0 0
    %982 = vmatmul.mubr.bf16.gmra.mxu0 %v643
    %v983 = vpop.f32.mrf.mxu0
    %v984 = vadd.f32 %v598, %v983
    %v985 = vpop.f32.mrf.mxu0
    %v986 = vpop.f32.mrf.mxu0
    %v987 = vadd.f32 %v601, %v986
    %v988 = vpop.f32.mrf.mxu0
    %989 = vdwg.mxu0
    %v990 = vld [vmem:[%s6] sm:$0x7]
    %v992 = vlaneseq
    %v993 = vshrl.u32 %v992, 7
    %v994 = vsub.s32 0, %v993
    %v995 = vrot.slane %v990, %v994
    %v996 = vlaneseq
    %v997 = vshrl.u32 %v996, 7
    %v998 = vsub.s32 1, %v997
    %v999 = vrot.slane %v990, %v998
    %v1000 = vlaneseq
    %v1001 = vshrl.u32 %v1000, 7
    %v1002 = vsub.s32 2, %v1001
    %v1003 = vrot.slane %v990, %v1002
    %v1007 = vadd.f32 %v815, %v995
    %v1008 = vadd.f32 %v817, %v999
    %v1009 = vadd.f32 %v928, %v1003
    %v1010 = vadd.f32 %v819, %v995
    %v1011 = vadd.f32 %v821, %v999
    %v1012 = vadd.f32 %v931, %v1003
    %v1013 = vadd.f32 %v825, %v995
    %v1014 = vadd.f32 %v827, %v999
    %v1015 = vadd.f32 %v936, %v1003
    %v1016 = vadd.f32 %v829, %v995
    %v1017 = vadd.f32 %v831, %v999
    %v1018 = vadd.f32 %v939, %v1003
    %v1019 = vadd.f32 %v835, %v995
    %v1020 = vadd.f32 %v837, %v999
    %v1021 = vadd.f32 %v944, %v1003
    %v1022 = vadd.f32 %v839, %v995
    %v1023 = vadd.f32 %v841, %v999
    %v1024 = vadd.f32 %v947, %v1003
    %v1025 = vadd.f32 %v845, %v995
    %v1026 = vadd.f32 %v847, %v999
    %v1027 = vadd.f32 %v952, %v1003
    %v1028 = vadd.f32 %v849, %v995
    %v1029 = vadd.f32 %v851, %v999
    %v1030 = vadd.f32 %v955, %v1003
    %v1031 = vadd.f32 %v855, %v995
    %v1032 = vadd.f32 %v857, %v999
    %v1033 = vadd.f32 %v960, %v1003
    %v1034 = vadd.f32 %v859, %v995
    %v1035 = vadd.f32 %v861, %v999
    %v1036 = vadd.f32 %v963, %v1003
    %v1037 = vadd.f32 %v865, %v995
    %v1038 = vadd.f32 %v867, %v999
    %v1039 = vadd.f32 %v968, %v1003
    %v1040 = vadd.f32 %v869, %v995
    %v1041 = vadd.f32 %v871, %v999
    %v1042 = vadd.f32 %v971, %v1003
    %v1043 = vadd.f32 %v875, %v995
    %v1044 = vadd.f32 %v877, %v999
    %v1045 = vadd.f32 %v976, %v1003
    %v1046 = vadd.f32 %v879, %v995
    %v1047 = vadd.f32 %v881, %v999
    %v1048 = vadd.f32 %v979, %v1003
    %v1049 = vadd.f32 %v885, %v995
    %v1050 = vadd.f32 %v887, %v999
    %v1051 = vadd.f32 %v984, %v1003
    %v1052 = vadd.f32 %v889, %v995
    %v1053 = vadd.f32 %v891, %v999
    %v1054 = vadd.f32 %v987, %v1003
    %1055 = vst [vmem:[#allocation2] sm:$0xff] %v1007
    %1056 = vst [vmem:[#allocation2 + $0x8] sm:$0xff] %v1008
    %1057 = vst [vmem:[#allocation2 + $0x10] sm:$0xff] %v1009
    %1058 = vst [vmem:[#allocation2 + $0x18] sm:$0xff] %v1010
    %1059 = vst [vmem:[#allocation2 + $0x20] sm:$0xff] %v1011
    %1060 = vst [vmem:[#allocation2 + $0x28] sm:$0xff] %v1012
    %1061 = vst [vmem:[#allocation2 + $0x30] sm:$0xff] %v1013
    %1062 = vst [vmem:[#allocation2 + $0x38] sm:$0xff] %v1014
    %1063 = vst [vmem:[#allocation2 + $0x40] sm:$0xff] %v1015
    %1064 = vst [vmem:[#allocation2 + $0x48] sm:$0xff] %v1016
    %1065 = vst [vmem:[#allocation2 + $0x50] sm:$0xff] %v1017
    %1066 = vst [vmem:[#allocation2 + $0x58] sm:$0xff] %v1018
    %1067 = vst [vmem:[#allocation2 + $0x60] sm:$0xff] %v1019
    %1068 = vst [vmem:[#allocation2 + $0x68] sm:$0xff] %v1020
    %1069 = vst [vmem:[#allocation2 + $0x70] sm:$0xff] %v1021
    %1070 = vst [vmem:[#allocation2 + $0x78] sm:$0xff] %v1022
    %1071 = vst [vmem:[#allocation2 + $0x80] sm:$0xff] %v1023
    %1072 = vst [vmem:[#allocation2 + $0x88] sm:$0xff] %v1024
    %1073 = vst [vmem:[#allocation2 + $0x90] sm:$0xff] %v1025
    %1074 = vst [vmem:[#allocation2 + $0x98] sm:$0xff] %v1026
    %1075 = vst [vmem:[#allocation2 + $0xa0] sm:$0xff] %v1027
    %1076 = vst [vmem:[#allocation2 + $0xa8] sm:$0xff] %v1028
    %1077 = vst [vmem:[#allocation2 + $0xb0] sm:$0xff] %v1029
    %1078 = vst [vmem:[#allocation2 + $0xb8] sm:$0xff] %v1030
    %1079 = vst [vmem:[#allocation2 + $0xc0] sm:$0xff] %v1031
    %1080 = vst [vmem:[#allocation2 + $0xc8] sm:$0xff] %v1032
    %1081 = vst [vmem:[#allocation2 + $0xd0] sm:$0xff] %v1033
    %1082 = vst [vmem:[#allocation2 + $0xd8] sm:$0xff] %v1034
    %1083 = vst [vmem:[#allocation2 + $0xe0] sm:$0xff] %v1035
    %1084 = vst [vmem:[#allocation2 + $0xe8] sm:$0xff] %v1036
    %1085 = vst [vmem:[#allocation2 + $0xf0] sm:$0xff] %v1037
    %1086 = vst [vmem:[#allocation2 + $0xf8] sm:$0xff] %v1038
    %1087 = vst [vmem:[#allocation2 + $0x100] sm:$0xff] %v1039
    %1088 = vst [vmem:[#allocation2 + $0x108] sm:$0xff] %v1040
    %1089 = vst [vmem:[#allocation2 + $0x110] sm:$0xff] %v1041
    %1090 = vst [vmem:[#allocation2 + $0x118] sm:$0xff] %v1042
    %1091 = vst [vmem:[#allocation2 + $0x120] sm:$0xff] %v1043
    %1092 = vst [vmem:[#allocation2 + $0x128] sm:$0xff] %v1044
    %1093 = vst [vmem:[#allocation2 + $0x130] sm:$0xff] %v1045
    %1094 = vst [vmem:[#allocation2 + $0x138] sm:$0xff] %v1046
    %1095 = vst [vmem:[#allocation2 + $0x140] sm:$0xff] %v1047
    %1096 = vst [vmem:[#allocation2 + $0x148] sm:$0xff] %v1048
    %1097 = vst [vmem:[#allocation2 + $0x150] sm:$0xff] %v1049
    %1098 = vst [vmem:[#allocation2 + $0x158] sm:$0xff] %v1050
    %1099 = vst [vmem:[#allocation2 + $0x160] sm:$0xff] %v1051
    %1100 = vst [vmem:[#allocation2 + $0x168] sm:$0xff] %v1052
    %1101 = vst [vmem:[#allocation2 + $0x170] sm:$0xff] %v1053
    %1102 = vst [vmem:[#allocation2 + $0x178] sm:$0xff] %v1054
    %s1103 = scalar_lea.vmem %s4, 384
    %v1104 = vld [vmem:[%s1103] sm:$0xff]
    %v1105 = vld [vmem:[%s1103 + $0x8] sm:$0xf]
    %v1106 = vld [vmem:[%s1103 + $0xc] sm:$0xff]
    %v1107 = vld [vmem:[%s1103 + $0x14] sm:$0xf]
    %v1108 = vld [vmem:[%s1103 + $0x18] sm:$0xff]
    %v1109 = vld [vmem:[%s1103 + $0x20] sm:$0xf]
    %v1110 = vld [vmem:[%s1103 + $0x24] sm:$0xff]
    %v1111 = vld [vmem:[%s1103 + $0x2c] sm:$0xf]
    %v1112 = vld [vmem:[%s1103 + $0x30] sm:$0xff]
    %v1113 = vld [vmem:[%s1103 + $0x38] sm:$0xf]
    %v1114 = vld [vmem:[%s1103 + $0x3c] sm:$0xff]
    %v1115 = vld [vmem:[%s1103 + $0x44] sm:$0xf]
    %v1116 = vld [vmem:[%s1103 + $0x48] sm:$0xff]
    %v1117 = vld [vmem:[%s1103 + $0x50] sm:$0xf]
    %v1118 = vld [vmem:[%s1103 + $0x54] sm:$0xff]
    %v1119 = vld [vmem:[%s1103 + $0x5c] sm:$0xf]
    %v1120 = vld [vmem:[%s1103 + $0x60] sm:$0xff]
    %v1121 = vld [vmem:[%s1103 + $0x68] sm:$0xf]
    %v1122 = vld [vmem:[%s1103 + $0x6c] sm:$0xff]
    %v1123 = vld [vmem:[%s1103 + $0x74] sm:$0xf]
    %v1124 = vld [vmem:[%s1103 + $0x78] sm:$0xff]
    %v1125 = vld [vmem:[%s1103 + $0x80] sm:$0xf]
    %v1126 = vld [vmem:[%s1103 + $0x84] sm:$0xff]
    %v1127 = vld [vmem:[%s1103 + $0x8c] sm:$0xf]
    %v1128 = vld [vmem:[%s1103 + $0x90] sm:$0xff]
    %v1129 = vld [vmem:[%s1103 + $0x98] sm:$0xf]
    %v1130 = vld [vmem:[%s1103 + $0x9c] sm:$0xff]
    %v1131 = vld [vmem:[%s1103 + $0xa4] sm:$0xf]
    %v1132 = vld [vmem:[%s1103 + $0xa8] sm:$0xff]
    %v1133 = vld [vmem:[%s1103 + $0xb0] sm:$0xf]
    %v1134 = vld [vmem:[%s1103 + $0xb4] sm:$0xff]
    %v1135 = vld [vmem:[%s1103 + $0xbc] sm:$0xf]
    %v1136 = vld [vmem:[%s1103 + $0xc0] sm:$0xff]
    %v1137 = vld [vmem:[%s1103 + $0xc8] sm:$0xf]
    %v1138 = vld [vmem:[%s1103 + $0xcc] sm:$0xff]
    %v1139 = vld [vmem:[%s1103 + $0xd4] sm:$0xf]
    %v1140 = vld [vmem:[%s1103 + $0xd8] sm:$0xff]
    %v1141 = vld [vmem:[%s1103 + $0xe0] sm:$0xf]
    %v1142 = vld [vmem:[%s1103 + $0xe4] sm:$0xff]
    %v1143 = vld [vmem:[%s1103 + $0xec] sm:$0xf]
    %v1144 = vld [vmem:[%s1103 + $0xf0] sm:$0xff]
    %v1145 = vld [vmem:[%s1103 + $0xf8] sm:$0xf]
    %v1146 = vld [vmem:[%s1103 + $0xfc] sm:$0xff]
    %v1147 = vld [vmem:[%s1103 + $0x104] sm:$0xf]
    %v1148 = vld [vmem:[%s1103 + $0x108] sm:$0xff]
    %v1149 = vld [vmem:[%s1103 + $0x110] sm:$0xf]
    %v1150 = vld [vmem:[%s1103 + $0x114] sm:$0xff]
    %v1151 = vld [vmem:[%s1103 + $0x11c] sm:$0xf]
    %v1152 = vld [vmem:[%s1103 + $0x120] sm:$0xff]
    %v1153 = vld [vmem:[%s1103 + $0x128] sm:$0xf]
    %v1154 = vld [vmem:[%s1103 + $0x12c] sm:$0xff]
    %v1155 = vld [vmem:[%s1103 + $0x134] sm:$0xf]
    %v1156 = vld [vmem:[%s1103 + $0x138] sm:$0xff]
    %v1157 = vld [vmem:[%s1103 + $0x140] sm:$0xf]
    %v1158 = vld [vmem:[%s1103 + $0x144] sm:$0xff]
    %v1159 = vld [vmem:[%s1103 + $0x14c] sm:$0xf]
    %v1160 = vld [vmem:[%s1103 + $0x150] sm:$0xff]
    %v1161 = vld [vmem:[%s1103 + $0x158] sm:$0xf]
    %v1162 = vld [vmem:[%s1103 + $0x15c] sm:$0xff]
    %v1163 = vld [vmem:[%s1103 + $0x164] sm:$0xf]
    %v1164 = vld [vmem:[%s1103 + $0x168] sm:$0xff]
    %v1165 = vld [vmem:[%s1103 + $0x170] sm:$0xf]
    %v1166 = vld [vmem:[%s1103 + $0x174] sm:$0xff]
    %v1167 = vld [vmem:[%s1103 + $0x17c] sm:$0xf]
    %v1168 = vld [vmem:[%s101] sm:$0xf]
    %v1169 = vld [vmem:[%s101 + $0x4] sm:$0xf]
    %v1170 = vld [vmem:[%s101 + $0x8] sm:$0xf]
    %v1171 = vld [vmem:[%s101 + $0xc] sm:$0xf]
    %v1172 = vld [vmem:[%s101 + $0x10] sm:$0xf]
    %v1173 = vld [vmem:[%s101 + $0x14] sm:$0xf]
    %v1174 = vld [vmem:[%s101 + $0x18] sm:$0xf]
    %v1175 = vld [vmem:[%s101 + $0x1c] sm:$0xf]
    %v1176 = vld [vmem:[%s101 + $0x20] sm:$0xf]
    %v1177 = vld [vmem:[%s101 + $0x24] sm:$0xf]
    %v1178 = vld [vmem:[%s101 + $0x28] sm:$0xf]
    %v1179 = vld [vmem:[%s101 + $0x2c] sm:$0xf]
    %v1180 = vld [vmem:[%s101 + $0x30] sm:$0xf]
    %v1181 = vld [vmem:[%s101 + $0x34] sm:$0xf]
    %v1182 = vld [vmem:[%s101 + $0x38] sm:$0xf]
    %v1183 = vld [vmem:[%s101 + $0x3c] sm:$0xf]
    %v1184 = vld [vmem:[%s110] sm:$0xf]
    %v1185 = vld [vmem:[%s110 + $0x4] sm:$0xf]
    %v1186 = vld [vmem:[%s110 + $0x8] sm:$0xf]
    %v1187 = vld [vmem:[%s110 + $0xc] sm:$0xf]
    %v1188 = vld [vmem:[%s110 + $0x10] sm:$0xf]
    %v1189 = vld [vmem:[%s110 + $0x14] sm:$0xf]
    %v1190 = vld [vmem:[%s110 + $0x18] sm:$0xf]
    %v1191 = vld [vmem:[%s110 + $0x1c] sm:$0xf]
    %v1192 = vld [vmem:[%s110 + $0x20] sm:$0xf]
    %v1193 = vld [vmem:[%s110 + $0x24] sm:$0xf]
    %v1194 = vld [vmem:[%s110 + $0x28] sm:$0xf]
    %v1195 = vld [vmem:[%s110 + $0x2c] sm:$0xf]
    %v1196 = vld [vmem:[%s110 + $0x30] sm:$0xf]
    %v1197 = vld [vmem:[%s110 + $0x34] sm:$0xf]
    %v1198 = vld [vmem:[%s110 + $0x38] sm:$0xf]
    %v1199 = vld [vmem:[%s110 + $0x3c] sm:$0xf]
    %v1216 = vunpack.c.l.b16 %v1184
    %v1217 = vunpack.c.l.b16 %v1185
    %v1218 = vunpack.c.l.b16 %v1186
    %v1219 = vunpack.c.l.b16 %v1187
    %v1220 = vunpack.c.l.b16 %v1188
    %v1221 = vunpack.c.l.b16 %v1189
    %v1222 = vunpack.c.l.b16 %v1190
    %v1223 = vunpack.c.l.b16 %v1191
    %v1224 = vunpack.c.l.b16 %v1192
    %v1225 = vunpack.c.l.b16 %v1193
    %v1226 = vunpack.c.l.b16 %v1194
    %v1227 = vunpack.c.l.b16 %v1195
    %v1228 = vunpack.c.l.b16 %v1196
    %v1229 = vunpack.c.l.b16 %v1197
    %v1230 = vunpack.c.l.b16 %v1198
    %v1231 = vunpack.c.l.b16 %v1199
    %v1232 = vpack.c.b16 %v1217, %v1216
    %v1233 = vpack.c.b16 %v1219, %v1218
    %v1234 = vpack.c.b16 %v1221, %v1220
    %v1235 = vpack.c.b16 %v1223, %v1222
    %v1236 = vpack.c.b16 %v1225, %v1224
    %v1237 = vpack.c.b16 %v1227, %v1226
    %v1238 = vpack.c.b16 %v1229, %v1228
    %v1239 = vpack.c.b16 %v1231, %v1230
    %v1280 = vunpack.c.l.b16 %v1136
    %v1281 = vunpack.c.h.b16 %v1136
    %v1282 = vunpack.c.l.b16 %v1137
    %v1283 = vunpack.c.l.b16 %v1138
    %v1284 = vunpack.c.h.b16 %v1138
    %v1285 = vunpack.c.l.b16 %v1139
    %v1286 = vunpack.c.l.b16 %v1140
    %v1287 = vunpack.c.h.b16 %v1140
    %v1288 = vunpack.c.l.b16 %v1141
    %v1289 = vunpack.c.l.b16 %v1142
    %v1290 = vunpack.c.h.b16 %v1142
    %v1291 = vunpack.c.l.b16 %v1143
    %v1292 = vunpack.c.l.b16 %v1144
    %v1293 = vunpack.c.h.b16 %v1144
    %v1294 = vunpack.c.l.b16 %v1145
    %v1295 = vunpack.c.l.b16 %v1146
    %v1296 = vunpack.c.h.b16 %v1146
    %v1297 = vunpack.c.l.b16 %v1147
    %v1298 = vunpack.c.l.b16 %v1148
    %v1299 = vunpack.c.h.b16 %v1148
    %v1300 = vunpack.c.l.b16 %v1149
    %v1301 = vunpack.c.l.b16 %v1150
    %v1302 = vunpack.c.h.b16 %v1150
    %v1303 = vunpack.c.l.b16 %v1151
    %v1304 = vunpack.c.l.b16 %v1152
    %v1305 = vunpack.c.h.b16 %v1152
    %v1306 = vunpack.c.l.b16 %v1153
    %v1307 = vunpack.c.l.b16 %v1154
    %v1308 = vunpack.c.h.b16 %v1154
    %v1309 = vunpack.c.l.b16 %v1155
    %v1310 = vunpack.c.l.b16 %v1156
    %v1311 = vunpack.c.h.b16 %v1156
    %v1312 = vunpack.c.l.b16 %v1157
    %v1313 = vunpack.c.l.b16 %v1158
    %v1314 = vunpack.c.h.b16 %v1158
    %v1315 = vunpack.c.l.b16 %v1159
    %v1316 = vunpack.c.l.b16 %v1160
    %v1317 = vunpack.c.h.b16 %v1160
    %v1318 = vunpack.c.l.b16 %v1161
    %v1319 = vunpack.c.l.b16 %v1162
    %v1320 = vunpack.c.h.b16 %v1162
    %v1321 = vunpack.c.l.b16 %v1163
    %v1322 = vunpack.c.l.b16 %v1164
    %v1323 = vunpack.c.h.b16 %v1164
    %v1324 = vunpack.c.l.b16 %v1165
    %v1325 = vunpack.c.l.b16 %v1166
    %v1326 = vunpack.c.h.b16 %v1166
    %v1327 = vunpack.c.l.b16 %v1167
    %v1328 = vpack.c.b16 %v1283, %v1280
    %v1329 = vpack.c.b16 %v1284, %v1281
    %v1330 = vpack.c.b16 %v1285, %v1282
    %v1331 = vpack.c.b16 %v1289, %v1286
    %v1332 = vpack.c.b16 %v1290, %v1287
    %v1333 = vpack.c.b16 %v1291, %v1288
    %v1334 = vpack.c.b16 %v1295, %v1292
    %v1335 = vpack.c.b16 %v1296, %v1293
    %v1336 = vpack.c.b16 %v1297, %v1294
    %v1337 = vpack.c.b16 %v1301, %v1298
    %v1338 = vpack.c.b16 %v1302, %v1299
    %v1339 = vpack.c.b16 %v1303, %v1300
    %v1340 = vpack.c.b16 %v1307, %v1304
    %v1341 = vpack.c.b16 %v1308, %v1305
    %v1342 = vpack.c.b16 %v1309, %v1306
    %v1343 = vpack.c.b16 %v1313, %v1310
    %v1344 = vpack.c.b16 %v1314, %v1311
    %v1345 = vpack.c.b16 %v1315, %v1312
    %v1346 = vpack.c.b16 %v1319, %v1316
    %v1347 = vpack.c.b16 %v1320, %v1317
    %v1348 = vpack.c.b16 %v1321, %v1318
    %v1349 = vpack.c.b16 %v1325, %v1322
    %v1350 = vpack.c.b16 %v1326, %v1323
    %v1351 = vpack.c.b16 %v1327, %v1324
    %1376 = vmatprep.subr.bf16.mxu0 %v1350
    %1377 = vmatpush1.bf16.msra.mxu0 %v1349
    %1378 = vmatprep.subr.bf16.mxu0 %v1347
    %1379 = vmatpush1.bf16.msra.mxu0 %v1346
    %1380 = vmatprep.subr.bf16.mxu0 %v1344
    %1381 = vmatpush1.bf16.msra.mxu0 %v1343
    %1382 = vmatprep.subr.bf16.mxu0 %v1341
    %1383 = vmatpush1.bf16.msra.mxu0 %v1340
    %1384 = vmatprep.subr.bf16.mxu0 %v1338
    %1385 = vmatpush1.bf16.msra.mxu0 %v1337
    %1386 = vmatprep.subr.bf16.mxu0 %v1335
    %1387 = vmatpush1.bf16.msra.mxu0 %v1334
    %1388 = vmatprep.subr.bf16.mxu0 %v1332
    %1389 = vmatpush1.bf16.msra.mxu0 %v1331
    %1390 = vmatprep.subr.bf16.mxu0 %v1329
    %1391 = vmatpush1.bf16.msra.mxu0 %v1328
    %1392 = vmatprep.subr.bf16.mxu0 0
    %1393 = vmatpush2.bf16.msra.mxu0 0
    %1394 = vmatprep.subr.bf16.mxu0 0
    %1395 = vmatpush2.bf16.msra.mxu0 0
    %1396 = vmatprep.subr.bf16.mxu0 0
    %1397 = vmatpush2.bf16.msra.mxu0 0
    %1398 = vmatprep.subr.bf16.mxu0 0
    %1399 = vmatpush2.bf16.msra.mxu0 0
    %1400 = vmatprep.subr.bf16.mxu0 0
    %1401 = vmatpush2.bf16.msra.mxu0 0
    %1402 = vmatprep.subr.bf16.mxu0 0
    %1403 = vmatpush2.bf16.msra.mxu0 0
    %1404 = vmatprep.subr.bf16.mxu0 0
    %1405 = vmatpush2.bf16.msra.mxu0 0
    %1406 = vmatprep.subr.bf16.mxu0 0
    %1407 = vmatpush2.bf16.msra.mxu0 0
    %1408 = vmatprep.mubr.bf16.mxu0 0
    %1409 = vmatmul.mubr.bf16.gmra.mxu0 %v1232
    %v1410 = vpop.f32.mrf.mxu0
    %v1411 = vadd.f32 0.0, %v1410
    %v1412 = vpop.f32.mrf.mxu0
    %v1413 = vadd.f32 0.0, %v1412
    %v1414 = vpop.f32.mrf.mxu0
    %v1415 = vadd.f32 0.0, %v1414
    %v1416 = vpop.f32.mrf.mxu0
    %v1417 = vadd.f32 0.0, %v1416
    %1418 = vmatprep.mubr.bf16.mxu0 0
    %1419 = vmatmul.mubr.bf16.gmra.mxu0 %v1233
    %v1420 = vpop.f32.mrf.mxu0
    %v1421 = vadd.f32 0.0, %v1420
    %v1422 = vpop.f32.mrf.mxu0
    %v1423 = vadd.f32 0.0, %v1422
    %v1424 = vpop.f32.mrf.mxu0
    %v1425 = vadd.f32 0.0, %v1424
    %v1426 = vpop.f32.mrf.mxu0
    %v1427 = vadd.f32 0.0, %v1426
    %1428 = vmatprep.mubr.bf16.mxu0 0
    %1429 = vmatmul.mubr.bf16.gmra.mxu0 %v1234
    %v1430 = vpop.f32.mrf.mxu0
    %v1431 = vadd.f32 0.0, %v1430
    %v1432 = vpop.f32.mrf.mxu0
    %v1433 = vadd.f32 0.0, %v1432
    %v1434 = vpop.f32.mrf.mxu0
    %v1435 = vadd.f32 0.0, %v1434
    %v1436 = vpop.f32.mrf.mxu0
    %v1437 = vadd.f32 0.0, %v1436
    %1438 = vmatprep.mubr.bf16.mxu0 0
    %1439 = vmatmul.mubr.bf16.gmra.mxu0 %v1235
    %v1440 = vpop.f32.mrf.mxu0
    %v1441 = vadd.f32 0.0, %v1440
    %v1442 = vpop.f32.mrf.mxu0
    %v1443 = vadd.f32 0.0, %v1442
    %v1444 = vpop.f32.mrf.mxu0
    %v1445 = vadd.f32 0.0, %v1444
    %v1446 = vpop.f32.mrf.mxu0
    %v1447 = vadd.f32 0.0, %v1446
    %1448 = vmatprep.mubr.bf16.mxu0 0
    %1449 = vmatmul.mubr.bf16.gmra.mxu0 %v1236
    %v1450 = vpop.f32.mrf.mxu0
    %v1451 = vadd.f32 0.0, %v1450
    %v1452 = vpop.f32.mrf.mxu0
    %v1453 = vadd.f32 0.0, %v1452
    %v1454 = vpop.f32.mrf.mxu0
    %v1455 = vadd.f32 0.0, %v1454
    %v1456 = vpop.f32.mrf.mxu0
    %v1457 = vadd.f32 0.0, %v1456
    %1458 = vmatprep.mubr.bf16.mxu0 0
    %1459 = vmatmul.mubr.bf16.gmra.mxu0 %v1237
    %v1460 = vpop.f32.mrf.mxu0
    %v1461 = vadd.f32 0.0, %v1460
    %v1462 = vpop.f32.mrf.mxu0
    %v1463 = vadd.f32 0.0, %v1462
    %v1464 = vpop.f32.mrf.mxu0
    %v1465 = vadd.f32 0.0, %v1464
    %v1466 = vpop.f32.mrf.mxu0
    %v1467 = vadd.f32 0.0, %v1466
    %1468 = vmatprep.mubr.bf16.mxu0 0
    %1469 = vmatmul.mubr.bf16.gmra.mxu0 %v1238
    %v1470 = vpop.f32.mrf.mxu0
    %v1471 = vadd.f32 0.0, %v1470
    %v1472 = vpop.f32.mrf.mxu0
    %v1473 = vadd.f32 0.0, %v1472
    %v1474 = vpop.f32.mrf.mxu0
    %v1475 = vadd.f32 0.0, %v1474
    %v1476 = vpop.f32.mrf.mxu0
    %v1477 = vadd.f32 0.0, %v1476
    %1478 = vmatprep.mubr.bf16.mxu0 0
    %1479 = vmatmul.mubr.bf16.gmra.mxu0 %v1239
    %v1480 = vpop.f32.mrf.mxu0
    %v1481 = vadd.f32 0.0, %v1480
    %v1482 = vpop.f32.mrf.mxu0
    %v1483 = vadd.f32 0.0, %v1482
    %v1484 = vpop.f32.mrf.mxu0
    %v1485 = vadd.f32 0.0, %v1484
    %v1486 = vpop.f32.mrf.mxu0
    %v1487 = vadd.f32 0.0, %v1486
    %1488 = vdwg.mxu0
    %1489 = vmatprep.subr.bf16.mxu0 0
    %1490 = vmatpush1.bf16.msra.mxu0 %v1351
    %1491 = vmatprep.subr.bf16.mxu0 0
    %1492 = vmatpush1.bf16.msra.mxu0 %v1348
    %1493 = vmatprep.subr.bf16.mxu0 0
    %1494 = vmatpush1.bf16.msra.mxu0 %v1345
    %1495 = vmatprep.subr.bf16.mxu0 0
    %1496 = vmatpush1.bf16.msra.mxu0 %v1342
    %1497 = vmatprep.subr.bf16.mxu0 0
    %1498 = vmatpush1.bf16.msra.mxu0 %v1339
    %1499 = vmatprep.subr.bf16.mxu0 0
    %1500 = vmatpush1.bf16.msra.mxu0 %v1336
    %1501 = vmatprep.subr.bf16.mxu0 0
    %1502 = vmatpush1.bf16.msra.mxu0 %v1333
    %1503 = vmatprep.subr.bf16.mxu0 0
    %1504 = vmatpush1.bf16.msra.mxu0 %v1330
    %1505 = vmatprep.subr.bf16.mxu0 0
    %1506 = vmatpush2.bf16.msra.mxu0 0
    %1507 = vmatprep.subr.bf16.mxu0 0
    %1508 = vmatpush2.bf16.msra.mxu0 0
    %1509 = vmatprep.subr.bf16.mxu0 0
    %1510 = vmatpush2.bf16.msra.mxu0 0
    %1511 = vmatprep.subr.bf16.mxu0 0
    %1512 = vmatpush2.bf16.msra.mxu0 0
    %1513 = vmatprep.subr.bf16.mxu0 0
    %1514 = vmatpush2.bf16.msra.mxu0 0
    %1515 = vmatprep.subr.bf16.mxu0 0
    %1516 = vmatpush2.bf16.msra.mxu0 0
    %1517 = vmatprep.subr.bf16.mxu0 0
    %1518 = vmatpush2.bf16.msra.mxu0 0
    %1519 = vmatprep.subr.bf16.mxu0 0
    %1520 = vmatpush2.bf16.msra.mxu0 0
    %1521 = vmatprep.mubr.bf16.mxu0 0
    %1522 = vmatmul.mubr.bf16.gmra.mxu0 %v1232
    %v1523 = vpop.f32.mrf.mxu0
    %v1524 = vadd.f32 0.0, %v1523
    %v1525 = vpop.f32.mrf.mxu0
    %v1526 = vpop.f32.mrf.mxu0
    %v1527 = vadd.f32 0.0, %v1526
    %v1528 = vpop.f32.mrf.mxu0
    %1529 = vmatprep.mubr.bf16.mxu0 0
    %1530 = vmatmul.mubr.bf16.gmra.mxu0 %v1233
    %v1531 = vpop.f32.mrf.mxu0
    %v1532 = vadd.f32 0.0, %v1531
    %v1533 = vpop.f32.mrf.mxu0
    %v1534 = vpop.f32.mrf.mxu0
    %v1535 = vadd.f32 0.0, %v1534
    %v1536 = vpop.f32.mrf.mxu0
    %1537 = vmatprep.mubr.bf16.mxu0 0
    %1538 = vmatmul.mubr.bf16.gmra.mxu0 %v1234
    %v1539 = vpop.f32.mrf.mxu0
    %v1540 = vadd.f32 0.0, %v1539
    %v1541 = vpop.f32.mrf.mxu0
    %v1542 = vpop.f32.mrf.mxu0
    %v1543 = vadd.f32 0.0, %v1542
    %v1544 = vpop.f32.mrf.mxu0
    %1545 = vmatprep.mubr.bf16.mxu0 0
    %1546 = vmatmul.mubr.bf16.gmra.mxu0 %v1235
    %v1547 = vpop.f32.mrf.mxu0
    %v1548 = vadd.f32 0.0, %v1547
    %v1549 = vpop.f32.mrf.mxu0
    %v1550 = vpop.f32.mrf.mxu0
    %v1551 = vadd.f32 0.0, %v1550
    %v1552 = vpop.f32.mrf.mxu0
    %1553 = vmatprep.mubr.bf16.mxu0 0
    %1554 = vmatmul.mubr.bf16.gmra.mxu0 %v1236
    %v1555 = vpop.f32.mrf.mxu0
    %v1556 = vadd.f32 0.0, %v1555
    %v1557 = vpop.f32.mrf.mxu0
    %v1558 = vpop.f32.mrf.mxu0
    %v1559 = vadd.f32 0.0, %v1558
    %v1560 = vpop.f32.mrf.mxu0
    %1561 = vmatprep.mubr.bf16.mxu0 0
    %1562 = vmatmul.mubr.bf16.gmra.mxu0 %v1237
    %v1563 = vpop.f32.mrf.mxu0
    %v1564 = vadd.f32 0.0, %v1563
    %v1565 = vpop.f32.mrf.mxu0
    %v1566 = vpop.f32.mrf.mxu0
    %v1567 = vadd.f32 0.0, %v1566
    %v1568 = vpop.f32.mrf.mxu0
    %1569 = vmatprep.mubr.bf16.mxu0 0
    %1570 = vmatmul.mubr.bf16.gmra.mxu0 %v1238
    %v1571 = vpop.f32.mrf.mxu0
    %v1572 = vadd.f32 0.0, %v1571
    %v1573 = vpop.f32.mrf.mxu0
    %v1574 = vpop.f32.mrf.mxu0
    %v1575 = vadd.f32 0.0, %v1574
    %v1576 = vpop.f32.mrf.mxu0
    %1577 = vmatprep.mubr.bf16.mxu0 0
    %1578 = vmatmul.mubr.bf16.gmra.mxu0 %v1239
    %v1579 = vpop.f32.mrf.mxu0
    %v1580 = vadd.f32 0.0, %v1579
    %v1581 = vpop.f32.mrf.mxu0
    %v1582 = vpop.f32.mrf.mxu0
    %v1583 = vadd.f32 0.0, %v1582
    %v1584 = vpop.f32.mrf.mxu0
    %1585 = vdwg.mxu0
    %v1602 = vunpack.c.l.b16 %v1168
    %v1603 = vunpack.c.l.b16 %v1169
    %v1604 = vunpack.c.l.b16 %v1170
    %v1605 = vunpack.c.l.b16 %v1171
    %v1606 = vunpack.c.l.b16 %v1172
    %v1607 = vunpack.c.l.b16 %v1173
    %v1608 = vunpack.c.l.b16 %v1174
    %v1609 = vunpack.c.l.b16 %v1175
    %v1610 = vunpack.c.l.b16 %v1176
    %v1611 = vunpack.c.l.b16 %v1177
    %v1612 = vunpack.c.l.b16 %v1178
    %v1613 = vunpack.c.l.b16 %v1179
    %v1614 = vunpack.c.l.b16 %v1180
    %v1615 = vunpack.c.l.b16 %v1181
    %v1616 = vunpack.c.l.b16 %v1182
    %v1617 = vunpack.c.l.b16 %v1183
    %v1618 = vpack.c.b16 %v1603, %v1602
    %v1619 = vpack.c.b16 %v1605, %v1604
    %v1620 = vpack.c.b16 %v1607, %v1606
    %v1621 = vpack.c.b16 %v1609, %v1608
    %v1622 = vpack.c.b16 %v1611, %v1610
    %v1623 = vpack.c.b16 %v1613, %v1612
    %v1624 = vpack.c.b16 %v1615, %v1614
    %v1625 = vpack.c.b16 %v1617, %v1616
    %v1666 = vunpack.c.l.b16 %v1104
    %v1667 = vunpack.c.h.b16 %v1104
    %v1668 = vunpack.c.l.b16 %v1105
    %v1669 = vunpack.c.l.b16 %v1106
    %v1670 = vunpack.c.h.b16 %v1106
    %v1671 = vunpack.c.l.b16 %v1107
    %v1672 = vunpack.c.l.b16 %v1108
    %v1673 = vunpack.c.h.b16 %v1108
    %v1674 = vunpack.c.l.b16 %v1109
    %v1675 = vunpack.c.l.b16 %v1110
    %v1676 = vunpack.c.h.b16 %v1110
    %v1677 = vunpack.c.l.b16 %v1111
    %v1678 = vunpack.c.l.b16 %v1112
    %v1679 = vunpack.c.h.b16 %v1112
    %v1680 = vunpack.c.l.b16 %v1113
    %v1681 = vunpack.c.l.b16 %v1114
    %v1682 = vunpack.c.h.b16 %v1114
    %v1683 = vunpack.c.l.b16 %v1115
    %v1684 = vunpack.c.l.b16 %v1116
    %v1685 = vunpack.c.h.b16 %v1116
    %v1686 = vunpack.c.l.b16 %v1117
    %v1687 = vunpack.c.l.b16 %v1118
    %v1688 = vunpack.c.h.b16 %v1118
    %v1689 = vunpack.c.l.b16 %v1119
    %v1690 = vunpack.c.l.b16 %v1120
    %v1691 = vunpack.c.h.b16 %v1120
    %v1692 = vunpack.c.l.b16 %v1121
    %v1693 = vunpack.c.l.b16 %v1122
    %v1694 = vunpack.c.h.b16 %v1122
    %v1695 = vunpack.c.l.b16 %v1123
    %v1696 = vunpack.c.l.b16 %v1124
    %v1697 = vunpack.c.h.b16 %v1124
    %v1698 = vunpack.c.l.b16 %v1125
    %v1699 = vunpack.c.l.b16 %v1126
    %v1700 = vunpack.c.h.b16 %v1126
    %v1701 = vunpack.c.l.b16 %v1127
    %v1702 = vunpack.c.l.b16 %v1128
    %v1703 = vunpack.c.h.b16 %v1128
    %v1704 = vunpack.c.l.b16 %v1129
    %v1705 = vunpack.c.l.b16 %v1130
    %v1706 = vunpack.c.h.b16 %v1130
    %v1707 = vunpack.c.l.b16 %v1131
    %v1708 = vunpack.c.l.b16 %v1132
    %v1709 = vunpack.c.h.b16 %v1132
    %v1710 = vunpack.c.l.b16 %v1133
    %v1711 = vunpack.c.l.b16 %v1134
    %v1712 = vunpack.c.h.b16 %v1134
    %v1713 = vunpack.c.l.b16 %v1135
    %v1714 = vpack.c.b16 %v1669, %v1666
    %v1715 = vpack.c.b16 %v1670, %v1667
    %v1716 = vpack.c.b16 %v1671, %v1668
    %v1717 = vpack.c.b16 %v1675, %v1672
    %v1718 = vpack.c.b16 %v1676, %v1673
    %v1719 = vpack.c.b16 %v1677, %v1674
    %v1720 = vpack.c.b16 %v1681, %v1678
    %v1721 = vpack.c.b16 %v1682, %v1679
    %v1722 = vpack.c.b16 %v1683, %v1680
    %v1723 = vpack.c.b16 %v1687, %v1684
    %v1724 = vpack.c.b16 %v1688, %v1685
    %v1725 = vpack.c.b16 %v1689, %v1686
    %v1726 = vpack.c.b16 %v1693, %v1690
    %v1727 = vpack.c.b16 %v1694, %v1691
    %v1728 = vpack.c.b16 %v1695, %v1692
    %v1729 = vpack.c.b16 %v1699, %v1696
    %v1730 = vpack.c.b16 %v1700, %v1697
    %v1731 = vpack.c.b16 %v1701, %v1698
    %v1732 = vpack.c.b16 %v1705, %v1702
    %v1733 = vpack.c.b16 %v1706, %v1703
    %v1734 = vpack.c.b16 %v1707, %v1704
    %v1735 = vpack.c.b16 %v1711, %v1708
    %v1736 = vpack.c.b16 %v1712, %v1709
    %v1737 = vpack.c.b16 %v1713, %v1710
    %1762 = vmatprep.subr.bf16.mxu0 %v1736
    %1763 = vmatpush1.bf16.msra.mxu0 %v1735
    %1764 = vmatprep.subr.bf16.mxu0 %v1733
    %1765 = vmatpush1.bf16.msra.mxu0 %v1732
    %1766 = vmatprep.subr.bf16.mxu0 %v1730
    %1767 = vmatpush1.bf16.msra.mxu0 %v1729
    %1768 = vmatprep.subr.bf16.mxu0 %v1727
    %1769 = vmatpush1.bf16.msra.mxu0 %v1726
    %1770 = vmatprep.subr.bf16.mxu0 %v1724
    %1771 = vmatpush1.bf16.msra.mxu0 %v1723
    %1772 = vmatprep.subr.bf16.mxu0 %v1721
    %1773 = vmatpush1.bf16.msra.mxu0 %v1720
    %1774 = vmatprep.subr.bf16.mxu0 %v1718
    %1775 = vmatpush1.bf16.msra.mxu0 %v1717
    %1776 = vmatprep.subr.bf16.mxu0 %v1715
    %1777 = vmatpush1.bf16.msra.mxu0 %v1714
    %1778 = vmatprep.subr.bf16.mxu0 0
    %1779 = vmatpush2.bf16.msra.mxu0 0
    %1780 = vmatprep.subr.bf16.mxu0 0
    %1781 = vmatpush2.bf16.msra.mxu0 0
    %1782 = vmatprep.subr.bf16.mxu0 0
    %1783 = vmatpush2.bf16.msra.mxu0 0
    %1784 = vmatprep.subr.bf16.mxu0 0
    %1785 = vmatpush2.bf16.msra.mxu0 0
    %1786 = vmatprep.subr.bf16.mxu0 0
    %1787 = vmatpush2.bf16.msra.mxu0 0
    %1788 = vmatprep.subr.bf16.mxu0 0
    %1789 = vmatpush2.bf16.msra.mxu0 0
    %1790 = vmatprep.subr.bf16.mxu0 0
    %1791 = vmatpush2.bf16.msra.mxu0 0
    %1792 = vmatprep.subr.bf16.mxu0 0
    %1793 = vmatpush2.bf16.msra.mxu0 0
    %1794 = vmatprep.mubr.bf16.mxu0 0
    %1795 = vmatmul.mubr.bf16.gmra.mxu0 %v1618
    %v1796 = vpop.f32.mrf.mxu0
    %v1797 = vadd.f32 %v1411, %v1796
    %v1798 = vpop.f32.mrf.mxu0
    %v1799 = vadd.f32 %v1413, %v1798
    %v1800 = vpop.f32.mrf.mxu0
    %v1801 = vadd.f32 %v1415, %v1800
    %v1802 = vpop.f32.mrf.mxu0
    %v1803 = vadd.f32 %v1417, %v1802
    %1804 = vmatprep.mubr.bf16.mxu0 0
    %1805 = vmatmul.mubr.bf16.gmra.mxu0 %v1619
    %v1806 = vpop.f32.mrf.mxu0
    %v1807 = vadd.f32 %v1421, %v1806
    %v1808 = vpop.f32.mrf.mxu0
    %v1809 = vadd.f32 %v1423, %v1808
    %v1810 = vpop.f32.mrf.mxu0
    %v1811 = vadd.f32 %v1425, %v1810
    %v1812 = vpop.f32.mrf.mxu0
    %v1813 = vadd.f32 %v1427, %v1812
    %1814 = vmatprep.mubr.bf16.mxu0 0
    %1815 = vmatmul.mubr.bf16.gmra.mxu0 %v1620
    %v1816 = vpop.f32.mrf.mxu0
    %v1817 = vadd.f32 %v1431, %v1816
    %v1818 = vpop.f32.mrf.mxu0
    %v1819 = vadd.f32 %v1433, %v1818
    %v1820 = vpop.f32.mrf.mxu0
    %v1821 = vadd.f32 %v1435, %v1820
    %v1822 = vpop.f32.mrf.mxu0
    %v1823 = vadd.f32 %v1437, %v1822
    %1824 = vmatprep.mubr.bf16.mxu0 0
    %1825 = vmatmul.mubr.bf16.gmra.mxu0 %v1621
    %v1826 = vpop.f32.mrf.mxu0
    %v1827 = vadd.f32 %v1441, %v1826
    %v1828 = vpop.f32.mrf.mxu0
    %v1829 = vadd.f32 %v1443, %v1828
    %v1830 = vpop.f32.mrf.mxu0
    %v1831 = vadd.f32 %v1445, %v1830
    %v1832 = vpop.f32.mrf.mxu0
    %v1833 = vadd.f32 %v1447, %v1832
    %1834 = vmatprep.mubr.bf16.mxu0 0
    %1835 = vmatmul.mubr.bf16.gmra.mxu0 %v1622
    %v1836 = vpop.f32.mrf.mxu0
    %v1837 = vadd.f32 %v1451, %v1836
    %v1838 = vpop.f32.mrf.mxu0
    %v1839 = vadd.f32 %v1453, %v1838
    %v1840 = vpop.f32.mrf.mxu0
    %v1841 = vadd.f32 %v1455, %v1840
    %v1842 = vpop.f32.mrf.mxu0
    %v1843 = vadd.f32 %v1457, %v1842
    %1844 = vmatprep.mubr.bf16.mxu0 0
    %1845 = vmatmul.mubr.bf16.gmra.mxu0 %v1623
    %v1846 = vpop.f32.mrf.mxu0
    %v1847 = vadd.f32 %v1461, %v1846
    %v1848 = vpop.f32.mrf.mxu0
    %v1849 = vadd.f32 %v1463, %v1848
    %v1850 = vpop.f32.mrf.mxu0
    %v1851 = vadd.f32 %v1465, %v1850
    %v1852 = vpop.f32.mrf.mxu0
    %v1853 = vadd.f32 %v1467, %v1852
    %1854 = vmatprep.mubr.bf16.mxu0 0
    %1855 = vmatmul.mubr.bf16.gmra.mxu0 %v1624
    %v1856 = vpop.f32.mrf.mxu0
    %v1857 = vadd.f32 %v1471, %v1856
    %v1858 = vpop.f32.mrf.mxu0
    %v1859 = vadd.f32 %v1473, %v1858
    %v1860 = vpop.f32.mrf.mxu0
    %v1861 = vadd.f32 %v1475, %v1860
    %v1862 = vpop.f32.mrf.mxu0
    %v1863 = vadd.f32 %v1477, %v1862
    %1864 = vmatprep.mubr.bf16.mxu0 0
    %1865 = vmatmul.mubr.bf16.gmra.mxu0 %v1625
    %v1866 = vpop.f32.mrf.mxu0
    %v1867 = vadd.f32 %v1481, %v1866
    %v1868 = vpop.f32.mrf.mxu0
    %v1869 = vadd.f32 %v1483, %v1868
    %v1870 = vpop.f32.mrf.mxu0
    %v1871 = vadd.f32 %v1485, %v1870
    %v1872 = vpop.f32.mrf.mxu0
    %v1873 = vadd.f32 %v1487, %v1872
    %1874 = vdwg.mxu0
    %1875 = vmatprep.subr.bf16.mxu0 0
    %1876 = vmatpush1.bf16.msra.mxu0 %v1737
    %1877 = vmatprep.subr.bf16.mxu0 0
    %1878 = vmatpush1.bf16.msra.mxu0 %v1734
    %1879 = vmatprep.subr.bf16.mxu0 0
    %1880 = vmatpush1.bf16.msra.mxu0 %v1731
    %1881 = vmatprep.subr.bf16.mxu0 0
    %1882 = vmatpush1.bf16.msra.mxu0 %v1728
    %1883 = vmatprep.subr.bf16.mxu0 0
    %1884 = vmatpush1.bf16.msra.mxu0 %v1725
    %1885 = vmatprep.subr.bf16.mxu0 0
    %1886 = vmatpush1.bf16.msra.mxu0 %v1722
    %1887 = vmatprep.subr.bf16.mxu0 0
    %1888 = vmatpush1.bf16.msra.mxu0 %v1719
    %1889 = vmatprep.subr.bf16.mxu0 0
    %1890 = vmatpush1.bf16.msra.mxu0 %v1716
    %1891 = vmatprep.subr.bf16.mxu0 0
    %1892 = vmatpush2.bf16.msra.mxu0 0
    %1893 = vmatprep.subr.bf16.mxu0 0
    %1894 = vmatpush2.bf16.msra.mxu0 0
    %1895 = vmatprep.subr.bf16.mxu0 0
    %1896 = vmatpush2.bf16.msra.mxu0 0
    %1897 = vmatprep.subr.bf16.mxu0 0
    %1898 = vmatpush2.bf16.msra.mxu0 0
    %1899 = vmatprep.subr.bf16.mxu0 0
    %1900 = vmatpush2.bf16.msra.mxu0 0
    %1901 = vmatprep.subr.bf16.mxu0 0
    %1902 = vmatpush2.bf16.msra.mxu0 0
    %1903 = vmatprep.subr.bf16.mxu0 0
    %1904 = vmatpush2.bf16.msra.mxu0 0
    %1905 = vmatprep.subr.bf16.mxu0 0
    %1906 = vmatpush2.bf16.msra.mxu0 0
    %1907 = vmatprep.mubr.bf16.mxu0 0
    %1908 = vmatmul.mubr.bf16.gmra.mxu0 %v1618
    %v1909 = vpop.f32.mrf.mxu0
    %v1910 = vadd.f32 %v1524, %v1909
    %v1911 = vpop.f32.mrf.mxu0
    %v1912 = vpop.f32.mrf.mxu0
    %v1913 = vadd.f32 %v1527, %v1912
    %v1914 = vpop.f32.mrf.mxu0
    %1915 = vmatprep.mubr.bf16.mxu0 0
    %1916 = vmatmul.mubr.bf16.gmra.mxu0 %v1619
    %v1917 = vpop.f32.mrf.mxu0
    %v1918 = vadd.f32 %v1532, %v1917
    %v1919 = vpop.f32.mrf.mxu0
    %v1920 = vpop.f32.mrf.mxu0
    %v1921 = vadd.f32 %v1535, %v1920
    %v1922 = vpop.f32.mrf.mxu0
    %1923 = vmatprep.mubr.bf16.mxu0 0
    %1924 = vmatmul.mubr.bf16.gmra.mxu0 %v1620
    %v1925 = vpop.f32.mrf.mxu0
    %v1926 = vadd.f32 %v1540, %v1925
    %v1927 = vpop.f32.mrf.mxu0
    %v1928 = vpop.f32.mrf.mxu0
    %v1929 = vadd.f32 %v1543, %v1928
    %v1930 = vpop.f32.mrf.mxu0
    %1931 = vmatprep.mubr.bf16.mxu0 0
    %1932 = vmatmul.mubr.bf16.gmra.mxu0 %v1621
    %v1933 = vpop.f32.mrf.mxu0
    %v1934 = vadd.f32 %v1548, %v1933
    %v1935 = vpop.f32.mrf.mxu0
    %v1936 = vpop.f32.mrf.mxu0
    %v1937 = vadd.f32 %v1551, %v1936
    %v1938 = vpop.f32.mrf.mxu0
    %1939 = vmatprep.mubr.bf16.mxu0 0
    %1940 = vmatmul.mubr.bf16.gmra.mxu0 %v1622
    %v1941 = vpop.f32.mrf.mxu0
    %v1942 = vadd.f32 %v1556, %v1941
    %v1943 = vpop.f32.mrf.mxu0
    %v1944 = vpop.f32.mrf.mxu0
    %v1945 = vadd.f32 %v1559, %v1944
    %v1946 = vpop.f32.mrf.mxu0
    %1947 = vmatprep.mubr.bf16.mxu0 0
    %1948 = vmatmul.mubr.bf16.gmra.mxu0 %v1623
    %v1949 = vpop.f32.mrf.mxu0
    %v1950 = vadd.f32 %v1564, %v1949
    %v1951 = vpop.f32.mrf.mxu0
    %v1952 = vpop.f32.mrf.mxu0
    %v1953 = vadd.f32 %v1567, %v1952
    %v1954 = vpop.f32.mrf.mxu0
    %1955 = vmatprep.mubr.bf16.mxu0 0
    %1956 = vmatmul.mubr.bf16.gmra.mxu0 %v1624
    %v1957 = vpop.f32.mrf.mxu0
    %v1958 = vadd.f32 %v1572, %v1957
    %v1959 = vpop.f32.mrf.mxu0
    %v1960 = vpop.f32.mrf.mxu0
    %v1961 = vadd.f32 %v1575, %v1960
    %v1962 = vpop.f32.mrf.mxu0
    %1963 = vmatprep.mubr.bf16.mxu0 0
    %1964 = vmatmul.mubr.bf16.gmra.mxu0 %v1625
    %v1965 = vpop.f32.mrf.mxu0
    %v1966 = vadd.f32 %v1580, %v1965
    %v1967 = vpop.f32.mrf.mxu0
    %v1968 = vpop.f32.mrf.mxu0
    %v1969 = vadd.f32 %v1583, %v1968
    %v1970 = vpop.f32.mrf.mxu0
    %1971 = vdwg.mxu0
    %s1972 = scalar_lea.vmem %s6, 3
    %v1973 = vld [vmem:[%s1972] sm:$0x7]
    %v1975 = vlaneseq
    %v1976 = vshrl.u32 %v1975, 7
    %v1977 = vsub.s32 0, %v1976
    %v1978 = vrot.slane %v1973, %v1977
    %v1979 = vlaneseq
    %v1980 = vshrl.u32 %v1979, 7
    %v1981 = vsub.s32 1, %v1980
    %v1982 = vrot.slane %v1973, %v1981
    %v1983 = vlaneseq
    %v1984 = vshrl.u32 %v1983, 7
    %v1985 = vsub.s32 2, %v1984
    %v1986 = vrot.slane %v1973, %v1985
    %v1990 = vadd.f32 %v1797, %v1978
    %v1991 = vadd.f32 %v1799, %v1982
    %v1992 = vadd.f32 %v1910, %v1986
    %v1993 = vadd.f32 %v1801, %v1978
    %v1994 = vadd.f32 %v1803, %v1982
    %v1995 = vadd.f32 %v1913, %v1986
    %v1996 = vadd.f32 %v1807, %v1978
    %v1997 = vadd.f32 %v1809, %v1982
    %v1998 = vadd.f32 %v1918, %v1986
    %v1999 = vadd.f32 %v1811, %v1978
    %v2000 = vadd.f32 %v1813, %v1982
    %v2001 = vadd.f32 %v1921, %v1986
    %v2002 = vadd.f32 %v1817, %v1978
    %v2003 = vadd.f32 %v1819, %v1982
    %v2004 = vadd.f32 %v1926, %v1986
    %v2005 = vadd.f32 %v1821, %v1978
    %v2006 = vadd.f32 %v1823, %v1982
    %v2007 = vadd.f32 %v1929, %v1986
    %v2008 = vadd.f32 %v1827, %v1978
    %v2009 = vadd.f32 %v1829, %v1982
    %v2010 = vadd.f32 %v1934, %v1986
    %v2011 = vadd.f32 %v1831, %v1978
    %v2012 = vadd.f32 %v1833, %v1982
    %v2013 = vadd.f32 %v1937, %v1986
    %v2014 = vadd.f32 %v1837, %v1978
    %v2015 = vadd.f32 %v1839, %v1982
    %v2016 = vadd.f32 %v1942, %v1986
    %v2017 = vadd.f32 %v1841, %v1978
    %v2018 = vadd.f32 %v1843, %v1982
    %v2019 = vadd.f32 %v1945, %v1986
    %v2020 = vadd.f32 %v1847, %v1978
    %v2021 = vadd.f32 %v1849, %v1982
    %v2022 = vadd.f32 %v1950, %v1986
    %v2023 = vadd.f32 %v1851, %v1978
    %v2024 = vadd.f32 %v1853, %v1982
    %v2025 = vadd.f32 %v1953, %v1986
    %v2026 = vadd.f32 %v1857, %v1978
    %v2027 = vadd.f32 %v1859, %v1982
    %v2028 = vadd.f32 %v1958, %v1986
    %v2029 = vadd.f32 %v1861, %v1978
    %v2030 = vadd.f32 %v1863, %v1982
    %v2031 = vadd.f32 %v1961, %v1986
    %v2032 = vadd.f32 %v1867, %v1978
    %v2033 = vadd.f32 %v1869, %v1982
    %v2034 = vadd.f32 %v1966, %v1986
    %v2035 = vadd.f32 %v1871, %v1978
    %v2036 = vadd.f32 %v1873, %v1982
    %v2037 = vadd.f32 %v1969, %v1986
    %2038 = vst [vmem:[#allocation3] sm:$0xff] %v1990
    %2039 = vst [vmem:[#allocation3 + $0x8] sm:$0xff] %v1991
    %2040 = vst [vmem:[#allocation3 + $0x10] sm:$0xff] %v1992
    %2041 = vst [vmem:[#allocation3 + $0x18] sm:$0xff] %v1993
    %2042 = vst [vmem:[#allocation3 + $0x20] sm:$0xff] %v1994
    %2043 = vst [vmem:[#allocation3 + $0x28] sm:$0xff] %v1995
    %2044 = vst [vmem:[#allocation3 + $0x30] sm:$0xff] %v1996
    %2045 = vst [vmem:[#allocation3 + $0x38] sm:$0xff] %v1997
    %2046 = vst [vmem:[#allocation3 + $0x40] sm:$0xff] %v1998
    %2047 = vst [vmem:[#allocation3 + $0x48] sm:$0xff] %v1999
    %2048 = vst [vmem:[#allocation3 + $0x50] sm:$0xff] %v2000
    %2049 = vst [vmem:[#allocation3 + $0x58] sm:$0xff] %v2001
    %2050 = vst [vmem:[#allocation3 + $0x60] sm:$0xff] %v2002
    %2051 = vst [vmem:[#allocation3 + $0x68] sm:$0xff] %v2003
    %2052 = vst [vmem:[#allocation3 + $0x70] sm:$0xff] %v2004
    %2053 = vst [vmem:[#allocation3 + $0x78] sm:$0xff] %v2005
    %2054 = vst [vmem:[#allocation3 + $0x80] sm:$0xff] %v2006
    %2055 = vst [vmem:[#allocation3 + $0x88] sm:$0xff] %v2007
    %2056 = vst [vmem:[#allocation3 + $0x90] sm:$0xff] %v2008
    %2057 = vst [vmem:[#allocation3 + $0x98] sm:$0xff] %v2009
    %2058 = vst [vmem:[#allocation3 + $0xa0] sm:$0xff] %v2010
    %2059 = vst [vmem:[#allocation3 + $0xa8] sm:$0xff] %v2011
    %2060 = vst [vmem:[#allocation3 + $0xb0] sm:$0xff] %v2012
    %2061 = vst [vmem:[#allocation3 + $0xb8] sm:$0xff] %v2013
    %2062 = vst [vmem:[#allocation3 + $0xc0] sm:$0xff] %v2014
    %2063 = vst [vmem:[#allocation3 + $0xc8] sm:$0xff] %v2015
    %2064 = vst [vmem:[#allocation3 + $0xd0] sm:$0xff] %v2016
    %2065 = vst [vmem:[#allocation3 + $0xd8] sm:$0xff] %v2017
    %2066 = vst [vmem:[#allocation3 + $0xe0] sm:$0xff] %v2018
    %2067 = vst [vmem:[#allocation3 + $0xe8] sm:$0xff] %v2019
    %2068 = vst [vmem:[#allocation3 + $0xf0] sm:$0xff] %v2020
    %2069 = vst [vmem:[#allocation3 + $0xf8] sm:$0xff] %v2021
    %2070 = vst [vmem:[#allocation3 + $0x100] sm:$0xff] %v2022
    %2071 = vst [vmem:[#allocation3 + $0x108] sm:$0xff] %v2023
    %2072 = vst [vmem:[#allocation3 + $0x110] sm:$0xff] %v2024
    %2073 = vst [vmem:[#allocation3 + $0x118] sm:$0xff] %v2025
    %2074 = vst [vmem:[#allocation3 + $0x120] sm:$0xff] %v2026
    %2075 = vst [vmem:[#allocation3 + $0x128] sm:$0xff] %v2027
    %2076 = vst [vmem:[#allocation3 + $0x130] sm:$0xff] %v2028
    %2077 = vst [vmem:[#allocation3 + $0x138] sm:$0xff] %v2029
    %2078 = vst [vmem:[#allocation3 + $0x140] sm:$0xff] %v2030
    %2079 = vst [vmem:[#allocation3 + $0x148] sm:$0xff] %v2031
    %2080 = vst [vmem:[#allocation3 + $0x150] sm:$0xff] %v2032
    %2081 = vst [vmem:[#allocation3 + $0x158] sm:$0xff] %v2033
    %2082 = vst [vmem:[#allocation3 + $0x160] sm:$0xff] %v2034
    %2083 = vst [vmem:[#allocation3 + $0x168] sm:$0xff] %v2035
    %2084 = vst [vmem:[#allocation3 + $0x170] sm:$0xff] %v2036
    %2085 = vst [vmem:[#allocation3 + $0x178] sm:$0xff] %v2037
    %v2086 = vld [vmem:[#allocation6] sm:$0xff]
    %v2087 = vld [vmem:[#allocation6 + $0x8] sm:$0xf]
    %v2088 = vld [vmem:[#allocation6 + $0xc] sm:$0xff]
    %v2089 = vld [vmem:[#allocation6 + $0x14] sm:$0xf]
    %v2090 = vld [vmem:[#allocation6 + $0x18] sm:$0xff]
    %v2091 = vld [vmem:[#allocation6 + $0x20] sm:$0xf]
    %v2092 = vld [vmem:[#allocation6 + $0x24] sm:$0xff]
    %v2093 = vld [vmem:[#allocation6 + $0x2c] sm:$0xf]
    %v2094 = vld [vmem:[#allocation6 + $0x30] sm:$0xff]
    %v2095 = vld [vmem:[#allocation6 + $0x38] sm:$0xf]
    %v2096 = vld [vmem:[#allocation6 + $0x3c] sm:$0xff]
    %v2097 = vld [vmem:[#allocation6 + $0x44] sm:$0xf]
    %v2098 = vld [vmem:[#allocation6 + $0x48] sm:$0xff]
    %v2099 = vld [vmem:[#allocation6 + $0x50] sm:$0xf]
    %v2100 = vld [vmem:[#allocation6 + $0x54] sm:$0xff]
    %v2101 = vld [vmem:[#allocation6 + $0x5c] sm:$0xf]
    %v2102 = vld [vmem:[#allocation6 + $0x60] sm:$0xff]
    %v2103 = vld [vmem:[#allocation6 + $0x68] sm:$0xf]
    %v2104 = vld [vmem:[#allocation6 + $0x6c] sm:$0xff]
    %v2105 = vld [vmem:[#allocation6 + $0x74] sm:$0xf]
    %v2106 = vld [vmem:[#allocation6 + $0x78] sm:$0xff]
    %v2107 = vld [vmem:[#allocation6 + $0x80] sm:$0xf]
    %v2108 = vld [vmem:[#allocation6 + $0x84] sm:$0xff]
    %v2109 = vld [vmem:[#allocation6 + $0x8c] sm:$0xf]
    %v2110 = vld [vmem:[#allocation6 + $0x90] sm:$0xff]
    %v2111 = vld [vmem:[#allocation6 + $0x98] sm:$0xf]
    %v2112 = vld [vmem:[#allocation6 + $0x9c] sm:$0xff]
    %v2113 = vld [vmem:[#allocation6 + $0xa4] sm:$0xf]
    %v2114 = vld [vmem:[#allocation6 + $0xa8] sm:$0xff]
    %v2115 = vld [vmem:[#allocation6 + $0xb0] sm:$0xf]
    %v2116 = vld [vmem:[#allocation6 + $0xb4] sm:$0xff]
    %v2117 = vld [vmem:[#allocation6 + $0xbc] sm:$0xf]
    %s2118 = scalar_lea.vmem [#allocation6], 192
    %v2119 = vld [vmem:[%s2118] sm:$0xff]
    %v2120 = vld [vmem:[%s2118 + $0x8] sm:$0xf]
    %v2121 = vld [vmem:[%s2118 + $0xc] sm:$0xff]
    %v2122 = vld [vmem:[%s2118 + $0x14] sm:$0xf]
    %v2123 = vld [vmem:[%s2118 + $0x18] sm:$0xff]
    %v2124 = vld [vmem:[%s2118 + $0x20] sm:$0xf]
    %v2125 = vld [vmem:[%s2118 + $0x24] sm:$0xff]
    %v2126 = vld [vmem:[%s2118 + $0x2c] sm:$0xf]
    %v2127 = vld [vmem:[%s2118 + $0x30] sm:$0xff]
    %v2128 = vld [vmem:[%s2118 + $0x38] sm:$0xf]
    %v2129 = vld [vmem:[%s2118 + $0x3c] sm:$0xff]
    %v2130 = vld [vmem:[%s2118 + $0x44] sm:$0xf]
    %v2131 = vld [vmem:[%s2118 + $0x48] sm:$0xff]
    %v2132 = vld [vmem:[%s2118 + $0x50] sm:$0xf]
    %v2133 = vld [vmem:[%s2118 + $0x54] sm:$0xff]
    %v2134 = vld [vmem:[%s2118 + $0x5c] sm:$0xf]
    %v2135 = vld [vmem:[%s2118 + $0x60] sm:$0xff]
    %v2136 = vld [vmem:[%s2118 + $0x68] sm:$0xf]
    %v2137 = vld [vmem:[%s2118 + $0x6c] sm:$0xff]
    %v2138 = vld [vmem:[%s2118 + $0x74] sm:$0xf]
    %v2139 = vld [vmem:[%s2118 + $0x78] sm:$0xff]
    %v2140 = vld [vmem:[%s2118 + $0x80] sm:$0xf]
    %v2141 = vld [vmem:[%s2118 + $0x84] sm:$0xff]
    %v2142 = vld [vmem:[%s2118 + $0x8c] sm:$0xf]
    %v2143 = vld [vmem:[%s2118 + $0x90] sm:$0xff]
    %v2144 = vld [vmem:[%s2118 + $0x98] sm:$0xf]
    %v2145 = vld [vmem:[%s2118 + $0x9c] sm:$0xff]
    %v2146 = vld [vmem:[%s2118 + $0xa4] sm:$0xf]
    %v2147 = vld [vmem:[%s2118 + $0xa8] sm:$0xff]
    %v2148 = vld [vmem:[%s2118 + $0xb0] sm:$0xf]
    %v2149 = vld [vmem:[%s2118 + $0xb4] sm:$0xff]
    %v2150 = vld [vmem:[%s2118 + $0xbc] sm:$0xf]
    %v2151 = vld [vmem:[%s7] sm:$0x1]
    %s2152 = scalar_lea.vmem %s7, 1
    %v2153 = vld [vmem:[%s2152] sm:$0x1]
    %v2154 = vld [vmem:[#allocation4] sm:$0xff]
    %v2155 = vld [vmem:[#allocation4 + $0x8] sm:$0xff]
    %v2156 = vld [vmem:[#allocation5] sm:$0xff]
    %v2157 = vld [vmem:[#allocation5 + $0x8] sm:$0xff]
    loop: start=0, step=1, limit=8
    $region54: #{bert_gru_sentiment_forward.3} parent=1 // loop_pre_header
      _
    $region55: #{bert_gru_sentiment_forward.3} parent=1 // loop_header
      %s2159 = sphi 0, %s2163
      %p2160 = scmp.ge.s32.totalorder %s2159, 8
      %v2164 = vphi %v2154, %v2661
      %v2165 = vphi %v2155, %v2662
      %v2166 = vphi %v2156, %v2711
      %v2167 = vphi %v2157, %v2712
    $region56: #{bert_gru_sentiment_forward.3} parent=1 // loop_header_branch
      %2162 = sbr.rel (%p2160) target = $region60
    $region57: #{bert_gru_sentiment_forward.3} parent=1 // loop_body
      %s2168 = ssub.s32 7, %s2159
      %v2169 = vpack.c.bf16 %v2165, %v2164
      %v2202 = vunpack.c.l.b16 %v2086
      %v2203 = vunpack.c.h.b16 %v2086
      %v2204 = vunpack.c.l.b16 %v2087
      %v2205 = vunpack.c.l.b16 %v2088
      %v2206 = vunpack.c.h.b16 %v2088
      %v2207 = vunpack.c.l.b16 %v2089
      %v2208 = vunpack.c.l.b16 %v2090
      %v2209 = vunpack.c.h.b16 %v2090
      %v2210 = vunpack.c.l.b16 %v2091
      %v2211 = vunpack.c.l.b16 %v2092
      %v2212 = vunpack.c.h.b16 %v2092
      %v2213 = vunpack.c.l.b16 %v2093
      %v2214 = vunpack.c.l.b16 %v2094
      %v2215 = vunpack.c.h.b16 %v2094
      %v2216 = vunpack.c.l.b16 %v2095
      %v2217 = vunpack.c.l.b16 %v2096
      %v2218 = vunpack.c.h.b16 %v2096
      %v2219 = vunpack.c.l.b16 %v2097
      %v2220 = vunpack.c.l.b16 %v2098
      %v2221 = vunpack.c.h.b16 %v2098
      %v2222 = vunpack.c.l.b16 %v2099
      %v2223 = vunpack.c.l.b16 %v2100
      %v2224 = vunpack.c.h.b16 %v2100
      %v2225 = vunpack.c.l.b16 %v2101
      %v2226 = vunpack.c.l.b16 %v2102
      %v2227 = vunpack.c.h.b16 %v2102
      %v2228 = vunpack.c.l.b16 %v2103
      %v2229 = vunpack.c.l.b16 %v2104
      %v2230 = vunpack.c.h.b16 %v2104
      %v2231 = vunpack.c.l.b16 %v2105
      %v2232 = vunpack.c.l.b16 %v2106
      %v2233 = vunpack.c.h.b16 %v2106
      %v2234 = vunpack.c.l.b16 %v2107
      %v2235 = vunpack.c.l.b16 %v2108
      %v2236 = vunpack.c.h.b16 %v2108
      %v2237 = vunpack.c.l.b16 %v2109
      %v2238 = vunpack.c.l.b16 %v2110
      %v2239 = vunpack.c.h.b16 %v2110
      %v2240 = vunpack.c.l.b16 %v2111
      %v2241 = vunpack.c.l.b16 %v2112
      %v2242 = vunpack.c.h.b16 %v2112
      %v2243 = vunpack.c.l.b16 %v2113
      %v2244 = vunpack.c.l.b16 %v2114
      %v2245 = vunpack.c.h.b16 %v2114
      %v2246 = vunpack.c.l.b16 %v2115
      %v2247 = vunpack.c.l.b16 %v2116
      %v2248 = vunpack.c.h.b16 %v2116
      %v2249 = vunpack.c.l.b16 %v2117
      %v2250 = vpack.c.b16 %v2205, %v2202
      %v2251 = vpack.c.b16 %v2206, %v2203
      %v2252 = vpack.c.b16 %v2207, %v2204
      %v2253 = vpack.c.b16 %v2211, %v2208
      %v2254 = vpack.c.b16 %v2212, %v2209
      %v2255 = vpack.c.b16 %v2213, %v2210
      %v2256 = vpack.c.b16 %v2217, %v2214
      %v2257 = vpack.c.b16 %v2218, %v2215
      %v2258 = vpack.c.b16 %v2219, %v2216
      %v2259 = vpack.c.b16 %v2223, %v2220
      %v2260 = vpack.c.b16 %v2224, %v2221
      %v2261 = vpack.c.b16 %v2225, %v2222
      %v2262 = vpack.c.b16 %v2229, %v2226
      %v2263 = vpack.c.b16 %v2230, %v2227
      %v2264 = vpack.c.b16 %v2231, %v2228
      %v2265 = vpack.c.b16 %v2235, %v2232
      %v2266 = vpack.c.b16 %v2236, %v2233
      %v2267 = vpack.c.b16 %v2237, %v2234
      %v2268 = vpack.c.b16 %v2241, %v2238
      %v2269 = vpack.c.b16 %v2242, %v2239
      %v2270 = vpack.c.b16 %v2243, %v2240
      %v2271 = vpack.c.b16 %v2247, %v2244
      %v2272 = vpack.c.b16 %v2248, %v2245
      %v2273 = vpack.c.b16 %v2249, %v2246
      %2298 = vmatprep.subr.bf16.mxu0 %v2272
      %2299 = vmatpush1.bf16.msra.mxu0 %v2271
      %2300 = vmatprep.subr.bf16.mxu0 %v2269
      %2301 = vmatpush1.bf16.msra.mxu0 %v2268
      %2302 = vmatprep.subr.bf16.mxu0 %v2266
      %2303 = vmatpush1.bf16.msra.mxu0 %v2265
      %2304 = vmatprep.subr.bf16.mxu0 %v2263
      %2305 = vmatpush1.bf16.msra.mxu0 %v2262
      %2306 = vmatprep.subr.bf16.mxu0 %v2260
      %2307 = vmatpush1.bf16.msra.mxu0 %v2259
      %2308 = vmatprep.subr.bf16.mxu0 %v2257
      %2309 = vmatpush1.bf16.msra.mxu0 %v2256
      %2310 = vmatprep.subr.bf16.mxu0 %v2254
      %2311 = vmatpush1.bf16.msra.mxu0 %v2253
      %2312 = vmatprep.subr.bf16.mxu0 %v2251
      %2313 = vmatpush1.bf16.msra.mxu0 %v2250
      %2314 = vmatprep.subr.bf16.mxu0 0
      %2315 = vmatpush2.bf16.msra.mxu0 0
      %2316 = vmatprep.subr.bf16.mxu0 0
      %2317 = vmatpush2.bf16.msra.mxu0 0
      %2318 = vmatprep.subr.bf16.mxu0 0
      %2319 = vmatpush2.bf16.msra.mxu0 0
      %2320 = vmatprep.subr.bf16.mxu0 0
      %2321 = vmatpush2.bf16.msra.mxu0 0
      %2322 = vmatprep.subr.bf16.mxu0 0
      %2323 = vmatpush2.bf16.msra.mxu0 0
      %2324 = vmatprep.subr.bf16.mxu0 0
      %2325 = vmatpush2.bf16.msra.mxu0 0
      %2326 = vmatprep.subr.bf16.mxu0 0
      %2327 = vmatpush2.bf16.msra.mxu0 0
      %2328 = vmatprep.subr.bf16.mxu0 0
      %2329 = vmatpush2.bf16.msra.mxu0 0
      %2330 = vmatprep.mubr.bf16.mxu0 0
      %2331 = vmatmul.mubr.bf16.gmra.mxu0 %v2169
      %v2332 = vpop.f32.mrf.mxu0
      %v2333 = vadd.f32 0.0, %v2332
      %v2334 = vpop.f32.mrf.mxu0
      %v2335 = vadd.f32 0.0, %v2334
      %v2336 = vpop.f32.mrf.mxu0
      %v2337 = vadd.f32 0.0, %v2336
      %v2338 = vpop.f32.mrf.mxu0
      %v2339 = vadd.f32 0.0, %v2338
      %2340 = vdwg.mxu0
      %2341 = vmatprep.subr.bf16.mxu0 0
      %2342 = vmatpush1.bf16.msra.mxu0 %v2273
      %2343 = vmatprep.subr.bf16.mxu0 0
      %2344 = vmatpush1.bf16.msra.mxu0 %v2270
      %2345 = vmatprep.subr.bf16.mxu0 0
      %2346 = vmatpush1.bf16.msra.mxu0 %v2267
      %2347 = vmatprep.subr.bf16.mxu0 0
      %2348 = vmatpush1.bf16.msra.mxu0 %v2264
      %2349 = vmatprep.subr.bf16.mxu0 0
      %2350 = vmatpush1.bf16.msra.mxu0 %v2261
      %2351 = vmatprep.subr.bf16.mxu0 0
      %2352 = vmatpush1.bf16.msra.mxu0 %v2258
      %2353 = vmatprep.subr.bf16.mxu0 0
      %2354 = vmatpush1.bf16.msra.mxu0 %v2255
      %2355 = vmatprep.subr.bf16.mxu0 0
      %2356 = vmatpush1.bf16.msra.mxu0 %v2252
      %2357 = vmatprep.subr.bf16.mxu0 0
      %2358 = vmatpush2.bf16.msra.mxu0 0
      %2359 = vmatprep.subr.bf16.mxu0 0
      %2360 = vmatpush2.bf16.msra.mxu0 0
      %2361 = vmatprep.subr.bf16.mxu0 0
      %2362 = vmatpush2.bf16.msra.mxu0 0
      %2363 = vmatprep.subr.bf16.mxu0 0
      %2364 = vmatpush2.bf16.msra.mxu0 0
      %2365 = vmatprep.subr.bf16.mxu0 0
      %2366 = vmatpush2.bf16.msra.mxu0 0
      %2367 = vmatprep.subr.bf16.mxu0 0
      %2368 = vmatpush2.bf16.msra.mxu0 0
      %2369 = vmatprep.subr.bf16.mxu0 0
      %2370 = vmatpush2.bf16.msra.mxu0 0
      %2371 = vmatprep.subr.bf16.mxu0 0
      %2372 = vmatpush2.bf16.msra.mxu0 0
      %2373 = vmatprep.mubr.bf16.mxu0 0
      %2374 = vmatmul.mubr.bf16.gmra.mxu0 %v2169
      %v2375 = vpop.f32.mrf.mxu0
      %v2376 = vadd.f32 0.0, %v2375
      %v2377 = vpop.f32.mrf.mxu0
      %v2378 = vpop.f32.mrf.mxu0
      %v2379 = vadd.f32 0.0, %v2378
      %v2380 = vpop.f32.mrf.mxu0
      %2381 = vdwg.mxu0
      %v2382 = vpack.c.bf16 %v2167, %v2166
      %v2415 = vunpack.c.l.b16 %v2119
      %v2416 = vunpack.c.h.b16 %v2119
      %v2417 = vunpack.c.l.b16 %v2120
      %v2418 = vunpack.c.l.b16 %v2121
      %v2419 = vunpack.c.h.b16 %v2121
      %v2420 = vunpack.c.l.b16 %v2122
      %v2421 = vunpack.c.l.b16 %v2123
      %v2422 = vunpack.c.h.b16 %v2123
      %v2423 = vunpack.c.l.b16 %v2124
      %v2424 = vunpack.c.l.b16 %v2125
      %v2425 = vunpack.c.h.b16 %v2125
      %v2426 = vunpack.c.l.b16 %v2126
      %v2427 = vunpack.c.l.b16 %v2127
      %v2428 = vunpack.c.h.b16 %v2127
      %v2429 = vunpack.c.l.b16 %v2128
      %v2430 = vunpack.c.l.b16 %v2129
      %v2431 = vunpack.c.h.b16 %v2129
      %v2432 = vunpack.c.l.b16 %v2130
      %v2433 = vunpack.c.l.b16 %v2131
      %v2434 = vunpack.c.h.b16 %v2131
      %v2435 = vunpack.c.l.b16 %v2132
      %v2436 = vunpack.c.l.b16 %v2133
      %v2437 = vunpack.c.h.b16 %v2133
      %v2438 = vunpack.c.l.b16 %v2134
      %v2439 = vunpack.c.l.b16 %v2135
      %v2440 = vunpack.c.h.b16 %v2135
      %v2441 = vunpack.c.l.b16 %v2136
      %v2442 = vunpack.c.l.b16 %v2137
      %v2443 = vunpack.c.h.b16 %v2137
      %v2444 = vunpack.c.l.b16 %v2138
      %v2445 = vunpack.c.l.b16 %v2139
      %v2446 = vunpack.c.h.b16 %v2139
      %v2447 = vunpack.c.l.b16 %v2140
      %v2448 = vunpack.c.l.b16 %v2141
      %v2449 = vunpack.c.h.b16 %v2141
      %v2450 = vunpack.c.l.b16 %v2142
      %v2451 = vunpack.c.l.b16 %v2143
      %v2452 = vunpack.c.h.b16 %v2143
      %v2453 = vunpack.c.l.b16 %v2144
      %v2454 = vunpack.c.l.b16 %v2145
      %v2455 = vunpack.c.h.b16 %v2145
      %v2456 = vunpack.c.l.b16 %v2146
      %v2457 = vunpack.c.l.b16 %v2147
      %v2458 = vunpack.c.h.b16 %v2147
      %v2459 = vunpack.c.l.b16 %v2148
      %v2460 = vunpack.c.l.b16 %v2149
      %v2461 = vunpack.c.h.b16 %v2149
      %v2462 = vunpack.c.l.b16 %v2150
      %v2463 = vpack.c.b16 %v2418, %v2415
      %v2464 = vpack.c.b16 %v2419, %v2416
      %v2465 = vpack.c.b16 %v2420, %v2417
      %v2466 = vpack.c.b16 %v2424, %v2421
      %v2467 = vpack.c.b16 %v2425, %v2422
      %v2468 = vpack.c.b16 %v2426, %v2423
      %v2469 = vpack.c.b16 %v2430, %v2427
      %v2470 = vpack.c.b16 %v2431, %v2428
      %v2471 = vpack.c.b16 %v2432, %v2429
      %v2472 = vpack.c.b16 %v2436, %v2433
      %v2473 = vpack.c.b16 %v2437, %v2434
      %v2474 = vpack.c.b16 %v2438, %v2435
      %v2475 = vpack.c.b16 %v2442, %v2439
      %v2476 = vpack.c.b16 %v2443, %v2440
      %v2477 = vpack.c.b16 %v2444, %v2441
      %v2478 = vpack.c.b16 %v2448, %v2445
      %v2479 = vpack.c.b16 %v2449, %v2446
      %v2480 = vpack.c.b16 %v2450, %v2447
      %v2481 = vpack.c.b16 %v2454, %v2451
      %v2482 = vpack.c.b16 %v2455, %v2452
      %v2483 = vpack.c.b16 %v2456, %v2453
      %v2484 = vpack.c.b16 %v2460, %v2457
      %v2485 = vpack.c.b16 %v2461, %v2458
      %v2486 = vpack.c.b16 %v2462, %v2459
      %2511 = vmatprep.subr.bf16.mxu0 %v2485
      %2512 = vmatpush1.bf16.msra.mxu0 %v2484
      %2513 = vmatprep.subr.bf16.mxu0 %v2482
      %2514 = vmatpush1.bf16.msra.mxu0 %v2481
      %2515 = vmatprep.subr.bf16.mxu0 %v2479
      %2516 = vmatpush1.bf16.msra.mxu0 %v2478
      %2517 = vmatprep.subr.bf16.mxu0 %v2476
      %2518 = vmatpush1.bf16.msra.mxu0 %v2475
      %2519 = vmatprep.subr.bf16.mxu0 %v2473
      %2520 = vmatpush1.bf16.msra.mxu0 %v2472
      %2521 = vmatprep.subr.bf16.mxu0 %v2470
      %2522 = vmatpush1.bf16.msra.mxu0 %v2469
      %2523 = vmatprep.subr.bf16.mxu0 %v2467
      %2524 = vmatpush1.bf16.msra.mxu0 %v2466
      %2525 = vmatprep.subr.bf16.mxu0 %v2464
      %2526 = vmatpush1.bf16.msra.mxu0 %v2463
      %2527 = vmatprep.subr.bf16.mxu0 0
      %2528 = vmatpush2.bf16.msra.mxu0 0
      %2529 = vmatprep.subr.bf16.mxu0 0
      %2530 = vmatpush2.bf16.msra.mxu0 0
      %2531 = vmatprep.subr.bf16.mxu0 0
      %2532 = vmatpush2.bf16.msra.mxu0 0
      %2533 = vmatprep.subr.bf16.mxu0 0
      %2534 = vmatpush2.bf16.msra.mxu0 0
      %2535 = vmatprep.subr.bf16.mxu0 0
      %2536 = vmatpush2.bf16.msra.mxu0 0
      %2537 = vmatprep.subr.bf16.mxu0 0
      %2538 = vmatpush2.bf16.msra.mxu0 0
      %2539 = vmatprep.subr.bf16.mxu0 0
      %2540 = vmatpush2.bf16.msra.mxu0 0
      %2541 = vmatprep.subr.bf16.mxu0 0
      %2542 = vmatpush2.bf16.msra.mxu0 0
      %2543 = vmatprep.mubr.bf16.mxu0 0
      %2544 = vmatmul.mubr.bf16.gmra.mxu0 %v2382
      %v2545 = vpop.f32.mrf.mxu0
      %v2546 = vadd.f32 0.0, %v2545
      %v2547 = vpop.f32.mrf.mxu0
      %v2548 = vadd.f32 0.0, %v2547
      %v2549 = vpop.f32.mrf.mxu0
      %v2550 = vadd.f32 0.0, %v2549
      %v2551 = vpop.f32.mrf.mxu0
      %v2552 = vadd.f32 0.0, %v2551
      %2553 = vdwg.mxu0
      %2554 = vmatprep.subr.bf16.mxu0 0
      %2555 = vmatpush1.bf16.msra.mxu0 %v2486
      %2556 = vmatprep.subr.bf16.mxu0 0
      %2557 = vmatpush1.bf16.msra.mxu0 %v2483
      %2558 = vmatprep.subr.bf16.mxu0 0
      %2559 = vmatpush1.bf16.msra.mxu0 %v2480
      %2560 = vmatprep.subr.bf16.mxu0 0
      %2561 = vmatpush1.bf16.msra.mxu0 %v2477
      %2562 = vmatprep.subr.bf16.mxu0 0
      %2563 = vmatpush1.bf16.msra.mxu0 %v2474
      %2564 = vmatprep.subr.bf16.mxu0 0
      %2565 = vmatpush1.bf16.msra.mxu0 %v2471
      %2566 = vmatprep.subr.bf16.mxu0 0
      %2567 = vmatpush1.bf16.msra.mxu0 %v2468
      %2568 = vmatprep.subr.bf16.mxu0 0
      %2569 = vmatpush1.bf16.msra.mxu0 %v2465
      %2570 = vmatprep.subr.bf16.mxu0 0
      %2571 = vmatpush2.bf16.msra.mxu0 0
      %2572 = vmatprep.subr.bf16.mxu0 0
      %2573 = vmatpush2.bf16.msra.mxu0 0
      %2574 = vmatprep.subr.bf16.mxu0 0
      %2575 = vmatpush2.bf16.msra.mxu0 0
      %2576 = vmatprep.subr.bf16.mxu0 0
      %2577 = vmatpush2.bf16.msra.mxu0 0
      %2578 = vmatprep.subr.bf16.mxu0 0
      %2579 = vmatpush2.bf16.msra.mxu0 0
      %2580 = vmatprep.subr.bf16.mxu0 0
      %2581 = vmatpush2.bf16.msra.mxu0 0
      %2582 = vmatprep.subr.bf16.mxu0 0
      %2583 = vmatpush2.bf16.msra.mxu0 0
      %2584 = vmatprep.subr.bf16.mxu0 0
      %2585 = vmatpush2.bf16.msra.mxu0 0
      %2586 = vmatprep.mubr.bf16.mxu0 0
      %2587 = vmatmul.mubr.bf16.gmra.mxu0 %v2382
      %v2588 = vpop.f32.mrf.mxu0
      %v2589 = vadd.f32 0.0, %v2588
      %v2590 = vpop.f32.mrf.mxu0
      %v2591 = vpop.f32.mrf.mxu0
      %v2592 = vadd.f32 0.0, %v2591
      %v2593 = vpop.f32.mrf.mxu0
      %2594 = vdwg.mxu0
      %s2595 = smul.u32 %s2159, 6
      %s2596 = smul.addr %s2595, 8
      %s2597 = scalar_lea.vmem [#allocation2], %s2596
      %v2598 = vld [vmem:[%s2597] sm:$0xff]
      %v2599 = vld [vmem:[%s2597 + $0x8] sm:$0xff]
      %v2600 = vld [vmem:[%s2597 + $0x10] sm:$0xff]
      %v2601 = vld [vmem:[%s2597 + $0x18] sm:$0xff]
      %v2602 = vld [vmem:[%s2597 + $0x20] sm:$0xff]
      %v2603 = vld [vmem:[%s2597 + $0x28] sm:$0xff]
      %s2604 = smul.u32 %s2168, 6
      %s2605 = smul.addr %s2604, 8
      %s2606 = scalar_lea.vmem [#allocation3], %s2605
      %v2607 = vld [vmem:[%s2606] sm:$0xff]
      %v2608 = vld [vmem:[%s2606 + $0x8] sm:$0xff]
      %v2609 = vld [vmem:[%s2606 + $0x10] sm:$0xff]
      %v2610 = vld [vmem:[%s2606 + $0x18] sm:$0xff]
      %v2611 = vld [vmem:[%s2606 + $0x20] sm:$0xff]
      %v2612 = vld [vmem:[%s2606 + $0x28] sm:$0xff]
      %v2613 = vadd.f32 %v2598, %v2333
      %v2614 = vadd.f32 %v2599, %v2335
      %v2615 = vadd.f32 %v2601, %v2337
      %v2616 = vadd.f32 %v2602, %v2339
      %v2617 = vxor.u32 %v2613, 2147483648
      %v2618 = vxor.u32 %v2614, 2147483648
      %v2619 = vxor.u32 %v2615, 2147483648
      %v2620 = vxor.u32 %v2616, 2147483648
      %v2621 = vmul.f32 %v2617, 1.442695
      %v2622 = vpow.pop %v2621
      %v2623 = vmul.f32 %v2618, 1.442695
      %v2624 = vpow.pop %v2623
      %v2625 = vmul.f32 %v2619, 1.442695
      %v2626 = vpow.pop %v2625
      %v2627 = vmul.f32 %v2620, 1.442695
      %v2628 = vpow.pop %v2627
      %v2629 = vadd.f32 %v2622, 1.0
      %v2630 = vadd.f32 %v2624, 1.0
      %v2631 = vadd.f32 %v2626, 1.0
      %v2632 = vadd.f32 %v2628, 1.0
      %v2633 = vrcp.pop %v2629
      %v2634 = vmul.f32 1.0, %v2633
      %v2635 = vrcp.pop %v2630
      %v2636 = vmul.f32 1.0, %v2635
      %v2637 = vrcp.pop %v2631
      %v2638 = vmul.f32 1.0, %v2637
      %v2639 = vrcp.pop %v2632
      %v2640 = vmul.f32 1.0, %v2639
      %v2642 = vlaneseq
      %v2643 = vshrl.u32 %v2642, 7
      %v2644 = vsub.s32 0, %v2643
      %v2645 = vrot.slane %v2151, %v2644
      %v2647 = vadd.f32 %v2376, %v2645
      %v2648 = vadd.f32 %v2379, %v2645
      %v2649 = vmul.f32 %v2634, %v2647
      %v2650 = vmul.f32 %v2638, %v2648
      %v2651 = vadd.f32 %v2600, %v2649
      %v2652 = vadd.f32 %v2603, %v2650
      %v2653 = vtanh.pop %v2651
      %v2654 = vtanh.pop %v2652
      %v2655 = vsub.f32 1.0, %v2636
      %v2656 = vsub.f32 1.0, %v2640
      %v2657 = vmul.f32 %v2655, %v2653
      %v2658 = vmul.f32 %v2656, %v2654
      %v2659 = vmul.f32 %v2636, %v2164
      %v2660 = vmul.f32 %v2640, %v2165
      %v2661 = vadd.f32 %v2657, %v2659
      %v2662 = vadd.f32 %v2658, %v2660
      %v2663 = vadd.f32 %v2607, %v2546
      %v2664 = vadd.f32 %v2608, %v2548
      %v2665 = vadd.f32 %v2610, %v2550
      %v2666 = vadd.f32 %v2611, %v2552
      %v2667 = vxor.u32 %v2663, 2147483648
      %v2668 = vxor.u32 %v2664, 2147483648
      %v2669 = vxor.u32 %v2665, 2147483648
      %v2670 = vxor.u32 %v2666, 2147483648
      %v2671 = vmul.f32 %v2667, 1.442695
      %v2672 = vpow.pop %v2671
      %v2673 = vmul.f32 %v2668, 1.442695
      %v2674 = vpow.pop %v2673
      %v2675 = vmul.f32 %v2669, 1.442695
      %v2676 = vpow.pop %v2675
      %v2677 = vmul.f32 %v2670, 1.442695
      %v2678 = vpow.pop %v2677
      %v2679 = vadd.f32 %v2672, 1.0
      %v2680 = vadd.f32 %v2674, 1.0
      %v2681 = vadd.f32 %v2676, 1.0
      %v2682 = vadd.f32 %v2678, 1.0
      %v2683 = vrcp.pop %v2679
      %v2684 = vmul.f32 1.0, %v2683
      %v2685 = vrcp.pop %v2680
      %v2686 = vmul.f32 1.0, %v2685
      %v2687 = vrcp.pop %v2681
      %v2688 = vmul.f32 1.0, %v2687
      %v2689 = vrcp.pop %v2682
      %v2690 = vmul.f32 1.0, %v2689
      %v2692 = vlaneseq
      %v2693 = vshrl.u32 %v2692, 7
      %v2694 = vsub.s32 0, %v2693
      %v2695 = vrot.slane %v2153, %v2694
      %v2697 = vadd.f32 %v2589, %v2695
      %v2698 = vadd.f32 %v2592, %v2695
      %v2699 = vmul.f32 %v2684, %v2697
      %v2700 = vmul.f32 %v2688, %v2698
      %v2701 = vadd.f32 %v2609, %v2699
      %v2702 = vadd.f32 %v2612, %v2700
      %v2703 = vtanh.pop %v2701
      %v2704 = vtanh.pop %v2702
      %v2705 = vsub.f32 1.0, %v2686
      %v2706 = vsub.f32 1.0, %v2690
      %v2707 = vmul.f32 %v2705, %v2703
      %v2708 = vmul.f32 %v2706, %v2704
      %v2709 = vmul.f32 %v2686, %v2166
      %v2710 = vmul.f32 %v2690, %v2167
      %v2711 = vadd.f32 %v2707, %v2709
      %v2712 = vadd.f32 %v2708, %v2710
    $region58: #{bert_gru_sentiment_forward.3} parent=1 // loop_footer
      %s2163 = sadd.s32 1, %s2159
    $region59: #{bert_gru_sentiment_forward.3} parent=1 // loop_footer_branch
      %2158 = sbr.rel target = $region55
    $region60: #{bert_gru_sentiment_forward.3} parent=1 // loop_exit
      _
    %2713 = vst [vmem:[#allocation4] sm:$0xff] %v2164
    %2714 = vst [vmem:[#allocation4 + $0x8] sm:$0xff] %v2165
    %2715 = vst [vmem:[#allocation5] sm:$0xff] %v2166
    %2716 = vst [vmem:[#allocation5 + $0x8] sm:$0xff] %v2167
    // Predicated region
    $region61: #{bert_gru_sentiment_forward.3} parent=1 // pred_check
      %p2717 = pneg %p114
    $region62: #{bert_gru_sentiment_forward.3} parent=1 // pred_check_branch
      %2719 = sbr.rel (%p2717) target = $region64
    $region63: #{bert_gru_sentiment_forward.3} parent=1 // pred_region
      %v2720 = vld [vmem:[%s9] sm:$0x1]
      %v2721 = vld [vmem:[#allocation8] sm:$0xff]
      %v2722 = vld [vmem:[#allocation8 + $0x8] sm:$0xff]
      %v2723 = vld [vmem:[#allocation8 + $0x10] sm:$0xff]
      %v2724 = vld [vmem:[#allocation8 + $0x18] sm:$0xff]
      %v2725 = vld [vmem:[#allocation8 + $0x20] sm:$0xff]
      %v2726 = vld [vmem:[#allocation8 + $0x28] sm:$0xff]
      %v2727 = vld [vmem:[#allocation8 + $0x30] sm:$0xff]
      %v2728 = vld [vmem:[#allocation8 + $0x38] sm:$0xff]
      %v2729 = vld [vmem:[#allocation8 + $0x40] sm:$0xff]
      %v2730 = vld [vmem:[#allocation8 + $0x48] sm:$0xff]
      %v2731 = vld [vmem:[#allocation8 + $0x50] sm:$0xff]
      %v2732 = vld [vmem:[#allocation8 + $0x58] sm:$0xff]
      %v2733 = vld [vmem:[#allocation8 + $0x60] sm:$0xff]
      %v2734 = vld [vmem:[#allocation8 + $0x68] sm:$0xff]
      %v2735 = vld [vmem:[#allocation8 + $0x70] sm:$0xff]
      %v2736 = vld [vmem:[#allocation8 + $0x78] sm:$0xff]
      %2737 = vmatprep.subr.mxu0 0.0
      %2738 = vmatpush1.msra.mxu0 %v2736
      %2739 = vmatprep.subr.mxu0 0.0
      %2740 = vmatpush1.msra.mxu0 %v2735
      %2741 = vmatprep.subr.mxu0 0.0
      %2742 = vmatpush1.msra.mxu0 %v2734
      %2743 = vmatprep.subr.mxu0 0.0
      %2744 = vmatpush1.msra.mxu0 %v2733
      %2745 = vmatprep.subr.mxu0 0.0
      %2746 = vmatpush1.msra.mxu0 %v2732
      %2747 = vmatprep.subr.mxu0 0.0
      %2748 = vmatpush1.msra.mxu0 %v2731
      %2749 = vmatprep.subr.mxu0 0.0
      %2750 = vmatpush1.msra.mxu0 %v2730
      %2751 = vmatprep.subr.mxu0 0.0
      %2752 = vmatpush1.msra.mxu0 %v2729
      %2753 = vmatprep.subr.mxu0 0.0
      %2754 = vmatpush1.msra.mxu0 %v2728
      %2755 = vmatprep.subr.mxu0 0.0
      %2756 = vmatpush1.msra.mxu0 %v2727
      %2757 = vmatprep.subr.mxu0 0.0
      %2758 = vmatpush1.msra.mxu0 %v2726
      %2759 = vmatprep.subr.mxu0 0.0
      %2760 = vmatpush1.msra.mxu0 %v2725
      %2761 = vmatprep.subr.mxu0 0.0
      %2762 = vmatpush1.msra.mxu0 %v2724
      %2763 = vmatprep.subr.mxu0 0.0
      %2764 = vmatpush1.msra.mxu0 %v2723
      %2765 = vmatprep.subr.mxu0 0.0
      %2766 = vmatpush1.msra.mxu0 %v2722
      %2767 = vmatprep.subr.mxu0 0.0
      %2768 = vmatpush1.msra.mxu0 %v2721
      %2769 = vmatprep.subr.mxu0 0.0
      %2770 = vmatpush2.msra.mxu0 0.0
      %2771 = vmatprep.subr.mxu0 0.0
      %2772 = vmatpush2.msra.mxu0 0.0
      %2773 = vmatprep.subr.mxu0 0.0
      %2774 = vmatpush2.msra.mxu0 0.0
      %2775 = vmatprep.subr.mxu0 0.0
      %2776 = vmatpush2.msra.mxu0 0.0
      %2777 = vmatprep.subr.mxu0 0.0
      %2778 = vmatpush2.msra.mxu0 0.0
      %2779 = vmatprep.subr.mxu0 0.0
      %2780 = vmatpush2.msra.mxu0 0.0
      %2781 = vmatprep.subr.mxu0 0.0
      %2782 = vmatpush2.msra.mxu0 0.0
      %2783 = vmatprep.subr.mxu0 0.0
      %2784 = vmatpush2.msra.mxu0 0.0
      %2785 = vmatprep.subr.mxu0 0.0
      %2786 = vmatpush2.msra.mxu0 0.0
      %2787 = vmatprep.subr.mxu0 0.0
      %2788 = vmatpush2.msra.mxu0 0.0
      %2789 = vmatprep.subr.mxu0 0.0
      %2790 = vmatpush2.msra.mxu0 0.0
      %2791 = vmatprep.subr.mxu0 0.0
      %2792 = vmatpush2.msra.mxu0 0.0
      %2793 = vmatprep.subr.mxu0 0.0
      %2794 = vmatpush2.msra.mxu0 0.0
      %2795 = vmatprep.subr.mxu0 0.0
      %2796 = vmatpush2.msra.mxu0 0.0
      %2797 = vmatprep.subr.mxu0 0.0
      %2798 = vmatpush2.msra.mxu0 0.0
      %2799 = vmatprep.subr.mxu0 0.0
      %2800 = vmatpush2.msra.mxu0 0.0
      %2801 = vmatprep.mubr.f32.mxu0 0.0
      %2802 = vmatmul.mubr.f32.gmra.mxu0 %v2164
      %v2803 = vpop.f32.mrf.mxu0
      %v2804 = vadd.f32 0.0, %v2803
      %v2805 = vpop.f32.mrf.mxu0
      %2806 = vmatprep.mubr.f32.mxu0 0.0
      %2807 = vmatmul.mubr.f32.gmra.mxu0 %v2165
      %v2808 = vpop.f32.mrf.mxu0
      %v2809 = vadd.f32 0.0, %v2808
      %v2810 = vpop.f32.mrf.mxu0
      %2811 = vdwg.mxu0
      %v2813 = vlaneseq
      %v2814 = vshrl.u32 %v2813, 7
      %v2815 = vsub.s32 0, %v2814
      %v2816 = vrot.slane %v2720, %v2815
      %v2818 = vadd.f32 %v2816, %v2804
      %v2819 = vadd.f32 %v2816, %v2809
      %s2820 = scalar_lea.vmem [#allocation8], 128
      %v2821 = vld [vmem:[%s2820] sm:$0xff]
      %v2822 = vld [vmem:[%s2820 + $0x8] sm:$0xff]
      %v2823 = vld [vmem:[%s2820 + $0x10] sm:$0xff]
      %v2824 = vld [vmem:[%s2820 + $0x18] sm:$0xff]
      %v2825 = vld [vmem:[%s2820 + $0x20] sm:$0xff]
      %v2826 = vld [vmem:[%s2820 + $0x28] sm:$0xff]
      %v2827 = vld [vmem:[%s2820 + $0x30] sm:$0xff]
      %v2828 = vld [vmem:[%s2820 + $0x38] sm:$0xff]
      %v2829 = vld [vmem:[%s2820 + $0x40] sm:$0xff]
      %v2830 = vld [vmem:[%s2820 + $0x48] sm:$0xff]
      %v2831 = vld [vmem:[%s2820 + $0x50] sm:$0xff]
      %v2832 = vld [vmem:[%s2820 + $0x58] sm:$0xff]
      %v2833 = vld [vmem:[%s2820 + $0x60] sm:$0xff]
      %v2834 = vld [vmem:[%s2820 + $0x68] sm:$0xff]
      %v2835 = vld [vmem:[%s2820 + $0x70] sm:$0xff]
      %v2836 = vld [vmem:[%s2820 + $0x78] sm:$0xff]
      %2837 = vmatprep.subr.mxu0 0.0
      %2838 = vmatpush1.msra.mxu0 %v2836
      %2839 = vmatprep.subr.mxu0 0.0
      %2840 = vmatpush1.msra.mxu0 %v2835
      %2841 = vmatprep.subr.mxu0 0.0
      %2842 = vmatpush1.msra.mxu0 %v2834
      %2843 = vmatprep.subr.mxu0 0.0
      %2844 = vmatpush1.msra.mxu0 %v2833
      %2845 = vmatprep.subr.mxu0 0.0
      %2846 = vmatpush1.msra.mxu0 %v2832
      %2847 = vmatprep.subr.mxu0 0.0
      %2848 = vmatpush1.msra.mxu0 %v2831
      %2849 = vmatprep.subr.mxu0 0.0
      %2850 = vmatpush1.msra.mxu0 %v2830
      %2851 = vmatprep.subr.mxu0 0.0
      %2852 = vmatpush1.msra.mxu0 %v2829
      %2853 = vmatprep.subr.mxu0 0.0
      %2854 = vmatpush1.msra.mxu0 %v2828
      %2855 = vmatprep.subr.mxu0 0.0
      %2856 = vmatpush1.msra.mxu0 %v2827
      %2857 = vmatprep.subr.mxu0 0.0
      %2858 = vmatpush1.msra.mxu0 %v2826
      %2859 = vmatprep.subr.mxu0 0.0
      %2860 = vmatpush1.msra.mxu0 %v2825
      %2861 = vmatprep.subr.mxu0 0.0
      %2862 = vmatpush1.msra.mxu0 %v2824
      %2863 = vmatprep.subr.mxu0 0.0
      %2864 = vmatpush1.msra.mxu0 %v2823
      %2865 = vmatprep.subr.mxu0 0.0
      %2866 = vmatpush1.msra.mxu0 %v2822
      %2867 = vmatprep.subr.mxu0 0.0
      %2868 = vmatpush1.msra.mxu0 %v2821
      %2869 = vmatprep.subr.mxu0 0.0
      %2870 = vmatpush2.msra.mxu0 0.0
      %2871 = vmatprep.subr.mxu0 0.0
      %2872 = vmatpush2.msra.mxu0 0.0
      %2873 = vmatprep.subr.mxu0 0.0
      %2874 = vmatpush2.msra.mxu0 0.0
      %2875 = vmatprep.subr.mxu0 0.0
      %2876 = vmatpush2.msra.mxu0 0.0
      %2877 = vmatprep.subr.mxu0 0.0
      %2878 = vmatpush2.msra.mxu0 0.0
      %2879 = vmatprep.subr.mxu0 0.0
      %2880 = vmatpush2.msra.mxu0 0.0
      %2881 = vmatprep.subr.mxu0 0.0
      %2882 = vmatpush2.msra.mxu0 0.0
      %2883 = vmatprep.subr.mxu0 0.0
      %2884 = vmatpush2.msra.mxu0 0.0
      %2885 = vmatprep.subr.mxu0 0.0
      %2886 = vmatpush2.msra.mxu0 0.0
      %2887 = vmatprep.subr.mxu0 0.0
      %2888 = vmatpush2.msra.mxu0 0.0
      %2889 = vmatprep.subr.mxu0 0.0
      %2890 = vmatpush2.msra.mxu0 0.0
      %2891 = vmatprep.subr.mxu0 0.0
      %2892 = vmatpush2.msra.mxu0 0.0
      %2893 = vmatprep.subr.mxu0 0.0
      %2894 = vmatpush2.msra.mxu0 0.0
      %2895 = vmatprep.subr.mxu0 0.0
      %2896 = vmatpush2.msra.mxu0 0.0
      %2897 = vmatprep.subr.mxu0 0.0
      %2898 = vmatpush2.msra.mxu0 0.0
      %2899 = vmatprep.subr.mxu0 0.0
      %2900 = vmatpush2.msra.mxu0 0.0
      %2901 = vmatprep.mubr.f32.mxu0 0.0
      %2902 = vmatmul.mubr.f32.gmra.mxu0 %v2166
      %v2903 = vpop.f32.mrf.mxu0
      %v2904 = vadd.f32 0.0, %v2903
      %v2905 = vpop.f32.mrf.mxu0
      %2906 = vmatprep.mubr.f32.mxu0 0.0
      %2907 = vmatmul.mubr.f32.gmra.mxu0 %v2167
      %v2908 = vpop.f32.mrf.mxu0
      %v2909 = vadd.f32 0.0, %v2908
      %v2910 = vpop.f32.mrf.mxu0
      %2911 = vdwg.mxu0
      %v2912 = vadd.f32 %v2818, %v2904
      %v2913 = vadd.f32 %v2819, %v2909
      %2914 = vst [vmem:[%s10] sm:$0xff] %v2912
      %2915 = vst [vmem:[%s10 + $0x8] sm:$0xff] %v2913
    $region64: #{bert_gru_sentiment_forward.3} parent=1 // pred_fallthru
      _
    // Predicated region
    $region65: #{bert_gru_sentiment_forward.3} parent=1 // pred_check
      _
    $region66: #{bert_gru_sentiment_forward.3} parent=1 // pred_check_branch
      %2917 = sbr.rel (0) target = $region68
    $region67: #{bert_gru_sentiment_forward.3} parent=1 // pred_region
      _
    $region68: #{bert_gru_sentiment_forward.3} parent=1 // pred_fallthru
      _
    // Predicated region
    $region69: #{bert_gru_sentiment_forward.3} parent=1 // pred_check
      _
    $region70: #{bert_gru_sentiment_forward.3} parent=1 // pred_check_branch
      %2919 = sbr.rel (0) target = $region72
    $region71: #{bert_gru_sentiment_forward.3} parent=1 // pred_region
      _
    $region72: #{bert_gru_sentiment_forward.3} parent=1 // pred_fallthru
      _
    %2920 = vsyncpa [#allocation7], 1
    %2921 = vsyncpa [#allocation9], 1

</llo_original>
